<compile_context>
chip_gen: v5e
topology: v5e:2x2
jax: 0.10.0
libtpu: 0.0.40
codegen_flags: <defaults>
</compile_context>

<pallas_src>
import functools
import math

import jax
import jax.numpy as jnp
from jax import lax
from jax.experimental import pallas as pl
from jax.experimental.pallas import tpu as pltpu


def _recursive_block_kernel(x_ref, w_ref, b_ref, o_ref, *, d, H, W, negative_slope):
    # x_ref : (1, C, HW)   w_ref : (d*9, Cout, Cin)   b_ref : (d, Cout, 1)
    C = x_ref.shape[1]
    HW = H * W

    cur = x_ref[0].astype(jnp.float32)                       # (C, HW)

    # Flattened-position bookkeeping for the 3x3 taps (layer independent).
    p_idx = lax.broadcasted_iota(jnp.int32, (C, HW), 1)      # flat spatial index
    w_idx = p_idx % W                                        # column within a row

    def tap_mask(dh, dw):
        conds = []
        if dh < 0:
            conds.append(p_idx >= (-dh) * W)                 # source row >= 0
        if dh > 0:
            conds.append(p_idx < (H - dh) * W)               # source row < H
        if dw < 0:
            conds.append(w_idx >= -dw)                       # source col >= 0
        if dw > 0:
            conds.append(w_idx < W - dw)                     # source col < W
        if not conds:
            return None
        m = conds[0]
        for c in conds[1:]:
            m = m & c
        return m

    masks = {(kh, kw): tap_mask(kh - 1, kw - 1) for kh in range(3) for kw in range(3)}

    for layer in range(d):
        # LeakyReLU(0.2) before each conv (matches nn.Sequential ordering).
        act = jnp.where(cur > 0, cur, negative_slope * cur)
        acc = jnp.zeros((C, HW), dtype=jnp.float32)
        for kh in range(3):
            for kw in range(3):
                dh, dw = kh - 1, kw - 1
                delta = dh * W + dw
                # shifted[p] = act[p + delta] (circular; invalid lanes masked to 0)
                shifted = act if delta == 0 else pltpu.roll(act, shift=(-delta) % HW, axis=1)
                mask = masks[(kh, kw)]
                xs = shifted if mask is None else jnp.where(mask, shifted, 0.0)
                w_tap = w_ref[layer * 9 + kh * 3 + kw]       # (Cout, Cin)
                acc = acc + jnp.dot(w_tap, xs, preferred_element_type=jnp.float32)
        cur = acc + b_ref[layer]                             # (C,HW) + (C,1) bias broadcast
    o_ref[0] = cur.astype(o_ref.dtype)


def recursive_block(x, weights, biases, negative_slope=0.2):
    """x: (B, C, H, W) NCHW.  weights: list of d (C, C, 3, 3); biases: list of d (C,)."""
    B, C, H, W = x.shape
    d = len(weights)
    HW = H * W

    # (d, Cout, Cin, 3, 3) -> (d*9, Cout, Cin), tap index = layer*9 + kh*3 + kw
    w_stack = jnp.stack(weights).astype(jnp.float32)
    w_taps = jnp.transpose(w_stack, (0, 3, 4, 1, 2)).reshape(d * 9, C, C)
    b_stack = jnp.stack(biases).astype(jnp.float32).reshape(d, C, 1)

    x_flat = x.reshape(B, C, HW)

    kernel = functools.partial(
        _recursive_block_kernel, d=d, H=H, W=W, negative_slope=negative_slope)

    out_flat = pl.pallas_call(
        kernel,
        out_shape=jax.ShapeDtypeStruct((B, C, HW), x.dtype),
        grid=(B,),
        in_specs=[
            pl.BlockSpec((1, C, HW), lambda b: (b, 0, 0)),
            pl.BlockSpec((d * 9, C, C), lambda b: (0, 0, 0)),
            pl.BlockSpec((d, C, 1), lambda b: (0, 0, 0)),
        ],
        out_specs=pl.BlockSpec((1, C, HW), lambda b: (b, 0, 0)),
        compiler_params=pltpu.CompilerParams(dimension_semantics=("parallel",)),
        input_output_aliases={0: 0},
    )(x_flat, w_taps, b_stack)

    return out_flat.reshape(B, C, H, W)


def recursive_block_ref(x, weights, biases, negative_slope=0.2):
    """Pure-JAX reference mirroring the PyTorch forward."""
    out = x
    for w, b in zip(weights, biases):
        out = jnp.where(out > 0, out, negative_slope * out)
        out = lax.conv_general_dilated(
            out, w, window_strides=(1, 1), padding=((1, 1), (1, 1)),
            dimension_numbers=("NCHW", "OIHW", "NCHW"),
            precision=lax.Precision.HIGHEST)
        out = out + b[None, :, None, None]
    return out


if __name__ == "__main__":
    B, C, H, W = 2, 64, 16, 16      # channel count is fixed at 64 by the module
    d = 2                           # recursion depth

    key = jax.random.PRNGKey(0)
    keys = jax.random.split(key, 1 + 2 * d)

    x = jax.random.normal(keys[0], (B, C, H, W), dtype=jnp.float32)
    scale = 1.0 / math.sqrt(C * 3 * 3)
    weights = [jax.random.normal(keys[1 + 2 * i], (C, C, 3, 3), dtype=jnp.float32) * scale
               for i in range(d)]
    biases = [jax.random.normal(keys[2 + 2 * i], (C,), dtype=jnp.float32) * 0.1
              for i in range(d)]

    ref = recursive_block_ref(x, weights, biases)

    out = recursive_block(x, weights, biases)
    out = jax.block_until_ready(out)

    assert out.shape == (B, C, H, W)
    assert jnp.allclose(out, ref, atol=5e-3, rtol=5e-3), "mismatch vs reference"

    print("KERNEL_OK")
</pallas_src>

<mosaic_0001>
module attributes {stable_mosaic.version = 11 : i64} {
  func.func @_recursive_block_kernel(%arg0: i32, %arg1: memref<1x64x256xf32, #tpu.memory_space<vmem>>, %arg2: memref<18x64x64xf32, #tpu.memory_space<vmem>>, %arg3: memref<2x64x1xf32, #tpu.memory_space<vmem>>, %arg4: memref<1x64x256xf32, #tpu.memory_space<vmem>>) attributes {dimension_semantics = [#tpu.dimension_semantics<parallel>], iteration_bounds = array<i64: 2>, scalar_prefetch = 0 : i64, scratch_operands = 0 : i64, tpu.core_type = #tpu.core_type<tc>, window_params = [{transform_indices = @transform_0, window_bounds = array<i64: 1, 64, 256>}, {pipeline_mode = #tpu.pipeline_mode<synchronous>, transform_indices = @transform_1, window_bounds = array<i64: 18, 64, 64>}, {pipeline_mode = #tpu.pipeline_mode<synchronous>, transform_indices = @transform_2, window_bounds = array<i64: 2, 64, 1>}, {transform_indices = @transform_3, window_bounds = array<i64: 1, 64, 256>}]} {
    %c0 = arith.constant 0 : index
    %c0_0 = arith.constant 0 : index
    %c0_1 = arith.constant 0 : index
    %0 = vector.load %arg1[%c0, %c0_0, %c0_1] : memref<1x64x256xf32, #tpu.memory_space<vmem>>, vector<1x64x256xf32>
    %1 = vector.shape_cast %0 : vector<1x64x256xf32> to vector<64x256xf32>
    %2 = tpu.iota {dimensions = array<i32: 1>} : vector<64x256xi32>
    %c16_i32 = arith.constant 16 : i32
    %c0_i32 = arith.constant 0 : i32
    %3 = arith.cmpi eq, %c16_i32, %c0_i32 : i32
    %c1_i32 = arith.constant 1 : i32
    %4 = arith.select %3, %c1_i32, %c16_i32 : i32
    %5 = vector.broadcast %4 : i32 to vector<64x256xi32>
    %6 = arith.remsi %2, %5 : vector<64x256xi32>
    %c0_i32_2 = arith.constant 0 : i32
    %7 = vector.broadcast %c0_i32_2 : i32 to vector<64x256xi32>
    %8 = arith.cmpi ne, %6, %7 : vector<64x256xi32>
    %c0_i32_3 = arith.constant 0 : i32
    %9 = vector.broadcast %c0_i32_3 : i32 to vector<64x256xi32>
    %10 = arith.cmpi slt, %6, %9 : vector<64x256xi32>
    %c0_i32_4 = arith.constant 0 : i32
    %11 = arith.cmpi slt, %4, %c0_i32_4 : i32
    %12 = vector.broadcast %11 : i1 to vector<64x256xi1>
    %13 = vector.broadcast %12 : vector<64x256xi1> to vector<64x256xi1>
    %14 = arith.xori %10, %13 : vector<64x256xi1>
    %15 = arith.andi %14, %8 : vector<64x256xi1>
    %16 = vector.broadcast %4 : i32 to vector<64x256xi32>
    %17 = arith.addi %6, %16 : vector<64x256xi32>
    %18 = arith.select %15, %17, %6 : vector<64x256xi1>, vector<64x256xi32>
    %c16_i32_5 = arith.constant 16 : i32
    %19 = vector.broadcast %c16_i32_5 : i32 to vector<64x256xi32>
    %20 = arith.cmpi sge, %2, %19 : vector<64x256xi32>
    %c1_i32_6 = arith.constant 1 : i32
    %21 = vector.broadcast %c1_i32_6 : i32 to vector<64x256xi32>
    %22 = arith.cmpi sge, %18, %21 : vector<64x256xi32>
    %23 = arith.andi %20, %22 : vector<64x256xi1>
    %c16_i32_7 = arith.constant 16 : i32
    %24 = vector.broadcast %c16_i32_7 : i32 to vector<64x256xi32>
    %25 = arith.cmpi sge, %2, %24 : vector<64x256xi32>
    %c16_i32_8 = arith.constant 16 : i32
    %26 = vector.broadcast %c16_i32_8 : i32 to vector<64x256xi32>
    %27 = arith.cmpi sge, %2, %26 : vector<64x256xi32>
    %c15_i32 = arith.constant 15 : i32
    %28 = vector.broadcast %c15_i32 : i32 to vector<64x256xi32>
    %29 = arith.cmpi slt, %18, %28 : vector<64x256xi32>
    %30 = arith.andi %27, %29 : vector<64x256xi1>
    %c1_i32_9 = arith.constant 1 : i32
    %31 = vector.broadcast %c1_i32_9 : i32 to vector<64x256xi32>
    %32 = arith.cmpi sge, %18, %31 : vector<64x256xi32>
    %c15_i32_10 = arith.constant 15 : i32
    %33 = vector.broadcast %c15_i32_10 : i32 to vector<64x256xi32>
    %34 = arith.cmpi slt, %18, %33 : vector<64x256xi32>
    %c240_i32 = arith.constant 240 : i32
    %35 = vector.broadcast %c240_i32 : i32 to vector<64x256xi32>
    %36 = arith.cmpi slt, %2, %35 : vector<64x256xi32>
    %c1_i32_11 = arith.constant 1 : i32
    %37 = vector.broadcast %c1_i32_11 : i32 to vector<64x256xi32>
    %38 = arith.cmpi sge, %18, %37 : vector<64x256xi32>
    %39 = arith.andi %36, %38 : vector<64x256xi1>
    %c240_i32_12 = arith.constant 240 : i32
    %40 = vector.broadcast %c240_i32_12 : i32 to vector<64x256xi32>
    %41 = arith.cmpi slt, %2, %40 : vector<64x256xi32>
    %c240_i32_13 = arith.constant 240 : i32
    %42 = vector.broadcast %c240_i32_13 : i32 to vector<64x256xi32>
    %43 = arith.cmpi slt, %2, %42 : vector<64x256xi32>
    %c15_i32_14 = arith.constant 15 : i32
    %44 = vector.broadcast %c15_i32_14 : i32 to vector<64x256xi32>
    %45 = arith.cmpi slt, %18, %44 : vector<64x256xi32>
    %46 = arith.andi %43, %45 : vector<64x256xi1>
    %cst = arith.constant 0.000000e+00 : f32
    %47 = vector.broadcast %cst : f32 to vector<64x256xf32>
    %48 = arith.cmpf ogt, %1, %47 : vector<64x256xf32>
    %cst_15 = arith.constant 2.000000e-01 : f32
    %49 = vector.broadcast %cst_15 : f32 to vector<64x256xf32>
    %50 = arith.mulf %49, %1 : vector<64x256xf32>
    %51 = arith.select %48, %1, %50 : vector<64x256xi1>, vector<64x256xf32>
    %cst_16 = arith.constant 0.000000e+00 : f32
    %52 = vector.broadcast %cst_16 : f32 to vector<64x256xf32>
    %c17_i32 = arith.constant 17 : i32
    %53 = tpu.dynamic_rotate %51 by %c17_i32 dim 1 : vector<64x256xf32>, i32 -> vector<64x256xf32>
    %cst_17 = arith.constant 0.000000e+00 : f32
    %54 = vector.broadcast %cst_17 : f32 to vector<64x256xf32>
    %55 = arith.select %23, %53, %54 : vector<64x256xi1>, vector<64x256xf32>
    %c0_18 = arith.constant 0 : index
    %c0_19 = arith.constant 0 : index
    %c0_20 = arith.constant 0 : index
    %56 = vector.load %arg2[%c0_18, %c0_19, %c0_20] : memref<18x64x64xf32, #tpu.memory_space<vmem>>, vector<1x64x64xf32>
    %57 = vector.shape_cast %56 : vector<1x64x64xf32> to vector<64x64xf32>
    %cst_21 = arith.constant dense<0.000000e+00> : vector<64x256xf32>
    %58 = tpu.matmul %57, %55, %cst_21 {dimension_numbers = #tpu.dot_dimension_numbers<[1], [0], [0], [1], [0, 0, 1, 1], [], []>} : vector<64x64xf32>, vector<64x256xf32>, vector<64x256xf32> -> vector<64x256xf32>
    %59 = arith.addf %52, %58 : vector<64x256xf32>
    %c16_i32_22 = arith.constant 16 : i32
    %60 = tpu.dynamic_rotate %51 by %c16_i32_22 dim 1 : vector<64x256xf32>, i32 -> vector<64x256xf32>
    %cst_23 = arith.constant 0.000000e+00 : f32
    %61 = vector.broadcast %cst_23 : f32 to vector<64x256xf32>
    %62 = arith.select %25, %60, %61 : vector<64x256xi1>, vector<64x256xf32>
    %c1 = arith.constant 1 : index
    %c0_24 = arith.constant 0 : index
    %c0_25 = arith.constant 0 : index
    %63 = vector.load %arg2[%c1, %c0_24, %c0_25] : memref<18x64x64xf32, #tpu.memory_space<vmem>>, vector<1x64x64xf32>
    %64 = vector.shape_cast %63 : vector<1x64x64xf32> to vector<64x64xf32>
    %cst_26 = arith.constant dense<0.000000e+00> : vector<64x256xf32>
    %65 = tpu.matmul %64, %62, %cst_26 {dimension_numbers = #tpu.dot_dimension_numbers<[1], [0], [0], [1], [0, 0, 1, 1], [], []>} : vector<64x64xf32>, vector<64x256xf32>, vector<64x256xf32> -> vector<64x256xf32>
    %66 = arith.addf %59, %65 : vector<64x256xf32>
    %c15_i32_27 = arith.constant 15 : i32
    %67 = tpu.dynamic_rotate %51 by %c15_i32_27 dim 1 : vector<64x256xf32>, i32 -> vector<64x256xf32>
    %cst_28 = arith.constant 0.000000e+00 : f32
    %68 = vector.broadcast %cst_28 : f32 to vector<64x256xf32>
    %69 = arith.select %30, %67, %68 : vector<64x256xi1>, vector<64x256xf32>
    %c2 = arith.constant 2 : index
    %c0_29 = arith.constant 0 : index
    %c0_30 = arith.constant 0 : index
    %70 = vector.load %arg2[%c2, %c0_29, %c0_30] : memref<18x64x64xf32, #tpu.memory_space<vmem>>, vector<1x64x64xf32>
    %71 = vector.shape_cast %70 : vector<1x64x64xf32> to vector<64x64xf32>
    %cst_31 = arith.constant dense<0.000000e+00> : vector<64x256xf32>
    %72 = tpu.matmul %71, %69, %cst_31 {dimension_numbers = #tpu.dot_dimension_numbers<[1], [0], [0], [1], [0, 0, 1, 1], [], []>} : vector<64x64xf32>, vector<64x256xf32>, vector<64x256xf32> -> vector<64x256xf32>
    %73 = arith.addf %66, %72 : vector<64x256xf32>
    %c1_i32_32 = arith.constant 1 : i32
    %74 = tpu.dynamic_rotate %51 by %c1_i32_32 dim 1 : vector<64x256xf32>, i32 -> vector<64x256xf32>
    %cst_33 = arith.constant 0.000000e+00 : f32
    %75 = vector.broadcast %cst_33 : f32 to vector<64x256xf32>
    %76 = arith.select %32, %74, %75 : vector<64x256xi1>, vector<64x256xf32>
    %c3 = arith.constant 3 : index
    %c0_34 = arith.constant 0 : index
    %c0_35 = arith.constant 0 : index
    %77 = vector.load %arg2[%c3, %c0_34, %c0_35] : memref<18x64x64xf32, #tpu.memory_space<vmem>>, vector<1x64x64xf32>
    %78 = vector.shape_cast %77 : vector<1x64x64xf32> to vector<64x64xf32>
    %cst_36 = arith.constant dense<0.000000e+00> : vector<64x256xf32>
    %79 = tpu.matmul %78, %76, %cst_36 {dimension_numbers = #tpu.dot_dimension_numbers<[1], [0], [0], [1], [0, 0, 1, 1], [], []>} : vector<64x64xf32>, vector<64x256xf32>, vector<64x256xf32> -> vector<64x256xf32>
    %80 = arith.addf %73, %79 : vector<64x256xf32>
    %c4 = arith.constant 4 : index
    %c0_37 = arith.constant 0 : index
    %c0_38 = arith.constant 0 : index
    %81 = vector.load %arg2[%c4, %c0_37, %c0_38] : memref<18x64x64xf32, #tpu.memory_space<vmem>>, vector<1x64x64xf32>
    %82 = vector.shape_cast %81 : vector<1x64x64xf32> to vector<64x64xf32>
    %cst_39 = arith.constant dense<0.000000e+00> : vector<64x256xf32>
    %83 = tpu.matmul %82, %51, %cst_39 {dimension_numbers = #tpu.dot_dimension_numbers<[1], [0], [0], [1], [0, 0, 1, 1], [], []>} : vector<64x64xf32>, vector<64x256xf32>, vector<64x256xf32> -> vector<64x256xf32>
    %84 = arith.addf %80, %83 : vector<64x256xf32>
    %c255_i32 = arith.constant 255 : i32
    %85 = tpu.dynamic_rotate %51 by %c255_i32 dim 1 : vector<64x256xf32>, i32 -> vector<64x256xf32>
    %cst_40 = arith.constant 0.000000e+00 : f32
    %86 = vector.broadcast %cst_40 : f32 to vector<64x256xf32>
    %87 = arith.select %34, %85, %86 : vector<64x256xi1>, vector<64x256xf32>
    %c5 = arith.constant 5 : index
    %c0_41 = arith.constant 0 : index
    %c0_42 = arith.constant 0 : index
    %88 = vector.load %arg2[%c5, %c0_41, %c0_42] : memref<18x64x64xf32, #tpu.memory_space<vmem>>, vector<1x64x64xf32>
    %89 = vector.shape_cast %88 : vector<1x64x64xf32> to vector<64x64xf32>
    %cst_43 = arith.constant dense<0.000000e+00> : vector<64x256xf32>
    %90 = tpu.matmul %89, %87, %cst_43 {dimension_numbers = #tpu.dot_dimension_numbers<[1], [0], [0], [1], [0, 0, 1, 1], [], []>} : vector<64x64xf32>, vector<64x256xf32>, vector<64x256xf32> -> vector<64x256xf32>
    %91 = arith.addf %84, %90 : vector<64x256xf32>
    %c241_i32 = arith.constant 241 : i32
    %92 = tpu.dynamic_rotate %51 by %c241_i32 dim 1 : vector<64x256xf32>, i32 -> vector<64x256xf32>
    %cst_44 = arith.constant 0.000000e+00 : f32
    %93 = vector.broadcast %cst_44 : f32 to vector<64x256xf32>
    %94 = arith.select %39, %92, %93 : vector<64x256xi1>, vector<64x256xf32>
    %c6 = arith.constant 6 : index
    %c0_45 = arith.constant 0 : index
    %c0_46 = arith.constant 0 : index
    %95 = vector.load %arg2[%c6, %c0_45, %c0_46] : memref<18x64x64xf32, #tpu.memory_space<vmem>>, vector<1x64x64xf32>
    %96 = vector.shape_cast %95 : vector<1x64x64xf32> to vector<64x64xf32>
    %cst_47 = arith.constant dense<0.000000e+00> : vector<64x256xf32>
    %97 = tpu.matmul %96, %94, %cst_47 {dimension_numbers = #tpu.dot_dimension_numbers<[1], [0], [0], [1], [0, 0, 1, 1], [], []>} : vector<64x64xf32>, vector<64x256xf32>, vector<64x256xf32> -> vector<64x256xf32>
    %98 = arith.addf %91, %97 : vector<64x256xf32>
    %c240_i32_48 = arith.constant 240 : i32
    %99 = tpu.dynamic_rotate %51 by %c240_i32_48 dim 1 : vector<64x256xf32>, i32 -> vector<64x256xf32>
    %cst_49 = arith.constant 0.000000e+00 : f32
    %100 = vector.broadcast %cst_49 : f32 to vector<64x256xf32>
    %101 = arith.select %41, %99, %100 : vector<64x256xi1>, vector<64x256xf32>
    %c7 = arith.constant 7 : index
    %c0_50 = arith.constant 0 : index
    %c0_51 = arith.constant 0 : index
    %102 = vector.load %arg2[%c7, %c0_50, %c0_51] : memref<18x64x64xf32, #tpu.memory_space<vmem>>, vector<1x64x64xf32>
    %103 = vector.shape_cast %102 : vector<1x64x64xf32> to vector<64x64xf32>
    %cst_52 = arith.constant dense<0.000000e+00> : vector<64x256xf32>
    %104 = tpu.matmul %103, %101, %cst_52 {dimension_numbers = #tpu.dot_dimension_numbers<[1], [0], [0], [1], [0, 0, 1, 1], [], []>} : vector<64x64xf32>, vector<64x256xf32>, vector<64x256xf32> -> vector<64x256xf32>
    %105 = arith.addf %98, %104 : vector<64x256xf32>
    %c239_i32 = arith.constant 239 : i32
    %106 = tpu.dynamic_rotate %51 by %c239_i32 dim 1 : vector<64x256xf32>, i32 -> vector<64x256xf32>
    %cst_53 = arith.constant 0.000000e+00 : f32
    %107 = vector.broadcast %cst_53 : f32 to vector<64x256xf32>
    %108 = arith.select %46, %106, %107 : vector<64x256xi1>, vector<64x256xf32>
    %c8 = arith.constant 8 : index
    %c0_54 = arith.constant 0 : index
    %c0_55 = arith.constant 0 : index
    %109 = vector.load %arg2[%c8, %c0_54, %c0_55] : memref<18x64x64xf32, #tpu.memory_space<vmem>>, vector<1x64x64xf32>
    %110 = vector.shape_cast %109 : vector<1x64x64xf32> to vector<64x64xf32>
    %cst_56 = arith.constant dense<0.000000e+00> : vector<64x256xf32>
    %111 = tpu.matmul %110, %108, %cst_56 {dimension_numbers = #tpu.dot_dimension_numbers<[1], [0], [0], [1], [0, 0, 1, 1], [], []>} : vector<64x64xf32>, vector<64x256xf32>, vector<64x256xf32> -> vector<64x256xf32>
    %112 = arith.addf %105, %111 : vector<64x256xf32>
    %c0_57 = arith.constant 0 : index
    %c0_58 = arith.constant 0 : index
    %c0_59 = arith.constant 0 : index
    %113 = vector.load %arg3[%c0_57, %c0_58, %c0_59] : memref<2x64x1xf32, #tpu.memory_space<vmem>>, vector<1x64x1xf32>
    %114 = vector.shape_cast %113 : vector<1x64x1xf32> to vector<64x1xf32>
    %115 = vector.broadcast %114 : vector<64x1xf32> to vector<64x256xf32>
    %116 = arith.addf %112, %115 : vector<64x256xf32>
    %cst_60 = arith.constant 0.000000e+00 : f32
    %117 = vector.broadcast %cst_60 : f32 to vector<64x256xf32>
    %118 = arith.cmpf ogt, %116, %117 : vector<64x256xf32>
    %cst_61 = arith.constant 2.000000e-01 : f32
    %119 = vector.broadcast %cst_61 : f32 to vector<64x256xf32>
    %120 = arith.mulf %119, %116 : vector<64x256xf32>
    %121 = arith.select %118, %116, %120 : vector<64x256xi1>, vector<64x256xf32>
    %cst_62 = arith.constant 0.000000e+00 : f32
    %122 = vector.broadcast %cst_62 : f32 to vector<64x256xf32>
    %c17_i32_63 = arith.constant 17 : i32
    %123 = tpu.dynamic_rotate %121 by %c17_i32_63 dim 1 : vector<64x256xf32>, i32 -> vector<64x256xf32>
    %cst_64 = arith.constant 0.000000e+00 : f32
    %124 = vector.broadcast %cst_64 : f32 to vector<64x256xf32>
    %125 = arith.select %23, %123, %124 : vector<64x256xi1>, vector<64x256xf32>
    %c9 = arith.constant 9 : index
    %c0_65 = arith.constant 0 : index
    %c0_66 = arith.constant 0 : index
    %126 = vector.load %arg2[%c9, %c0_65, %c0_66] : memref<18x64x64xf32, #tpu.memory_space<vmem>>, vector<1x64x64xf32>
    %127 = vector.shape_cast %126 : vector<1x64x64xf32> to vector<64x64xf32>
    %cst_67 = arith.constant dense<0.000000e+00> : vector<64x256xf32>
    %128 = tpu.matmul %127, %125, %cst_67 {dimension_numbers = #tpu.dot_dimension_numbers<[1], [0], [0], [1], [0, 0, 1, 1], [], []>} : vector<64x64xf32>, vector<64x256xf32>, vector<64x256xf32> -> vector<64x256xf32>
    %129 = arith.addf %122, %128 : vector<64x256xf32>
    %c16_i32_68 = arith.constant 16 : i32
    %130 = tpu.dynamic_rotate %121 by %c16_i32_68 dim 1 : vector<64x256xf32>, i32 -> vector<64x256xf32>
    %cst_69 = arith.constant 0.000000e+00 : f32
    %131 = vector.broadcast %cst_69 : f32 to vector<64x256xf32>
    %132 = arith.select %25, %130, %131 : vector<64x256xi1>, vector<64x256xf32>
    %c10 = arith.constant 10 : index
    %c0_70 = arith.constant 0 : index
    %c0_71 = arith.constant 0 : index
    %133 = vector.load %arg2[%c10, %c0_70, %c0_71] : memref<18x64x64xf32, #tpu.memory_space<vmem>>, vector<1x64x64xf32>
    %134 = vector.shape_cast %133 : vector<1x64x64xf32> to vector<64x64xf32>
    %cst_72 = arith.constant dense<0.000000e+00> : vector<64x256xf32>
    %135 = tpu.matmul %134, %132, %cst_72 {dimension_numbers = #tpu.dot_dimension_numbers<[1], [0], [0], [1], [0, 0, 1, 1], [], []>} : vector<64x64xf32>, vector<64x256xf32>, vector<64x256xf32> -> vector<64x256xf32>
    %136 = arith.addf %129, %135 : vector<64x256xf32>
    %c15_i32_73 = arith.constant 15 : i32
    %137 = tpu.dynamic_rotate %121 by %c15_i32_73 dim 1 : vector<64x256xf32>, i32 -> vector<64x256xf32>
    %cst_74 = arith.constant 0.000000e+00 : f32
    %138 = vector.broadcast %cst_74 : f32 to vector<64x256xf32>
    %139 = arith.select %30, %137, %138 : vector<64x256xi1>, vector<64x256xf32>
    %c11 = arith.constant 11 : index
    %c0_75 = arith.constant 0 : index
    %c0_76 = arith.constant 0 : index
    %140 = vector.load %arg2[%c11, %c0_75, %c0_76] : memref<18x64x64xf32, #tpu.memory_space<vmem>>, vector<1x64x64xf32>
    %141 = vector.shape_cast %140 : vector<1x64x64xf32> to vector<64x64xf32>
    %cst_77 = arith.constant dense<0.000000e+00> : vector<64x256xf32>
    %142 = tpu.matmul %141, %139, %cst_77 {dimension_numbers = #tpu.dot_dimension_numbers<[1], [0], [0], [1], [0, 0, 1, 1], [], []>} : vector<64x64xf32>, vector<64x256xf32>, vector<64x256xf32> -> vector<64x256xf32>
    %143 = arith.addf %136, %142 : vector<64x256xf32>
    %c1_i32_78 = arith.constant 1 : i32
    %144 = tpu.dynamic_rotate %121 by %c1_i32_78 dim 1 : vector<64x256xf32>, i32 -> vector<64x256xf32>
    %cst_79 = arith.constant 0.000000e+00 : f32
    %145 = vector.broadcast %cst_79 : f32 to vector<64x256xf32>
    %146 = arith.select %32, %144, %145 : vector<64x256xi1>, vector<64x256xf32>
    %c12 = arith.constant 12 : index
    %c0_80 = arith.constant 0 : index
    %c0_81 = arith.constant 0 : index
    %147 = vector.load %arg2[%c12, %c0_80, %c0_81] : memref<18x64x64xf32, #tpu.memory_space<vmem>>, vector<1x64x64xf32>
    %148 = vector.shape_cast %147 : vector<1x64x64xf32> to vector<64x64xf32>
    %cst_82 = arith.constant dense<0.000000e+00> : vector<64x256xf32>
    %149 = tpu.matmul %148, %146, %cst_82 {dimension_numbers = #tpu.dot_dimension_numbers<[1], [0], [0], [1], [0, 0, 1, 1], [], []>} : vector<64x64xf32>, vector<64x256xf32>, vector<64x256xf32> -> vector<64x256xf32>
    %150 = arith.addf %143, %149 : vector<64x256xf32>
    %c13 = arith.constant 13 : index
    %c0_83 = arith.constant 0 : index
    %c0_84 = arith.constant 0 : index
    %151 = vector.load %arg2[%c13, %c0_83, %c0_84] : memref<18x64x64xf32, #tpu.memory_space<vmem>>, vector<1x64x64xf32>
    %152 = vector.shape_cast %151 : vector<1x64x64xf32> to vector<64x64xf32>
    %cst_85 = arith.constant dense<0.000000e+00> : vector<64x256xf32>
    %153 = tpu.matmul %152, %121, %cst_85 {dimension_numbers = #tpu.dot_dimension_numbers<[1], [0], [0], [1], [0, 0, 1, 1], [], []>} : vector<64x64xf32>, vector<64x256xf32>, vector<64x256xf32> -> vector<64x256xf32>
    %154 = arith.addf %150, %153 : vector<64x256xf32>
    %c255_i32_86 = arith.constant 255 : i32
    %155 = tpu.dynamic_rotate %121 by %c255_i32_86 dim 1 : vector<64x256xf32>, i32 -> vector<64x256xf32>
    %cst_87 = arith.constant 0.000000e+00 : f32
    %156 = vector.broadcast %cst_87 : f32 to vector<64x256xf32>
    %157 = arith.select %34, %155, %156 : vector<64x256xi1>, vector<64x256xf32>
    %c14 = arith.constant 14 : index
    %c0_88 = arith.constant 0 : index
    %c0_89 = arith.constant 0 : index
    %158 = vector.load %arg2[%c14, %c0_88, %c0_89] : memref<18x64x64xf32, #tpu.memory_space<vmem>>, vector<1x64x64xf32>
    %159 = vector.shape_cast %158 : vector<1x64x64xf32> to vector<64x64xf32>
    %cst_90 = arith.constant dense<0.000000e+00> : vector<64x256xf32>
    %160 = tpu.matmul %159, %157, %cst_90 {dimension_numbers = #tpu.dot_dimension_numbers<[1], [0], [0], [1], [0, 0, 1, 1], [], []>} : vector<64x64xf32>, vector<64x256xf32>, vector<64x256xf32> -> vector<64x256xf32>
    %161 = arith.addf %154, %160 : vector<64x256xf32>
    %c241_i32_91 = arith.constant 241 : i32
    %162 = tpu.dynamic_rotate %121 by %c241_i32_91 dim 1 : vector<64x256xf32>, i32 -> vector<64x256xf32>
    %cst_92 = arith.constant 0.000000e+00 : f32
    %163 = vector.broadcast %cst_92 : f32 to vector<64x256xf32>
    %164 = arith.select %39, %162, %163 : vector<64x256xi1>, vector<64x256xf32>
    %c15 = arith.constant 15 : index
    %c0_93 = arith.constant 0 : index
    %c0_94 = arith.constant 0 : index
    %165 = vector.load %arg2[%c15, %c0_93, %c0_94] : memref<18x64x64xf32, #tpu.memory_space<vmem>>, vector<1x64x64xf32>
    %166 = vector.shape_cast %165 : vector<1x64x64xf32> to vector<64x64xf32>
    %cst_95 = arith.constant dense<0.000000e+00> : vector<64x256xf32>
    %167 = tpu.matmul %166, %164, %cst_95 {dimension_numbers = #tpu.dot_dimension_numbers<[1], [0], [0], [1], [0, 0, 1, 1], [], []>} : vector<64x64xf32>, vector<64x256xf32>, vector<64x256xf32> -> vector<64x256xf32>
    %168 = arith.addf %161, %167 : vector<64x256xf32>
    %c240_i32_96 = arith.constant 240 : i32
    %169 = tpu.dynamic_rotate %121 by %c240_i32_96 dim 1 : vector<64x256xf32>, i32 -> vector<64x256xf32>
    %cst_97 = arith.constant 0.000000e+00 : f32
    %170 = vector.broadcast %cst_97 : f32 to vector<64x256xf32>
    %171 = arith.select %41, %169, %170 : vector<64x256xi1>, vector<64x256xf32>
    %c16 = arith.constant 16 : index
    %c0_98 = arith.constant 0 : index
    %c0_99 = arith.constant 0 : index
    %172 = vector.load %arg2[%c16, %c0_98, %c0_99] : memref<18x64x64xf32, #tpu.memory_space<vmem>>, vector<1x64x64xf32>
    %173 = vector.shape_cast %172 : vector<1x64x64xf32> to vector<64x64xf32>
    %cst_100 = arith.constant dense<0.000000e+00> : vector<64x256xf32>
    %174 = tpu.matmul %173, %171, %cst_100 {dimension_numbers = #tpu.dot_dimension_numbers<[1], [0], [0], [1], [0, 0, 1, 1], [], []>} : vector<64x64xf32>, vector<64x256xf32>, vector<64x256xf32> -> vector<64x256xf32>
    %175 = arith.addf %168, %174 : vector<64x256xf32>
    %c239_i32_101 = arith.constant 239 : i32
    %176 = tpu.dynamic_rotate %121 by %c239_i32_101 dim 1 : vector<64x256xf32>, i32 -> vector<64x256xf32>
    %cst_102 = arith.constant 0.000000e+00 : f32
    %177 = vector.broadcast %cst_102 : f32 to vector<64x256xf32>
    %178 = arith.select %46, %176, %177 : vector<64x256xi1>, vector<64x256xf32>
    %c17 = arith.constant 17 : index
    %c0_103 = arith.constant 0 : index
    %c0_104 = arith.constant 0 : index
    %179 = vector.load %arg2[%c17, %c0_103, %c0_104] : memref<18x64x64xf32, #tpu.memory_space<vmem>>, vector<1x64x64xf32>
    %180 = vector.shape_cast %179 : vector<1x64x64xf32> to vector<64x64xf32>
    %cst_105 = arith.constant dense<0.000000e+00> : vector<64x256xf32>
    %181 = tpu.matmul %180, %178, %cst_105 {dimension_numbers = #tpu.dot_dimension_numbers<[1], [0], [0], [1], [0, 0, 1, 1], [], []>} : vector<64x64xf32>, vector<64x256xf32>, vector<64x256xf32> -> vector<64x256xf32>
    %182 = arith.addf %175, %181 : vector<64x256xf32>
    %c1_106 = arith.constant 1 : index
    %c0_107 = arith.constant 0 : index
    %c0_108 = arith.constant 0 : index
    %183 = vector.load %arg3[%c1_106, %c0_107, %c0_108] : memref<2x64x1xf32, #tpu.memory_space<vmem>>, vector<1x64x1xf32>
    %184 = vector.shape_cast %183 : vector<1x64x1xf32> to vector<64x1xf32>
    %185 = vector.broadcast %184 : vector<64x1xf32> to vector<64x256xf32>
    %186 = arith.addf %182, %185 : vector<64x256xf32>
    %c0_109 = arith.constant 0 : index
    %c0_110 = arith.constant 0 : index
    %c0_111 = arith.constant 0 : index
    %187 = vector.load %arg4[%c0_109, %c0_110, %c0_111] : memref<1x64x256xf32, #tpu.memory_space<vmem>>, vector<1x64x256xf32>
    %188 = vector.shape_cast %187 : vector<1x64x256xf32> to vector<64x256xf32>
    %189 = vector.shape_cast %186 : vector<64x256xf32> to vector<1x64x256xf32>
    tpu.vector_store %arg4[%c0_109, %c0_110, %c0_111], %189 {strides = array<i32>} : memref<1x64x256xf32, #tpu.memory_space<vmem>>, vector<1x64x256xf32>,
    return
  }
  func.func @transform_0(%arg0: i32) -> (i32, i32, i32) {
    %c0_i32 = arith.constant 0 : i32
    %c0_i32_0 = arith.constant 0 : i32
    %c0_i32_1 = arith.constant 0 : i32
    return %arg0, %c0_i32, %c0_i32_0 : i32, i32, i32
  }
  func.func @transform_1(%arg0: i32) -> (i32, i32, i32) {
    %c0_i32 = arith.constant 0 : i32
    %c0_i32_0 = arith.constant 0 : i32
    %c0_i32_1 = arith.constant 0 : i32
    %c0_i32_2 = arith.constant 0 : i32
    return %c0_i32, %c0_i32_0, %c0_i32_1 : i32, i32, i32
  }
  func.func @transform_2(%arg0: i32) -> (i32, i32, i32) {
    %c0_i32 = arith.constant 0 : i32
    %c0_i32_0 = arith.constant 0 : i32
    %c0_i32_1 = arith.constant 0 : i32
    %c0_i32_2 = arith.constant 0 : i32
    return %c0_i32, %c0_i32_0, %c0_i32_1 : i32, i32, i32
  }
  func.func @transform_3(%arg0: i32) -> (i32, i32, i32) {
    %c0_i32 = arith.constant 0 : i32
    %c0_i32_0 = arith.constant 0 : i32
    %c0_i32_1 = arith.constant 0 : i32
    return %arg0, %c0_i32, %c0_i32_0 : i32, i32, i32
  }
}

</mosaic_0001>

<llo_original>
// kernel: tpu_custom_call.1
$region0: #{tpu_custom_call.1}
  #allocation0 [shape = 'u32[]', space=smem, size = 0x4, offset = 0x4, fixed_abs, tag = 'smem constant byte address 0x4 - core index']
  #allocation1 [shape = 'u32[72,128]{1,0:T(1,128)}', space=vmem, size = 0x9000, scoped, tag = 'internal scratch']
  %s0 = inlined_call_operand.hbm [shape: f32[2,64,256], index: 0, kind: input, shape index: {}, may-alias: {0,3}]
  %s1 = inlined_call_operand.hbm [shape: f32[18,64,64], index: 1, kind: input, shape index: {}]
  %s2 = inlined_call_operand.vmem [shape: f32[2,64,1], index: 2, kind: input, shape index: {}]
  %s3 = inlined_call_operand.hbm [shape: f32[2,64,256], index: 3, kind: output, shape index: {}, may-alias: {0,3}]
  %s4 = sld [smem:[#allocation0]]
  $region53: #{tpu_custom_call.1} parent=0
    _
  %s6 = ssub.s32 1, %s4
  %s7 = scalar_select 0, %s6, %s4
  $region1: #{tpu_custom_call.1} parent=0
    #allocation2 [shape = 'u8[131072]{0}', space=vmem, size = 0x20000, scoped, tag = 'input window, operand 0']
    #allocation3 [shape = 's32[2]{0}', space=sflag, size = 0x8, scoped, tag = 'scoped memory for tpu_custom_call.1']
    #allocation4 [shape = 's32[2]{0}', space=sflag, size = 0x8, scoped, tag = 'scoped memory for tpu_custom_call.1']
    #allocation5 [shape = 'u8[589824]{0}', space=vmem, size = 0x90000, scoped, tag = 'input window, operand 1, single buffered']
    #allocation6 [shape = 's32[1]{0}', space=sflag, size = 0x4, scoped, tag = 'scoped memory for tpu_custom_call.1']
    #allocation7 [shape = 'u8[131072]{0}', space=vmem, size = 0x20000, scoped, tag = 'output window, operand 0']
    %8 = vsyncpa [#allocation3], 0
    %s9 = scalar_lea.sflag [#allocation3], 1
    %10 = vsyncpa %s9, 0
    %11 = vsyncpa [#allocation6], 0
    %12 = vsyncpa [#allocation4], 0
    %s13 = scalar_lea.sflag [#allocation4], 1
    %14 = vsyncpa %s13, 0
    loop: start=0, step=1, limit=4
    $region2: #{tpu_custom_call.1} parent=1 // loop_pre_header
      _
    $region3: #{tpu_custom_call.1} parent=1 // loop_header
      %s16 = sphi 0, %s20
      %p17 = scmp.ge.s32.totalorder %s16, 4
      %s26 = sphi 0, %s28
      %s29 = sphi 0, %s26
      %s30 = sphi 0, %s29
      %s46 = sphi 0, %s30
      %s50 = sphi 0, %s50
      %s52 = sphi 0, %s50
      %s53 = sphi 0, %s52
      %s67 = sphi 0, %s53
      %s71 = sphi 0, %s71
      %s73 = sphi 0, %s71
      %s74 = sphi 0, %s73
      %s88 = sphi 0, %s74
      %s94 = sphi 0, %s96
      %s97 = sphi 0, %s94
      %s98 = sphi 0, %s97
      %s114 = sphi 0, %s98
    $region4: #{tpu_custom_call.1} parent=1 // loop_header_branch
      %19 = sbr.rel (%p17) target = $region8
    $region5: #{tpu_custom_call.1} parent=1 // loop_body
      %s21 = ssub.s32 %s16, 1
      %s22 = ssub.s32 %s16, 2
      %s23 = sadd.s32 %s16, 1
      %s24 = ssub.s32 %s16, %s23
      %p25 = scmp.eq.s32.totalorder %s24, 0
      %s27 = sadd.s32 %s26, 1
      %s28 = scalar_select %p25, %s26, %s27
      %p31 = pneg %p25
      %p32 = scmp.eq.s32.totalorder %s16, 1
      %p33 = por %p31, %p32
      %p34 = scmp.ne.s32.totalorder %s26, %s29
      %p35 = scmp.eq.s32.totalorder %s16, 0
      %p36 = por %p34, %p35
      %p37 = scmp.ne.s32.totalorder %s26, %s29
      %p38 = scmp.eq.s32.totalorder %s21, 1
      %p39 = por %p37, %p38
      %p40 = scmp.ne.s32.totalorder %s29, %s30
      %p41 = scmp.eq.s32.totalorder %s21, 0
      %p42 = por %p40, %p41
      %p43 = scmp.ne.s32.totalorder %s29, %s30
      %p44 = scmp.eq.s32.totalorder %s22, 1
      %p45 = por %p43, %p44
      %p47 = scmp.ne.s32.totalorder %s30, %s46
      %p48 = scmp.eq.s32.totalorder %s22, 0
      %p49 = por %p47, %p48
      %s51 = sadd.s32 %s50, 1
      %p54 = scmp.eq.s32.totalorder %s16, 1
      %p55 = scmp.ne.s32.totalorder %s50, %s52
      %p56 = scmp.eq.s32.totalorder %s16, 0
      %p57 = por %p55, %p56
      %p58 = scmp.ne.s32.totalorder %s50, %s52
      %p59 = scmp.eq.s32.totalorder %s21, 1
      %p60 = por %p58, %p59
      %p61 = scmp.ne.s32.totalorder %s52, %s53
      %p62 = scmp.eq.s32.totalorder %s21, 0
      %p63 = por %p61, %p62
      %p64 = scmp.ne.s32.totalorder %s52, %s53
      %p65 = scmp.eq.s32.totalorder %s22, 1
      %p66 = por %p64, %p65
      %p68 = scmp.ne.s32.totalorder %s53, %s67
      %p69 = scmp.eq.s32.totalorder %s22, 0
      %p70 = por %p68, %p69
      %s72 = sadd.s32 %s71, 1
      %p75 = scmp.eq.s32.totalorder %s16, 1
      %p76 = scmp.ne.s32.totalorder %s71, %s73
      %p77 = scmp.eq.s32.totalorder %s16, 0
      %p78 = por %p76, %p77
      %p79 = scmp.ne.s32.totalorder %s71, %s73
      %p80 = scmp.eq.s32.totalorder %s21, 1
      %p81 = por %p79, %p80
      %p82 = scmp.ne.s32.totalorder %s73, %s74
      %p83 = scmp.eq.s32.totalorder %s21, 0
      %p84 = por %p82, %p83
      %p85 = scmp.ne.s32.totalorder %s73, %s74
      %p86 = scmp.eq.s32.totalorder %s22, 1
      %p87 = por %p85, %p86
      %p89 = scmp.ne.s32.totalorder %s74, %s88
      %p90 = scmp.eq.s32.totalorder %s22, 0
      %p91 = por %p89, %p90
      %s92 = ssub.s32 %s16, %s23
      %p93 = scmp.eq.s32.totalorder %s92, 0
      %s95 = sadd.s32 %s94, 1
      %s96 = scalar_select %p93, %s94, %s95
      %p99 = pneg %p93
      %p100 = scmp.eq.s32.totalorder %s16, 1
      %p101 = por %p99, %p100
      %p102 = scmp.ne.s32.totalorder %s94, %s97
      %p103 = scmp.eq.s32.totalorder %s16, 0
      %p104 = por %p102, %p103
      %p105 = scmp.ne.s32.totalorder %s94, %s97
      %p106 = scmp.eq.s32.totalorder %s21, 1
      %p107 = por %p105, %p106
      %p108 = scmp.ne.s32.totalorder %s97, %s98
      %p109 = scmp.eq.s32.totalorder %s21, 0
      %p110 = por %p108, %p109
      %p111 = scmp.ne.s32.totalorder %s97, %s98
      %p112 = scmp.eq.s32.totalorder %s22, 1
      %p113 = por %p111, %p112
      %p115 = scmp.ne.s32.totalorder %s98, %s114
      %p116 = scmp.eq.s32.totalorder %s22, 0
      %p117 = por %p115, %p116
      %p118 = scmp.le.s32.totalorder 1, %s16
      %p119 = scmp.lt.s32.totalorder %s16, 3
      %p120 = pnand %p118, %p119
      %p121 = pneg %p120
      // Predicated region
      $region9: #{tpu_custom_call.1} parent=5 // pred_check
        _
      $region10: #{tpu_custom_call.1} parent=5 // pred_check_branch
        %123 = sbr.rel (%p120) target = $region12
      $region11: #{tpu_custom_call.1} parent=5 // pred_region
        %s124 = ssub.s32 %s16, 1
        // Predicated region
        $region13: #{tpu_custom_call.1} parent=11 // pred_check
          %p125 = pneg %p63
        $region14: #{tpu_custom_call.1} parent=11 // pred_check_branch
          %127 = sbr.rel (%p125) target = $region16
        $region15: #{tpu_custom_call.1} parent=11 // pred_region
          %129 = vsyncadd [#allocation6], 0
          %s130 = sshll.u32 %s1, 4
          %s131 = int_to_ptr.hbm [resolvable:$true] %s130
          %s132 = sshll.u32 [#allocation5], 4
          %s133 = int_to_ptr.vmem [resolvable:$true] %s132
          %138 = dma.hbm_to_vmem [thread:$0]  %s131, 18432, %s133, [#allocation6], 128, 128, 8
        $region16: #{tpu_custom_call.1} parent=11 // pred_fallthru
          _
        // Predicated region
        $region17: #{tpu_custom_call.1} parent=11 // pred_check
          %p139 = pneg %p84
        $region18: #{tpu_custom_call.1} parent=11 // pred_check_branch
          %141 = sbr.rel (%p139) target = $region20
        $region19: #{tpu_custom_call.1} parent=11 // pred_region
          _
        $region20: #{tpu_custom_call.1} parent=11 // pred_fallthru
          _
      $region12: #{tpu_custom_call.1} parent=5 // pred_fallthru
        _
      %p142 = scmp.lt.s32.totalorder %s16, 2
      // Predicated region
      $region21: #{tpu_custom_call.1} parent=5 // pred_check
        %p143 = pneg %p142
      $region22: #{tpu_custom_call.1} parent=5 // pred_check_branch
        %145 = sbr.rel (%p143) target = $region24
      $region23: #{tpu_custom_call.1} parent=5 // pred_region
        // Predicated region
        $region25: #{tpu_custom_call.1} parent=23 // pred_check
          %p146 = pneg %p36
        $region26: #{tpu_custom_call.1} parent=23 // pred_check_branch
          %148 = sbr.rel (%p146) target = $region28
        $region27: #{tpu_custom_call.1} parent=23 // pred_region
          %s149 = sand.u32 %s26, 1
          %s150 = scalar_lea.sflag [#allocation3], %s149
          %s151 = sand.u32 %s26, 1
          %s152 = smul.addr %s151, 128
          %s153 = scalar_lea.vmem [#allocation2], %s152
          %155 = vsyncadd %s150, 0
          %s156 = smul.addr %s16, 16
          %s157 = smul.addr %s156, 8
          %s158 = scalar_lea.hbm %s0, %s157
          %s159 = sshll.u32 %s158, 4
          %s160 = int_to_ptr.hbm [resolvable:$true] %s159
          %s161 = sshll.u32 %s153, 4
          %s162 = int_to_ptr.vmem [resolvable:$true] %s161
          %167 = dma.hbm_to_vmem [thread:$0]  %s160, 2048, %s162, %s150, 256, 256, 16
        $region28: #{tpu_custom_call.1} parent=23 // pred_fallthru
          _
      $region24: #{tpu_custom_call.1} parent=5 // pred_fallthru
        _
      %p168 = scmp.le.s32.totalorder 1, %s16
      %p169 = scmp.lt.s32.totalorder %s16, 3
      %p170 = pnand %p168, %p169
      %p171 = pneg %p170
      // Predicated region
      $region29: #{tpu_custom_call.1} parent=5 // pred_check
        _
      $region30: #{tpu_custom_call.1} parent=5 // pred_check_branch
        %173 = sbr.rel (%p170) target = $region32
      $region31: #{tpu_custom_call.1} parent=5 // pred_region
        %s174 = ssub.s32 %s16, 1
        %s175 = sand.u32 %s29, 1
        %s176 = scalar_lea.sflag [#allocation3], %s175
        %s177 = sand.u32 %s29, 1
        %s178 = smul.addr %s177, 128
        %s179 = scalar_lea.vmem [#allocation2], %s178
        // Predicated region
        $region33: #{tpu_custom_call.1} parent=31 // pred_check
          %p180 = pneg %p42
        $region34: #{tpu_custom_call.1} parent=31 // pred_check_branch
          %182 = sbr.rel (%p180) target = $region36
        $region35: #{tpu_custom_call.1} parent=31 // pred_region
          %184 = dma.done %s176, 2048
        $region36: #{tpu_custom_call.1} parent=31 // pred_fallthru
          _
        // Predicated region
        $region37: #{tpu_custom_call.1} parent=31 // pred_check
          %p185 = pneg %p63
        $region38: #{tpu_custom_call.1} parent=31 // pred_check_branch
          %187 = sbr.rel (%p185) target = $region40
        $region39: #{tpu_custom_call.1} parent=31 // pred_region
          %189 = dma.done [#allocation6], 18432
        $region40: #{tpu_custom_call.1} parent=31 // pred_fallthru
          _
        %s190 = sand.u32 %s29, 1
        %s191 = scalar_lea.sflag [#allocation3], %s190
        %s192 = sand.u32 %s29, 1
        %s193 = smul.addr %s192, 128
        %s194 = scalar_lea.vmem [#allocation2], %s193
        %p195 = pneg %p42
        %p196 = pneg %p39
        %p197 = pneg %p63
        %p198 = pneg %p60
        %p199 = pneg %p84
        %p200 = pneg %p81
        %p201 = pneg %p110
        %p202 = pneg %p107
        %s203 = sand.u32 %s97, 1
        %s204 = scalar_lea.sflag [#allocation4], %s203
        %s205 = sand.u32 %s97, 1
        %s206 = smul.addr %s205, 128
        %s207 = scalar_lea.vmem [#allocation7], %s206
        %v208 = vld [vmem:[%s179] sm:$0xff]
        %v209 = vld [vmem:[%s179 + $0x8] sm:$0xff]
        %v210 = vld [vmem:[%s179 + $0x10] sm:$0xff]
        %v211 = vld [vmem:[%s179 + $0x18] sm:$0xff]
        %v212 = vld [vmem:[%s179 + $0x20] sm:$0xff]
        %v213 = vld [vmem:[%s179 + $0x28] sm:$0xff]
        %v214 = vld [vmem:[%s179 + $0x30] sm:$0xff]
        %v215 = vld [vmem:[%s179 + $0x38] sm:$0xff]
        %v216 = vld [vmem:[%s179 + $0x40] sm:$0xff]
        %v217 = vld [vmem:[%s179 + $0x48] sm:$0xff]
        %v218 = vld [vmem:[%s179 + $0x50] sm:$0xff]
        %v219 = vld [vmem:[%s179 + $0x58] sm:$0xff]
        %v220 = vld [vmem:[%s179 + $0x60] sm:$0xff]
        %v221 = vld [vmem:[%s179 + $0x68] sm:$0xff]
        %v222 = vld [vmem:[%s179 + $0x70] sm:$0xff]
        %v223 = vld [vmem:[%s179 + $0x78] sm:$0xff]
        %v224 = vlaneseq
        %v225 = vand.u32 %v224, 127
        %v226 = vadd.s32 %v225, 128
        %vm227 = vcmp.lt.s32.totalorder %v225, 0
        %v228 = vsub.s32 0, %v225
        %v229 = vsel %vm227, %v228, %v225
        %v230 = vshrl.u32 %v229, 4
        %v231 = vand.u32 %v229, 15
        %v232 = vsub.s32 0, %v231
        %v233 = vsel %vm227, %v232, %v231
        %vm234 = vcmp.lt.s32.totalorder %v226, 0
        %v235 = vsub.s32 0, %v226
        %v236 = vsel %vm234, %v235, %v226
        %v237 = vshrl.u32 %v236, 4
        %v238 = vand.u32 %v236, 15
        %v239 = vsub.s32 0, %v238
        %v240 = vsel %vm234, %v239, %v238
        %vm241 = vcmp.ne.s32.totalorder %v233, 0
        %vm242 = vcmp.ne.s32.totalorder %v240, 0
        %vm243 = vcmp.lt.s32.totalorder %v233, 0
        %vm244 = vcmp.lt.s32.totalorder %v240, 0
        %vm245 = vmand %vm243, %vm241
        %vm246 = vmand %vm244, %vm242
        %v247 = vadd.s32 %v233, 16
        %v248 = vadd.s32 %v240, 16
        %v249 = vsel %vm245, %v247, %v233
        %v250 = vsel %vm246, %v248, %v240
        %vm251 = vcmp.ge.s32.totalorder %v225, 16
        %vm252 = vcmp.ge.s32.totalorder %v226, 16
        %vm253 = vcmp.ge.s32.totalorder %v249, 1
        %vm254 = vcmp.ge.s32.totalorder %v250, 1
        %vm255 = vmand %vm251, %vm253
        %vm256 = vmand %vm252, %vm254
        %vm257 = vcmp.lt.s32.totalorder %v249, 15
        %vm258 = vcmp.lt.s32.totalorder %v250, 15
        %vm259 = vmand %vm251, %vm257
        %vm260 = vmand %vm252, %vm258
        %vm261 = vcmp.lt.s32.totalorder %v225, 240
        %vm262 = vcmp.lt.s32.totalorder %v226, 240
        %vm263 = vmand %vm261, %vm253
        %vm264 = vmand %vm262, %vm254
        %vm265 = vmand %vm261, %vm257
        %vm266 = vmand %vm262, %vm258
        %vm267 = vcmp.gt.f32.partialorder %v208, 0.0
        %vm268 = vcmp.gt.f32.partialorder %v209, 0.0
        %vm269 = vcmp.gt.f32.partialorder %v210, 0.0
        %vm270 = vcmp.gt.f32.partialorder %v211, 0.0
        %vm271 = vcmp.gt.f32.partialorder %v212, 0.0
        %vm272 = vcmp.gt.f32.partialorder %v213, 0.0
        %vm273 = vcmp.gt.f32.partialorder %v214, 0.0
        %vm274 = vcmp.gt.f32.partialorder %v215, 0.0
        %vm275 = vcmp.gt.f32.partialorder %v216, 0.0
        %vm276 = vcmp.gt.f32.partialorder %v217, 0.0
        %vm277 = vcmp.gt.f32.partialorder %v218, 0.0
        %vm278 = vcmp.gt.f32.partialorder %v219, 0.0
        %vm279 = vcmp.gt.f32.partialorder %v220, 0.0
        %vm280 = vcmp.gt.f32.partialorder %v221, 0.0
        %vm281 = vcmp.gt.f32.partialorder %v222, 0.0
        %vm282 = vcmp.gt.f32.partialorder %v223, 0.0
        %v283 = vmul.f32 %v208, 0.2
        %v284 = vmul.f32 %v209, 0.2
        %v285 = vmul.f32 %v210, 0.2
        %v286 = vmul.f32 %v211, 0.2
        %v287 = vmul.f32 %v212, 0.2
        %v288 = vmul.f32 %v213, 0.2
        %v289 = vmul.f32 %v214, 0.2
        %v290 = vmul.f32 %v215, 0.2
        %v291 = vmul.f32 %v216, 0.2
        %v292 = vmul.f32 %v217, 0.2
        %v293 = vmul.f32 %v218, 0.2
        %v294 = vmul.f32 %v219, 0.2
        %v295 = vmul.f32 %v220, 0.2
        %v296 = vmul.f32 %v221, 0.2
        %v297 = vmul.f32 %v222, 0.2
        %v298 = vmul.f32 %v223, 0.2
        %v299 = vsel %vm267, %v208, %v283
        %v300 = vsel %vm268, %v209, %v284
        %v301 = vsel %vm269, %v210, %v285
        %v302 = vsel %vm270, %v211, %v286
        %v303 = vsel %vm271, %v212, %v287
        %v304 = vsel %vm272, %v213, %v288
        %v305 = vsel %vm273, %v214, %v289
        %v306 = vsel %vm274, %v215, %v290
        %v307 = vsel %vm275, %v216, %v291
        %v308 = vsel %vm276, %v217, %v292
        %v309 = vsel %vm277, %v218, %v293
        %v310 = vsel %vm278, %v219, %v294
        %v311 = vsel %vm279, %v220, %v295
        %v312 = vsel %vm280, %v221, %v296
        %v313 = vsel %vm281, %v222, %v297
        %v314 = vsel %vm282, %v223, %v298
        %315 = vrot.lane.b32.xlu0 %v299, 17
        %v316 = vpop.permute.xlu0 %315
        %317 = vrot.lane.b32.xlu0 %v301, 17
        %v318 = vpop.permute.xlu0 %317
        %319 = vrot.lane.b32.xlu0 %v303, 17
        %v320 = vpop.permute.xlu0 %319
        %321 = vrot.lane.b32.xlu0 %v305, 17
        %v322 = vpop.permute.xlu0 %321
        %323 = vrot.lane.b32.xlu0 %v307, 17
        %v324 = vpop.permute.xlu0 %323
        %325 = vrot.lane.b32.xlu0 %v309, 17
        %v326 = vpop.permute.xlu0 %325
        %327 = vrot.lane.b32.xlu0 %v311, 17
        %v328 = vpop.permute.xlu0 %327
        %329 = vrot.lane.b32.xlu0 %v313, 17
        %v330 = vpop.permute.xlu0 %329
        %331 = vrot.lane.b32.xlu0 %v300, 17
        %v332 = vpop.permute.xlu0 %331
        %333 = vrot.lane.b32.xlu0 %v302, 17
        %v334 = vpop.permute.xlu0 %333
        %335 = vrot.lane.b32.xlu0 %v304, 17
        %v336 = vpop.permute.xlu0 %335
        %337 = vrot.lane.b32.xlu0 %v306, 17
        %v338 = vpop.permute.xlu0 %337
        %339 = vrot.lane.b32.xlu0 %v308, 17
        %v340 = vpop.permute.xlu0 %339
        %341 = vrot.lane.b32.xlu0 %v310, 17
        %v342 = vpop.permute.xlu0 %341
        %343 = vrot.lane.b32.xlu0 %v312, 17
        %v344 = vpop.permute.xlu0 %343
        %345 = vrot.lane.b32.xlu0 %v314, 17
        %v346 = vpop.permute.xlu0 %345
        %vm347 = vcmp.lt.s32.totalorder %v225, 17
        %v348 = vsel %vm347, %v316, %v332
        %v349 = vsel %vm347, %v318, %v334
        %v350 = vsel %vm347, %v320, %v336
        %v351 = vsel %vm347, %v322, %v338
        %v352 = vsel %vm347, %v324, %v340
        %v353 = vsel %vm347, %v326, %v342
        %v354 = vsel %vm347, %v328, %v344
        %v355 = vsel %vm347, %v330, %v346
        %v356 = vsel %vm347, %v332, %v316
        %v357 = vsel %vm347, %v334, %v318
        %v358 = vsel %vm347, %v336, %v320
        %v359 = vsel %vm347, %v338, %v322
        %v360 = vsel %vm347, %v340, %v324
        %v361 = vsel %vm347, %v342, %v326
        %v362 = vsel %vm347, %v344, %v328
        %v363 = vsel %vm347, %v346, %v330
        %v364 = vsel %vm255, %v356, 0.0
        %v365 = vsel %vm256, %v348, 0.0
        %v366 = vsel %vm255, %v357, 0.0
        %v367 = vsel %vm256, %v349, 0.0
        %v368 = vsel %vm255, %v358, 0.0
        %v369 = vsel %vm256, %v350, 0.0
        %v370 = vsel %vm255, %v359, 0.0
        %v371 = vsel %vm256, %v351, 0.0
        %v372 = vsel %vm255, %v360, 0.0
        %v373 = vsel %vm256, %v352, 0.0
        %v374 = vsel %vm255, %v361, 0.0
        %v375 = vsel %vm256, %v353, 0.0
        %v376 = vsel %vm255, %v362, 0.0
        %v377 = vsel %vm256, %v354, 0.0
        %v378 = vsel %vm255, %v363, 0.0
        %v379 = vsel %vm256, %v355, 0.0
        %v380 = vld [vmem:[#allocation5] sm:$0xff]
        %v381 = vld [vmem:[#allocation5 + $0x8] sm:$0xff]
        %v382 = vld [vmem:[#allocation5 + $0x10] sm:$0xff]
        %v383 = vld [vmem:[#allocation5 + $0x18] sm:$0xff]
        %v384 = vld [vmem:[#allocation5 + $0x20] sm:$0xff]
        %v385 = vld [vmem:[#allocation5 + $0x28] sm:$0xff]
        %v386 = vld [vmem:[#allocation5 + $0x30] sm:$0xff]
        %v387 = vld [vmem:[#allocation5 + $0x38] sm:$0xff]
        %388 = vrot.lane.b32.xlu0 %v299, 16
        %v389 = vpop.permute.xlu0 %388
        %390 = vrot.lane.b32.xlu0 %v301, 16
        %v391 = vpop.permute.xlu0 %390
        %392 = vrot.lane.b32.xlu0 %v303, 16
        %v393 = vpop.permute.xlu0 %392
        %394 = vrot.lane.b32.xlu0 %v305, 16
        %v395 = vpop.permute.xlu0 %394
        %396 = vrot.lane.b32.xlu0 %v307, 16
        %v397 = vpop.permute.xlu0 %396
        %398 = vrot.lane.b32.xlu0 %v309, 16
        %v399 = vpop.permute.xlu0 %398
        %400 = vrot.lane.b32.xlu0 %v311, 16
        %v401 = vpop.permute.xlu0 %400
        %402 = vrot.lane.b32.xlu0 %v313, 16
        %v403 = vpop.permute.xlu0 %402
        %404 = vrot.lane.b32.xlu0 %v300, 16
        %v405 = vpop.permute.xlu0 %404
        %406 = vrot.lane.b32.xlu0 %v302, 16
        %v407 = vpop.permute.xlu0 %406
        %408 = vrot.lane.b32.xlu0 %v304, 16
        %v409 = vpop.permute.xlu0 %408
        %410 = vrot.lane.b32.xlu0 %v306, 16
        %v411 = vpop.permute.xlu0 %410
        %412 = vrot.lane.b32.xlu0 %v308, 16
        %v413 = vpop.permute.xlu0 %412
        %414 = vrot.lane.b32.xlu0 %v310, 16
        %v415 = vpop.permute.xlu0 %414
        %416 = vrot.lane.b32.xlu0 %v312, 16
        %v417 = vpop.permute.xlu0 %416
        %418 = vrot.lane.b32.xlu0 %v314, 16
        %v419 = vpop.permute.xlu0 %418
        %vm420 = vcmp.lt.s32.totalorder %v225, 16
        %v421 = vsel %vm420, %v389, %v405
        %v422 = vsel %vm420, %v391, %v407
        %v423 = vsel %vm420, %v393, %v409
        %v424 = vsel %vm420, %v395, %v411
        %v425 = vsel %vm420, %v397, %v413
        %v426 = vsel %vm420, %v399, %v415
        %v427 = vsel %vm420, %v401, %v417
        %v428 = vsel %vm420, %v403, %v419
        %v429 = vsel %vm420, %v405, %v389
        %v430 = vsel %vm420, %v407, %v391
        %v431 = vsel %vm420, %v409, %v393
        %v432 = vsel %vm420, %v411, %v395
        %v433 = vsel %vm420, %v413, %v397
        %v434 = vsel %vm420, %v415, %v399
        %v435 = vsel %vm420, %v417, %v401
        %v436 = vsel %vm420, %v419, %v403
        %v437 = vsel %vm251, %v429, 0.0
        %v438 = vsel %vm252, %v421, 0.0
        %v439 = vsel %vm251, %v430, 0.0
        %v440 = vsel %vm252, %v422, 0.0
        %v441 = vsel %vm251, %v431, 0.0
        %v442 = vsel %vm252, %v423, 0.0
        %v443 = vsel %vm251, %v432, 0.0
        %v444 = vsel %vm252, %v424, 0.0
        %v445 = vsel %vm251, %v433, 0.0
        %v446 = vsel %vm252, %v425, 0.0
        %v447 = vsel %vm251, %v434, 0.0
        %v448 = vsel %vm252, %v426, 0.0
        %v449 = vsel %vm251, %v435, 0.0
        %v450 = vsel %vm252, %v427, 0.0
        %v451 = vsel %vm251, %v436, 0.0
        %v452 = vsel %vm252, %v428, 0.0
        %s453 = scalar_lea.vmem [#allocation5], 64
        %v454 = vld [vmem:[%s453] sm:$0xff]
        %v455 = vld [vmem:[%s453 + $0x8] sm:$0xff]
        %v456 = vld [vmem:[%s453 + $0x10] sm:$0xff]
        %v457 = vld [vmem:[%s453 + $0x18] sm:$0xff]
        %v458 = vld [vmem:[%s453 + $0x20] sm:$0xff]
        %v459 = vld [vmem:[%s453 + $0x28] sm:$0xff]
        %v460 = vld [vmem:[%s453 + $0x30] sm:$0xff]
        %v461 = vld [vmem:[%s453 + $0x38] sm:$0xff]
        %vm462 = vcmask 523264
        %v464 = vsel %vm462, %v454, 0
        %v467 = vsel %vm462, %v455, 0
        %v470 = vsel %vm462, %v456, 0
        %v473 = vsel %vm462, %v457, 0
        %v476 = vsel %vm462, %v458, 0
        %v479 = vsel %vm462, %v459, 0
        %v482 = vsel %vm462, %v460, 0
        %v485 = vsel %vm462, %v461, 0
        %487 = vmatpush.msra.mxu0 0.0
        %488 = vmatpush.msra.mxu0 0.0
        %489 = vmatpush.msra.mxu0 0.0
        %490 = vmatpush.msra.mxu0 0.0
        %491 = vmatpush.msra.mxu0 0.0
        %492 = vmatpush.msra.mxu0 0.0
        %493 = vmatpush.msra.mxu0 0.0
        %494 = vmatpush.msra.mxu0 0.0
        %495 = vmatpush.msra.mxu0 %v451
        %496 = vmatpush.msra.mxu0 %v449
        %497 = vmatpush.msra.mxu0 %v447
        %498 = vmatpush.msra.mxu0 %v445
        %499 = vmatpush.msra.mxu0 %v443
        %500 = vmatpush.msra.mxu0 %v441
        %501 = vmatpush.msra.mxu0 %v439
        %502 = vmatpush.msra.mxu0 %v437
        %503 = vmatmul.f32.gmra.mxu0 %v464
        %v504 = vpop.f32.mrf.mxu0
        %v505 = vadd.f32 0.0, %v504
        %506 = vmatmul.f32.gmra.mxu0 %v467
        %v507 = vpop.f32.mrf.mxu0
        %v508 = vadd.f32 0.0, %v507
        %509 = vmatmul.f32.gmra.mxu0 %v470
        %v510 = vpop.f32.mrf.mxu0
        %v511 = vadd.f32 0.0, %v510
        %512 = vmatmul.f32.gmra.mxu0 %v473
        %v513 = vpop.f32.mrf.mxu0
        %v514 = vadd.f32 0.0, %v513
        %515 = vmatmul.f32.gmra.mxu0 %v476
        %v516 = vpop.f32.mrf.mxu0
        %v517 = vadd.f32 0.0, %v516
        %518 = vmatmul.f32.gmra.mxu0 %v479
        %v519 = vpop.f32.mrf.mxu0
        %v520 = vadd.f32 0.0, %v519
        %521 = vmatmul.f32.gmra.mxu0 %v482
        %v522 = vpop.f32.mrf.mxu0
        %v523 = vadd.f32 0.0, %v522
        %524 = vmatmul.f32.gmra.mxu0 %v485
        %v525 = vpop.f32.mrf.mxu0
        %v526 = vadd.f32 0.0, %v525
        %527 = vdwg.mxu0
        %528 = vmatpush.msra.mxu0 0.0
        %529 = vmatpush.msra.mxu0 0.0
        %530 = vmatpush.msra.mxu0 0.0
        %531 = vmatpush.msra.mxu0 0.0
        %532 = vmatpush.msra.mxu0 0.0
        %533 = vmatpush.msra.mxu0 0.0
        %534 = vmatpush.msra.mxu0 0.0
        %535 = vmatpush.msra.mxu0 0.0
        %536 = vmatpush.msra.mxu0 %v452
        %537 = vmatpush.msra.mxu0 %v450
        %538 = vmatpush.msra.mxu0 %v448
        %539 = vmatpush.msra.mxu0 %v446
        %540 = vmatpush.msra.mxu0 %v444
        %541 = vmatpush.msra.mxu0 %v442
        %542 = vmatpush.msra.mxu0 %v440
        %543 = vmatpush.msra.mxu0 %v438
        %544 = vmatmul.f32.gmra.mxu0 %v464
        %v545 = vpop.f32.mrf.mxu0
        %v546 = vadd.f32 0.0, %v545
        %547 = vmatmul.f32.gmra.mxu0 %v467
        %v548 = vpop.f32.mrf.mxu0
        %v549 = vadd.f32 0.0, %v548
        %550 = vmatmul.f32.gmra.mxu0 %v470
        %v551 = vpop.f32.mrf.mxu0
        %v552 = vadd.f32 0.0, %v551
        %553 = vmatmul.f32.gmra.mxu0 %v473
        %v554 = vpop.f32.mrf.mxu0
        %v555 = vadd.f32 0.0, %v554
        %556 = vmatmul.f32.gmra.mxu0 %v476
        %v557 = vpop.f32.mrf.mxu0
        %v558 = vadd.f32 0.0, %v557
        %559 = vmatmul.f32.gmra.mxu0 %v479
        %v560 = vpop.f32.mrf.mxu0
        %v561 = vadd.f32 0.0, %v560
        %562 = vmatmul.f32.gmra.mxu0 %v482
        %v563 = vpop.f32.mrf.mxu0
        %v564 = vadd.f32 0.0, %v563
        %565 = vmatmul.f32.gmra.mxu0 %v485
        %v566 = vpop.f32.mrf.mxu0
        %v567 = vadd.f32 0.0, %v566
        %568 = vdwg.mxu0
        %v570 = vsel %vm462, %v380, 0
        %v573 = vsel %vm462, %v381, 0
        %v576 = vsel %vm462, %v382, 0
        %v579 = vsel %vm462, %v383, 0
        %v582 = vsel %vm462, %v384, 0
        %v585 = vsel %vm462, %v385, 0
        %v588 = vsel %vm462, %v386, 0
        %v591 = vsel %vm462, %v387, 0
        %593 = vmatpush.msra.mxu0 0.0
        %594 = vmatpush.msra.mxu0 0.0
        %595 = vmatpush.msra.mxu0 0.0
        %596 = vmatpush.msra.mxu0 0.0
        %597 = vmatpush.msra.mxu0 0.0
        %598 = vmatpush.msra.mxu0 0.0
        %599 = vmatpush.msra.mxu0 0.0
        %600 = vmatpush.msra.mxu0 0.0
        %601 = vmatpush.msra.mxu0 %v378
        %602 = vmatpush.msra.mxu0 %v376
        %603 = vmatpush.msra.mxu0 %v374
        %604 = vmatpush.msra.mxu0 %v372
        %605 = vmatpush.msra.mxu0 %v370
        %606 = vmatpush.msra.mxu0 %v368
        %607 = vmatpush.msra.mxu0 %v366
        %608 = vmatpush.msra.mxu0 %v364
        %609 = vmatmul.f32.gmra.mxu0 %v570
        %v610 = vpop.f32.mrf.mxu0
        %v611 = vadd.f32 %v505, %v610
        %612 = vmatmul.f32.gmra.mxu0 %v573
        %v613 = vpop.f32.mrf.mxu0
        %v614 = vadd.f32 %v508, %v613
        %615 = vmatmul.f32.gmra.mxu0 %v576
        %v616 = vpop.f32.mrf.mxu0
        %v617 = vadd.f32 %v511, %v616
        %618 = vmatmul.f32.gmra.mxu0 %v579
        %v619 = vpop.f32.mrf.mxu0
        %v620 = vadd.f32 %v514, %v619
        %621 = vmatmul.f32.gmra.mxu0 %v582
        %v622 = vpop.f32.mrf.mxu0
        %v623 = vadd.f32 %v517, %v622
        %624 = vmatmul.f32.gmra.mxu0 %v585
        %v625 = vpop.f32.mrf.mxu0
        %v626 = vadd.f32 %v520, %v625
        %627 = vmatmul.f32.gmra.mxu0 %v588
        %v628 = vpop.f32.mrf.mxu0
        %v629 = vadd.f32 %v523, %v628
        %630 = vmatmul.f32.gmra.mxu0 %v591
        %v631 = vpop.f32.mrf.mxu0
        %v632 = vadd.f32 %v526, %v631
        %633 = vdwg.mxu0
        %634 = vmatpush.msra.mxu0 0.0
        %635 = vmatpush.msra.mxu0 0.0
        %636 = vmatpush.msra.mxu0 0.0
        %637 = vmatpush.msra.mxu0 0.0
        %638 = vmatpush.msra.mxu0 0.0
        %639 = vmatpush.msra.mxu0 0.0
        %640 = vmatpush.msra.mxu0 0.0
        %641 = vmatpush.msra.mxu0 0.0
        %642 = vmatpush.msra.mxu0 %v379
        %643 = vmatpush.msra.mxu0 %v377
        %644 = vmatpush.msra.mxu0 %v375
        %645 = vmatpush.msra.mxu0 %v373
        %646 = vmatpush.msra.mxu0 %v371
        %647 = vmatpush.msra.mxu0 %v369
        %648 = vmatpush.msra.mxu0 %v367
        %649 = vmatpush.msra.mxu0 %v365
        %650 = vmatmul.f32.gmra.mxu0 %v570
        %v651 = vpop.f32.mrf.mxu0
        %v652 = vadd.f32 %v546, %v651
        %653 = vmatmul.f32.gmra.mxu0 %v573
        %v654 = vpop.f32.mrf.mxu0
        %v655 = vadd.f32 %v549, %v654
        %656 = vmatmul.f32.gmra.mxu0 %v576
        %v657 = vpop.f32.mrf.mxu0
        %v658 = vadd.f32 %v552, %v657
        %659 = vmatmul.f32.gmra.mxu0 %v579
        %v660 = vpop.f32.mrf.mxu0
        %v661 = vadd.f32 %v555, %v660
        %662 = vmatmul.f32.gmra.mxu0 %v582
        %v663 = vpop.f32.mrf.mxu0
        %v664 = vadd.f32 %v558, %v663
        %665 = vmatmul.f32.gmra.mxu0 %v585
        %v666 = vpop.f32.mrf.mxu0
        %v667 = vadd.f32 %v561, %v666
        %668 = vmatmul.f32.gmra.mxu0 %v588
        %v669 = vpop.f32.mrf.mxu0
        %v670 = vadd.f32 %v564, %v669
        %671 = vmatmul.f32.gmra.mxu0 %v591
        %v672 = vpop.f32.mrf.mxu0
        %v673 = vadd.f32 %v567, %v672
        %674 = vdwg.mxu0
        %675 = vrot.lane.b32.xlu0 %v299, 15
        %v676 = vpop.permute.xlu0 %675
        %677 = vrot.lane.b32.xlu0 %v301, 15
        %v678 = vpop.permute.xlu0 %677
        %679 = vrot.lane.b32.xlu0 %v303, 15
        %v680 = vpop.permute.xlu0 %679
        %681 = vrot.lane.b32.xlu0 %v305, 15
        %v682 = vpop.permute.xlu0 %681
        %683 = vrot.lane.b32.xlu0 %v307, 15
        %v684 = vpop.permute.xlu0 %683
        %685 = vrot.lane.b32.xlu0 %v309, 15
        %v686 = vpop.permute.xlu0 %685
        %687 = vrot.lane.b32.xlu0 %v311, 15
        %v688 = vpop.permute.xlu0 %687
        %689 = vrot.lane.b32.xlu0 %v313, 15
        %v690 = vpop.permute.xlu0 %689
        %691 = vrot.lane.b32.xlu0 %v300, 15
        %v692 = vpop.permute.xlu0 %691
        %693 = vrot.lane.b32.xlu0 %v302, 15
        %v694 = vpop.permute.xlu0 %693
        %695 = vrot.lane.b32.xlu0 %v304, 15
        %v696 = vpop.permute.xlu0 %695
        %697 = vrot.lane.b32.xlu0 %v306, 15
        %v698 = vpop.permute.xlu0 %697
        %699 = vrot.lane.b32.xlu0 %v308, 15
        %v700 = vpop.permute.xlu0 %699
        %701 = vrot.lane.b32.xlu0 %v310, 15
        %v702 = vpop.permute.xlu0 %701
        %703 = vrot.lane.b32.xlu0 %v312, 15
        %v704 = vpop.permute.xlu0 %703
        %705 = vrot.lane.b32.xlu0 %v314, 15
        %v706 = vpop.permute.xlu0 %705
        %vm707 = vcmp.lt.s32.totalorder %v225, 15
        %v708 = vsel %vm707, %v676, %v692
        %v709 = vsel %vm707, %v678, %v694
        %v710 = vsel %vm707, %v680, %v696
        %v711 = vsel %vm707, %v682, %v698
        %v712 = vsel %vm707, %v684, %v700
        %v713 = vsel %vm707, %v686, %v702
        %v714 = vsel %vm707, %v688, %v704
        %v715 = vsel %vm707, %v690, %v706
        %v716 = vsel %vm707, %v692, %v676
        %v717 = vsel %vm707, %v694, %v678
        %v718 = vsel %vm707, %v696, %v680
        %v719 = vsel %vm707, %v698, %v682
        %v720 = vsel %vm707, %v700, %v684
        %v721 = vsel %vm707, %v702, %v686
        %v722 = vsel %vm707, %v704, %v688
        %v723 = vsel %vm707, %v706, %v690
        %v724 = vsel %vm259, %v716, 0.0
        %v725 = vsel %vm260, %v708, 0.0
        %v726 = vsel %vm259, %v717, 0.0
        %v727 = vsel %vm260, %v709, 0.0
        %v728 = vsel %vm259, %v718, 0.0
        %v729 = vsel %vm260, %v710, 0.0
        %v730 = vsel %vm259, %v719, 0.0
        %v731 = vsel %vm260, %v711, 0.0
        %v732 = vsel %vm259, %v720, 0.0
        %v733 = vsel %vm260, %v712, 0.0
        %v734 = vsel %vm259, %v721, 0.0
        %v735 = vsel %vm260, %v713, 0.0
        %v736 = vsel %vm259, %v722, 0.0
        %v737 = vsel %vm260, %v714, 0.0
        %v738 = vsel %vm259, %v723, 0.0
        %v739 = vsel %vm260, %v715, 0.0
        %s740 = scalar_lea.vmem [#allocation5], 128
        %v741 = vld [vmem:[%s740] sm:$0xff]
        %v742 = vld [vmem:[%s740 + $0x8] sm:$0xff]
        %v743 = vld [vmem:[%s740 + $0x10] sm:$0xff]
        %v744 = vld [vmem:[%s740 + $0x18] sm:$0xff]
        %v745 = vld [vmem:[%s740 + $0x20] sm:$0xff]
        %v746 = vld [vmem:[%s740 + $0x28] sm:$0xff]
        %v747 = vld [vmem:[%s740 + $0x30] sm:$0xff]
        %v748 = vld [vmem:[%s740 + $0x38] sm:$0xff]
        %v750 = vsel %vm462, %v741, 0
        %v753 = vsel %vm462, %v742, 0
        %v756 = vsel %vm462, %v743, 0
        %v759 = vsel %vm462, %v744, 0
        %v762 = vsel %vm462, %v745, 0
        %v765 = vsel %vm462, %v746, 0
        %v768 = vsel %vm462, %v747, 0
        %v771 = vsel %vm462, %v748, 0
        %773 = vmatpush.msra.mxu0 0.0
        %774 = vmatpush.msra.mxu0 0.0
        %775 = vmatpush.msra.mxu0 0.0
        %776 = vmatpush.msra.mxu0 0.0
        %777 = vmatpush.msra.mxu0 0.0
        %778 = vmatpush.msra.mxu0 0.0
        %779 = vmatpush.msra.mxu0 0.0
        %780 = vmatpush.msra.mxu0 0.0
        %781 = vmatpush.msra.mxu0 %v738
        %782 = vmatpush.msra.mxu0 %v736
        %783 = vmatpush.msra.mxu0 %v734
        %784 = vmatpush.msra.mxu0 %v732
        %785 = vmatpush.msra.mxu0 %v730
        %786 = vmatpush.msra.mxu0 %v728
        %787 = vmatpush.msra.mxu0 %v726
        %788 = vmatpush.msra.mxu0 %v724
        %789 = vmatmul.f32.gmra.mxu0 %v750
        %v790 = vpop.f32.mrf.mxu0
        %v791 = vadd.f32 0.0, %v790
        %792 = vmatmul.f32.gmra.mxu0 %v753
        %v793 = vpop.f32.mrf.mxu0
        %v794 = vadd.f32 0.0, %v793
        %795 = vmatmul.f32.gmra.mxu0 %v756
        %v796 = vpop.f32.mrf.mxu0
        %v797 = vadd.f32 0.0, %v796
        %798 = vmatmul.f32.gmra.mxu0 %v759
        %v799 = vpop.f32.mrf.mxu0
        %v800 = vadd.f32 0.0, %v799
        %801 = vmatmul.f32.gmra.mxu0 %v762
        %v802 = vpop.f32.mrf.mxu0
        %v803 = vadd.f32 0.0, %v802
        %804 = vmatmul.f32.gmra.mxu0 %v765
        %v805 = vpop.f32.mrf.mxu0
        %v806 = vadd.f32 0.0, %v805
        %807 = vmatmul.f32.gmra.mxu0 %v768
        %v808 = vpop.f32.mrf.mxu0
        %v809 = vadd.f32 0.0, %v808
        %810 = vmatmul.f32.gmra.mxu0 %v771
        %v811 = vpop.f32.mrf.mxu0
        %v812 = vadd.f32 0.0, %v811
        %813 = vdwg.mxu0
        %814 = vmatpush.msra.mxu0 0.0
        %815 = vmatpush.msra.mxu0 0.0
        %816 = vmatpush.msra.mxu0 0.0
        %817 = vmatpush.msra.mxu0 0.0
        %818 = vmatpush.msra.mxu0 0.0
        %819 = vmatpush.msra.mxu0 0.0
        %820 = vmatpush.msra.mxu0 0.0
        %821 = vmatpush.msra.mxu0 0.0
        %822 = vmatpush.msra.mxu0 %v739
        %823 = vmatpush.msra.mxu0 %v737
        %824 = vmatpush.msra.mxu0 %v735
        %825 = vmatpush.msra.mxu0 %v733
        %826 = vmatpush.msra.mxu0 %v731
        %827 = vmatpush.msra.mxu0 %v729
        %828 = vmatpush.msra.mxu0 %v727
        %829 = vmatpush.msra.mxu0 %v725
        %830 = vmatmul.f32.gmra.mxu0 %v750
        %v831 = vpop.f32.mrf.mxu0
        %v832 = vadd.f32 0.0, %v831
        %833 = vmatmul.f32.gmra.mxu0 %v753
        %v834 = vpop.f32.mrf.mxu0
        %v835 = vadd.f32 0.0, %v834
        %836 = vmatmul.f32.gmra.mxu0 %v756
        %v837 = vpop.f32.mrf.mxu0
        %v838 = vadd.f32 0.0, %v837
        %839 = vmatmul.f32.gmra.mxu0 %v759
        %v840 = vpop.f32.mrf.mxu0
        %v841 = vadd.f32 0.0, %v840
        %842 = vmatmul.f32.gmra.mxu0 %v762
        %v843 = vpop.f32.mrf.mxu0
        %v844 = vadd.f32 0.0, %v843
        %845 = vmatmul.f32.gmra.mxu0 %v765
        %v846 = vpop.f32.mrf.mxu0
        %v847 = vadd.f32 0.0, %v846
        %848 = vmatmul.f32.gmra.mxu0 %v768
        %v849 = vpop.f32.mrf.mxu0
        %v850 = vadd.f32 0.0, %v849
        %851 = vmatmul.f32.gmra.mxu0 %v771
        %v852 = vpop.f32.mrf.mxu0
        %v853 = vadd.f32 0.0, %v852
        %854 = vdwg.mxu0
        %v855 = vadd.f32 %v611, %v791
        %v856 = vadd.f32 %v652, %v832
        %v857 = vadd.f32 %v614, %v794
        %v858 = vadd.f32 %v655, %v835
        %v859 = vadd.f32 %v617, %v797
        %v860 = vadd.f32 %v658, %v838
        %v861 = vadd.f32 %v620, %v800
        %v862 = vadd.f32 %v661, %v841
        %v863 = vadd.f32 %v623, %v803
        %v864 = vadd.f32 %v664, %v844
        %v865 = vadd.f32 %v626, %v806
        %v866 = vadd.f32 %v667, %v847
        %v867 = vadd.f32 %v629, %v809
        %v868 = vadd.f32 %v670, %v850
        %v869 = vadd.f32 %v632, %v812
        %v870 = vadd.f32 %v673, %v853
        %871 = vrot.lane.b32.xlu0 %v299, 1
        %v872 = vpop.permute.xlu0 %871
        %873 = vrot.lane.b32.xlu0 %v301, 1
        %v874 = vpop.permute.xlu0 %873
        %875 = vrot.lane.b32.xlu0 %v303, 1
        %v876 = vpop.permute.xlu0 %875
        %877 = vrot.lane.b32.xlu0 %v305, 1
        %v878 = vpop.permute.xlu0 %877
        %879 = vrot.lane.b32.xlu0 %v307, 1
        %v880 = vpop.permute.xlu0 %879
        %881 = vrot.lane.b32.xlu0 %v309, 1
        %v882 = vpop.permute.xlu0 %881
        %883 = vrot.lane.b32.xlu0 %v311, 1
        %v884 = vpop.permute.xlu0 %883
        %885 = vrot.lane.b32.xlu0 %v313, 1
        %v886 = vpop.permute.xlu0 %885
        %887 = vrot.lane.b32.xlu0 %v300, 1
        %v888 = vpop.permute.xlu0 %887
        %889 = vrot.lane.b32.xlu0 %v302, 1
        %v890 = vpop.permute.xlu0 %889
        %891 = vrot.lane.b32.xlu0 %v304, 1
        %v892 = vpop.permute.xlu0 %891
        %893 = vrot.lane.b32.xlu0 %v306, 1
        %v894 = vpop.permute.xlu0 %893
        %895 = vrot.lane.b32.xlu0 %v308, 1
        %v896 = vpop.permute.xlu0 %895
        %897 = vrot.lane.b32.xlu0 %v310, 1
        %v898 = vpop.permute.xlu0 %897
        %899 = vrot.lane.b32.xlu0 %v312, 1
        %v900 = vpop.permute.xlu0 %899
        %901 = vrot.lane.b32.xlu0 %v314, 1
        %v902 = vpop.permute.xlu0 %901
        %vm903 = vcmp.lt.s32.totalorder %v225, 1
        %v904 = vsel %vm903, %v872, %v888
        %v905 = vsel %vm903, %v874, %v890
        %v906 = vsel %vm903, %v876, %v892
        %v907 = vsel %vm903, %v878, %v894
        %v908 = vsel %vm903, %v880, %v896
        %v909 = vsel %vm903, %v882, %v898
        %v910 = vsel %vm903, %v884, %v900
        %v911 = vsel %vm903, %v886, %v902
        %v912 = vsel %vm903, %v888, %v872
        %v913 = vsel %vm903, %v890, %v874
        %v914 = vsel %vm903, %v892, %v876
        %v915 = vsel %vm903, %v894, %v878
        %v916 = vsel %vm903, %v896, %v880
        %v917 = vsel %vm903, %v898, %v882
        %v918 = vsel %vm903, %v900, %v884
        %v919 = vsel %vm903, %v902, %v886
        %v920 = vsel %vm253, %v912, 0.0
        %v921 = vsel %vm254, %v904, 0.0
        %v922 = vsel %vm253, %v913, 0.0
        %v923 = vsel %vm254, %v905, 0.0
        %v924 = vsel %vm253, %v914, 0.0
        %v925 = vsel %vm254, %v906, 0.0
        %v926 = vsel %vm253, %v915, 0.0
        %v927 = vsel %vm254, %v907, 0.0
        %v928 = vsel %vm253, %v916, 0.0
        %v929 = vsel %vm254, %v908, 0.0
        %v930 = vsel %vm253, %v917, 0.0
        %v931 = vsel %vm254, %v909, 0.0
        %v932 = vsel %vm253, %v918, 0.0
        %v933 = vsel %vm254, %v910, 0.0
        %v934 = vsel %vm253, %v919, 0.0
        %v935 = vsel %vm254, %v911, 0.0
        %s936 = scalar_lea.vmem [#allocation5], 192
        %v937 = vld [vmem:[%s936] sm:$0xff]
        %v938 = vld [vmem:[%s936 + $0x8] sm:$0xff]
        %v939 = vld [vmem:[%s936 + $0x10] sm:$0xff]
        %v940 = vld [vmem:[%s936 + $0x18] sm:$0xff]
        %v941 = vld [vmem:[%s936 + $0x20] sm:$0xff]
        %v942 = vld [vmem:[%s936 + $0x28] sm:$0xff]
        %v943 = vld [vmem:[%s936 + $0x30] sm:$0xff]
        %v944 = vld [vmem:[%s936 + $0x38] sm:$0xff]
        %v946 = vsel %vm462, %v937, 0
        %v949 = vsel %vm462, %v938, 0
        %v952 = vsel %vm462, %v939, 0
        %v955 = vsel %vm462, %v940, 0
        %v958 = vsel %vm462, %v941, 0
        %v961 = vsel %vm462, %v942, 0
        %v964 = vsel %vm462, %v943, 0
        %v967 = vsel %vm462, %v944, 0
        %969 = vmatpush.msra.mxu0 0.0
        %970 = vmatpush.msra.mxu0 0.0
        %971 = vmatpush.msra.mxu0 0.0
        %972 = vmatpush.msra.mxu0 0.0
        %973 = vmatpush.msra.mxu0 0.0
        %974 = vmatpush.msra.mxu0 0.0
        %975 = vmatpush.msra.mxu0 0.0
        %976 = vmatpush.msra.mxu0 0.0
        %977 = vmatpush.msra.mxu0 %v934
        %978 = vmatpush.msra.mxu0 %v932
        %979 = vmatpush.msra.mxu0 %v930
        %980 = vmatpush.msra.mxu0 %v928
        %981 = vmatpush.msra.mxu0 %v926
        %982 = vmatpush.msra.mxu0 %v924
        %983 = vmatpush.msra.mxu0 %v922
        %984 = vmatpush.msra.mxu0 %v920
        %985 = vmatmul.f32.gmra.mxu0 %v946
        %v986 = vpop.f32.mrf.mxu0
        %v987 = vadd.f32 0.0, %v986
        %988 = vmatmul.f32.gmra.mxu0 %v949
        %v989 = vpop.f32.mrf.mxu0
        %v990 = vadd.f32 0.0, %v989
        %991 = vmatmul.f32.gmra.mxu0 %v952
        %v992 = vpop.f32.mrf.mxu0
        %v993 = vadd.f32 0.0, %v992
        %994 = vmatmul.f32.gmra.mxu0 %v955
        %v995 = vpop.f32.mrf.mxu0
        %v996 = vadd.f32 0.0, %v995
        %997 = vmatmul.f32.gmra.mxu0 %v958
        %v998 = vpop.f32.mrf.mxu0
        %v999 = vadd.f32 0.0, %v998
        %1000 = vmatmul.f32.gmra.mxu0 %v961
        %v1001 = vpop.f32.mrf.mxu0
        %v1002 = vadd.f32 0.0, %v1001
        %1003 = vmatmul.f32.gmra.mxu0 %v964
        %v1004 = vpop.f32.mrf.mxu0
        %v1005 = vadd.f32 0.0, %v1004
        %1006 = vmatmul.f32.gmra.mxu0 %v967
        %v1007 = vpop.f32.mrf.mxu0
        %v1008 = vadd.f32 0.0, %v1007
        %1009 = vdwg.mxu0
        %1010 = vmatpush.msra.mxu0 0.0
        %1011 = vmatpush.msra.mxu0 0.0
        %1012 = vmatpush.msra.mxu0 0.0
        %1013 = vmatpush.msra.mxu0 0.0
        %1014 = vmatpush.msra.mxu0 0.0
        %1015 = vmatpush.msra.mxu0 0.0
        %1016 = vmatpush.msra.mxu0 0.0
        %1017 = vmatpush.msra.mxu0 0.0
        %1018 = vmatpush.msra.mxu0 %v935
        %1019 = vmatpush.msra.mxu0 %v933
        %1020 = vmatpush.msra.mxu0 %v931
        %1021 = vmatpush.msra.mxu0 %v929
        %1022 = vmatpush.msra.mxu0 %v927
        %1023 = vmatpush.msra.mxu0 %v925
        %1024 = vmatpush.msra.mxu0 %v923
        %1025 = vmatpush.msra.mxu0 %v921
        %1026 = vmatmul.f32.gmra.mxu0 %v946
        %v1027 = vpop.f32.mrf.mxu0
        %v1028 = vadd.f32 0.0, %v1027
        %1029 = vmatmul.f32.gmra.mxu0 %v949
        %v1030 = vpop.f32.mrf.mxu0
        %v1031 = vadd.f32 0.0, %v1030
        %1032 = vmatmul.f32.gmra.mxu0 %v952
        %v1033 = vpop.f32.mrf.mxu0
        %v1034 = vadd.f32 0.0, %v1033
        %1035 = vmatmul.f32.gmra.mxu0 %v955
        %v1036 = vpop.f32.mrf.mxu0
        %v1037 = vadd.f32 0.0, %v1036
        %1038 = vmatmul.f32.gmra.mxu0 %v958
        %v1039 = vpop.f32.mrf.mxu0
        %v1040 = vadd.f32 0.0, %v1039
        %1041 = vmatmul.f32.gmra.mxu0 %v961
        %v1042 = vpop.f32.mrf.mxu0
        %v1043 = vadd.f32 0.0, %v1042
        %1044 = vmatmul.f32.gmra.mxu0 %v964
        %v1045 = vpop.f32.mrf.mxu0
        %v1046 = vadd.f32 0.0, %v1045
        %1047 = vmatmul.f32.gmra.mxu0 %v967
        %v1048 = vpop.f32.mrf.mxu0
        %v1049 = vadd.f32 0.0, %v1048
        %1050 = vdwg.mxu0
        %v1051 = vadd.f32 %v855, %v987
        %v1052 = vadd.f32 %v856, %v1028
        %v1053 = vadd.f32 %v857, %v990
        %v1054 = vadd.f32 %v858, %v1031
        %v1055 = vadd.f32 %v859, %v993
        %v1056 = vadd.f32 %v860, %v1034
        %v1057 = vadd.f32 %v861, %v996
        %v1058 = vadd.f32 %v862, %v1037
        %v1059 = vadd.f32 %v863, %v999
        %v1060 = vadd.f32 %v864, %v1040
        %v1061 = vadd.f32 %v865, %v1002
        %v1062 = vadd.f32 %v866, %v1043
        %v1063 = vadd.f32 %v867, %v1005
        %v1064 = vadd.f32 %v868, %v1046
        %v1065 = vadd.f32 %v869, %v1008
        %v1066 = vadd.f32 %v870, %v1049
        %s1067 = scalar_lea.vmem [#allocation5], 256
        %v1068 = vld [vmem:[%s1067] sm:$0xff]
        %v1069 = vld [vmem:[%s1067 + $0x8] sm:$0xff]
        %v1070 = vld [vmem:[%s1067 + $0x10] sm:$0xff]
        %v1071 = vld [vmem:[%s1067 + $0x18] sm:$0xff]
        %v1072 = vld [vmem:[%s1067 + $0x20] sm:$0xff]
        %v1073 = vld [vmem:[%s1067 + $0x28] sm:$0xff]
        %v1074 = vld [vmem:[%s1067 + $0x30] sm:$0xff]
        %v1075 = vld [vmem:[%s1067 + $0x38] sm:$0xff]
        %v1077 = vsel %vm462, %v1068, 0
        %v1080 = vsel %vm462, %v1069, 0
        %v1083 = vsel %vm462, %v1070, 0
        %v1086 = vsel %vm462, %v1071, 0
        %v1089 = vsel %vm462, %v1072, 0
        %v1092 = vsel %vm462, %v1073, 0
        %v1095 = vsel %vm462, %v1074, 0
        %v1098 = vsel %vm462, %v1075, 0
        %1100 = vmatpush.msra.mxu0 0.0
        %1101 = vmatpush.msra.mxu0 0.0
        %1102 = vmatpush.msra.mxu0 0.0
        %1103 = vmatpush.msra.mxu0 0.0
        %1104 = vmatpush.msra.mxu0 0.0
        %1105 = vmatpush.msra.mxu0 0.0
        %1106 = vmatpush.msra.mxu0 0.0
        %1107 = vmatpush.msra.mxu0 0.0
        %1108 = vmatpush.msra.mxu0 %v313
        %1109 = vmatpush.msra.mxu0 %v311
        %1110 = vmatpush.msra.mxu0 %v309
        %1111 = vmatpush.msra.mxu0 %v307
        %1112 = vmatpush.msra.mxu0 %v305
        %1113 = vmatpush.msra.mxu0 %v303
        %1114 = vmatpush.msra.mxu0 %v301
        %1115 = vmatpush.msra.mxu0 %v299
        %1116 = vmatmul.f32.gmra.mxu0 %v1077
        %v1117 = vpop.f32.mrf.mxu0
        %v1118 = vadd.f32 0.0, %v1117
        %1119 = vmatmul.f32.gmra.mxu0 %v1080
        %v1120 = vpop.f32.mrf.mxu0
        %v1121 = vadd.f32 0.0, %v1120
        %1122 = vmatmul.f32.gmra.mxu0 %v1083
        %v1123 = vpop.f32.mrf.mxu0
        %v1124 = vadd.f32 0.0, %v1123
        %1125 = vmatmul.f32.gmra.mxu0 %v1086
        %v1126 = vpop.f32.mrf.mxu0
        %v1127 = vadd.f32 0.0, %v1126
        %1128 = vmatmul.f32.gmra.mxu0 %v1089
        %v1129 = vpop.f32.mrf.mxu0
        %v1130 = vadd.f32 0.0, %v1129
        %1131 = vmatmul.f32.gmra.mxu0 %v1092
        %v1132 = vpop.f32.mrf.mxu0
        %v1133 = vadd.f32 0.0, %v1132
        %1134 = vmatmul.f32.gmra.mxu0 %v1095
        %v1135 = vpop.f32.mrf.mxu0
        %v1136 = vadd.f32 0.0, %v1135
        %1137 = vmatmul.f32.gmra.mxu0 %v1098
        %v1138 = vpop.f32.mrf.mxu0
        %v1139 = vadd.f32 0.0, %v1138
        %1140 = vdwg.mxu0
        %1141 = vmatpush.msra.mxu0 0.0
        %1142 = vmatpush.msra.mxu0 0.0
        %1143 = vmatpush.msra.mxu0 0.0
        %1144 = vmatpush.msra.mxu0 0.0
        %1145 = vmatpush.msra.mxu0 0.0
        %1146 = vmatpush.msra.mxu0 0.0
        %1147 = vmatpush.msra.mxu0 0.0
        %1148 = vmatpush.msra.mxu0 0.0
        %1149 = vmatpush.msra.mxu0 %v314
        %1150 = vmatpush.msra.mxu0 %v312
        %1151 = vmatpush.msra.mxu0 %v310
        %1152 = vmatpush.msra.mxu0 %v308
        %1153 = vmatpush.msra.mxu0 %v306
        %1154 = vmatpush.msra.mxu0 %v304
        %1155 = vmatpush.msra.mxu0 %v302
        %1156 = vmatpush.msra.mxu0 %v300
        %1157 = vmatmul.f32.gmra.mxu0 %v1077
        %v1158 = vpop.f32.mrf.mxu0
        %v1159 = vadd.f32 0.0, %v1158
        %1160 = vmatmul.f32.gmra.mxu0 %v1080
        %v1161 = vpop.f32.mrf.mxu0
        %v1162 = vadd.f32 0.0, %v1161
        %1163 = vmatmul.f32.gmra.mxu0 %v1083
        %v1164 = vpop.f32.mrf.mxu0
        %v1165 = vadd.f32 0.0, %v1164
        %1166 = vmatmul.f32.gmra.mxu0 %v1086
        %v1167 = vpop.f32.mrf.mxu0
        %v1168 = vadd.f32 0.0, %v1167
        %1169 = vmatmul.f32.gmra.mxu0 %v1089
        %v1170 = vpop.f32.mrf.mxu0
        %v1171 = vadd.f32 0.0, %v1170
        %1172 = vmatmul.f32.gmra.mxu0 %v1092
        %v1173 = vpop.f32.mrf.mxu0
        %v1174 = vadd.f32 0.0, %v1173
        %1175 = vmatmul.f32.gmra.mxu0 %v1095
        %v1176 = vpop.f32.mrf.mxu0
        %v1177 = vadd.f32 0.0, %v1176
        %1178 = vmatmul.f32.gmra.mxu0 %v1098
        %v1179 = vpop.f32.mrf.mxu0
        %v1180 = vadd.f32 0.0, %v1179
        %1181 = vdwg.mxu0
        %v1182 = vadd.f32 %v1051, %v1118
        %v1183 = vadd.f32 %v1052, %v1159
        %v1184 = vadd.f32 %v1053, %v1121
        %v1185 = vadd.f32 %v1054, %v1162
        %v1186 = vadd.f32 %v1055, %v1124
        %v1187 = vadd.f32 %v1056, %v1165
        %v1188 = vadd.f32 %v1057, %v1127
        %v1189 = vadd.f32 %v1058, %v1168
        %v1190 = vadd.f32 %v1059, %v1130
        %v1191 = vadd.f32 %v1060, %v1171
        %v1192 = vadd.f32 %v1061, %v1133
        %v1193 = vadd.f32 %v1062, %v1174
        %v1194 = vadd.f32 %v1063, %v1136
        %v1195 = vadd.f32 %v1064, %v1177
        %v1196 = vadd.f32 %v1065, %v1139
        %v1197 = vadd.f32 %v1066, %v1180
        %1198 = vrot.lane.b32.xlu0 %v299, 127
        %v1199 = vpop.permute.xlu0 %1198
        %1200 = vrot.lane.b32.xlu0 %v301, 127
        %v1201 = vpop.permute.xlu0 %1200
        %1202 = vrot.lane.b32.xlu0 %v303, 127
        %v1203 = vpop.permute.xlu0 %1202
        %1204 = vrot.lane.b32.xlu0 %v305, 127
        %v1205 = vpop.permute.xlu0 %1204
        %1206 = vrot.lane.b32.xlu0 %v307, 127
        %v1207 = vpop.permute.xlu0 %1206
        %1208 = vrot.lane.b32.xlu0 %v309, 127
        %v1209 = vpop.permute.xlu0 %1208
        %1210 = vrot.lane.b32.xlu0 %v311, 127
        %v1211 = vpop.permute.xlu0 %1210
        %1212 = vrot.lane.b32.xlu0 %v313, 127
        %v1213 = vpop.permute.xlu0 %1212
        %1214 = vrot.lane.b32.xlu0 %v300, 127
        %v1215 = vpop.permute.xlu0 %1214
        %1216 = vrot.lane.b32.xlu0 %v302, 127
        %v1217 = vpop.permute.xlu0 %1216
        %1218 = vrot.lane.b32.xlu0 %v304, 127
        %v1219 = vpop.permute.xlu0 %1218
        %1220 = vrot.lane.b32.xlu0 %v306, 127
        %v1221 = vpop.permute.xlu0 %1220
        %1222 = vrot.lane.b32.xlu0 %v308, 127
        %v1223 = vpop.permute.xlu0 %1222
        %1224 = vrot.lane.b32.xlu0 %v310, 127
        %v1225 = vpop.permute.xlu0 %1224
        %1226 = vrot.lane.b32.xlu0 %v312, 127
        %v1227 = vpop.permute.xlu0 %1226
        %1228 = vrot.lane.b32.xlu0 %v314, 127
        %v1229 = vpop.permute.xlu0 %1228
        %vm1230 = vcmp.lt.s32.totalorder %v225, 127
        %v1231 = vsel %vm1230, %v1199, %v1215
        %v1232 = vsel %vm1230, %v1201, %v1217
        %v1233 = vsel %vm1230, %v1203, %v1219
        %v1234 = vsel %vm1230, %v1205, %v1221
        %v1235 = vsel %vm1230, %v1207, %v1223
        %v1236 = vsel %vm1230, %v1209, %v1225
        %v1237 = vsel %vm1230, %v1211, %v1227
        %v1238 = vsel %vm1230, %v1213, %v1229
        %v1239 = vsel %vm1230, %v1215, %v1199
        %v1240 = vsel %vm1230, %v1217, %v1201
        %v1241 = vsel %vm1230, %v1219, %v1203
        %v1242 = vsel %vm1230, %v1221, %v1205
        %v1243 = vsel %vm1230, %v1223, %v1207
        %v1244 = vsel %vm1230, %v1225, %v1209
        %v1245 = vsel %vm1230, %v1227, %v1211
        %v1246 = vsel %vm1230, %v1229, %v1213
        %v1247 = vsel %vm257, %v1231, 0.0
        %v1248 = vsel %vm258, %v1239, 0.0
        %v1249 = vsel %vm257, %v1232, 0.0
        %v1250 = vsel %vm258, %v1240, 0.0
        %v1251 = vsel %vm257, %v1233, 0.0
        %v1252 = vsel %vm258, %v1241, 0.0
        %v1253 = vsel %vm257, %v1234, 0.0
        %v1254 = vsel %vm258, %v1242, 0.0
        %v1255 = vsel %vm257, %v1235, 0.0
        %v1256 = vsel %vm258, %v1243, 0.0
        %v1257 = vsel %vm257, %v1236, 0.0
        %v1258 = vsel %vm258, %v1244, 0.0
        %v1259 = vsel %vm257, %v1237, 0.0
        %v1260 = vsel %vm258, %v1245, 0.0
        %v1261 = vsel %vm257, %v1238, 0.0
        %v1262 = vsel %vm258, %v1246, 0.0
        %s1263 = scalar_lea.vmem [#allocation5], 320
        %v1264 = vld [vmem:[%s1263] sm:$0xff]
        %v1265 = vld [vmem:[%s1263 + $0x8] sm:$0xff]
        %v1266 = vld [vmem:[%s1263 + $0x10] sm:$0xff]
        %v1267 = vld [vmem:[%s1263 + $0x18] sm:$0xff]
        %v1268 = vld [vmem:[%s1263 + $0x20] sm:$0xff]
        %v1269 = vld [vmem:[%s1263 + $0x28] sm:$0xff]
        %v1270 = vld [vmem:[%s1263 + $0x30] sm:$0xff]
        %v1271 = vld [vmem:[%s1263 + $0x38] sm:$0xff]
        %v1273 = vsel %vm462, %v1264, 0
        %v1276 = vsel %vm462, %v1265, 0
        %v1279 = vsel %vm462, %v1266, 0
        %v1282 = vsel %vm462, %v1267, 0
        %v1285 = vsel %vm462, %v1268, 0
        %v1288 = vsel %vm462, %v1269, 0
        %v1291 = vsel %vm462, %v1270, 0
        %v1294 = vsel %vm462, %v1271, 0
        %1296 = vmatpush.msra.mxu0 0.0
        %1297 = vmatpush.msra.mxu0 0.0
        %1298 = vmatpush.msra.mxu0 0.0
        %1299 = vmatpush.msra.mxu0 0.0
        %1300 = vmatpush.msra.mxu0 0.0
        %1301 = vmatpush.msra.mxu0 0.0
        %1302 = vmatpush.msra.mxu0 0.0
        %1303 = vmatpush.msra.mxu0 0.0
        %1304 = vmatpush.msra.mxu0 %v1261
        %1305 = vmatpush.msra.mxu0 %v1259
        %1306 = vmatpush.msra.mxu0 %v1257
        %1307 = vmatpush.msra.mxu0 %v1255
        %1308 = vmatpush.msra.mxu0 %v1253
        %1309 = vmatpush.msra.mxu0 %v1251
        %1310 = vmatpush.msra.mxu0 %v1249
        %1311 = vmatpush.msra.mxu0 %v1247
        %1312 = vmatmul.f32.gmra.mxu0 %v1273
        %v1313 = vpop.f32.mrf.mxu0
        %v1314 = vadd.f32 0.0, %v1313
        %1315 = vmatmul.f32.gmra.mxu0 %v1276
        %v1316 = vpop.f32.mrf.mxu0
        %v1317 = vadd.f32 0.0, %v1316
        %1318 = vmatmul.f32.gmra.mxu0 %v1279
        %v1319 = vpop.f32.mrf.mxu0
        %v1320 = vadd.f32 0.0, %v1319
        %1321 = vmatmul.f32.gmra.mxu0 %v1282
        %v1322 = vpop.f32.mrf.mxu0
        %v1323 = vadd.f32 0.0, %v1322
        %1324 = vmatmul.f32.gmra.mxu0 %v1285
        %v1325 = vpop.f32.mrf.mxu0
        %v1326 = vadd.f32 0.0, %v1325
        %1327 = vmatmul.f32.gmra.mxu0 %v1288
        %v1328 = vpop.f32.mrf.mxu0
        %v1329 = vadd.f32 0.0, %v1328
        %1330 = vmatmul.f32.gmra.mxu0 %v1291
        %v1331 = vpop.f32.mrf.mxu0
        %v1332 = vadd.f32 0.0, %v1331
        %1333 = vmatmul.f32.gmra.mxu0 %v1294
        %v1334 = vpop.f32.mrf.mxu0
        %v1335 = vadd.f32 0.0, %v1334
        %1336 = vdwg.mxu0
        %1337 = vmatpush.msra.mxu0 0.0
        %1338 = vmatpush.msra.mxu0 0.0
        %1339 = vmatpush.msra.mxu0 0.0
        %1340 = vmatpush.msra.mxu0 0.0
        %1341 = vmatpush.msra.mxu0 0.0
        %1342 = vmatpush.msra.mxu0 0.0
        %1343 = vmatpush.msra.mxu0 0.0
        %1344 = vmatpush.msra.mxu0 0.0
        %1345 = vmatpush.msra.mxu0 %v1262
        %1346 = vmatpush.msra.mxu0 %v1260
        %1347 = vmatpush.msra.mxu0 %v1258
        %1348 = vmatpush.msra.mxu0 %v1256
        %1349 = vmatpush.msra.mxu0 %v1254
        %1350 = vmatpush.msra.mxu0 %v1252
        %1351 = vmatpush.msra.mxu0 %v1250
        %1352 = vmatpush.msra.mxu0 %v1248
        %1353 = vmatmul.f32.gmra.mxu0 %v1273
        %v1354 = vpop.f32.mrf.mxu0
        %v1355 = vadd.f32 0.0, %v1354
        %1356 = vmatmul.f32.gmra.mxu0 %v1276
        %v1357 = vpop.f32.mrf.mxu0
        %v1358 = vadd.f32 0.0, %v1357
        %1359 = vmatmul.f32.gmra.mxu0 %v1279
        %v1360 = vpop.f32.mrf.mxu0
        %v1361 = vadd.f32 0.0, %v1360
        %1362 = vmatmul.f32.gmra.mxu0 %v1282
        %v1363 = vpop.f32.mrf.mxu0
        %v1364 = vadd.f32 0.0, %v1363
        %1365 = vmatmul.f32.gmra.mxu0 %v1285
        %v1366 = vpop.f32.mrf.mxu0
        %v1367 = vadd.f32 0.0, %v1366
        %1368 = vmatmul.f32.gmra.mxu0 %v1288
        %v1369 = vpop.f32.mrf.mxu0
        %v1370 = vadd.f32 0.0, %v1369
        %1371 = vmatmul.f32.gmra.mxu0 %v1291
        %v1372 = vpop.f32.mrf.mxu0
        %v1373 = vadd.f32 0.0, %v1372
        %1374 = vmatmul.f32.gmra.mxu0 %v1294
        %v1375 = vpop.f32.mrf.mxu0
        %v1376 = vadd.f32 0.0, %v1375
        %1377 = vdwg.mxu0
        %v1378 = vadd.f32 %v1182, %v1314
        %v1379 = vadd.f32 %v1183, %v1355
        %v1380 = vadd.f32 %v1184, %v1317
        %v1381 = vadd.f32 %v1185, %v1358
        %v1382 = vadd.f32 %v1186, %v1320
        %v1383 = vadd.f32 %v1187, %v1361
        %v1384 = vadd.f32 %v1188, %v1323
        %v1385 = vadd.f32 %v1189, %v1364
        %v1386 = vadd.f32 %v1190, %v1326
        %v1387 = vadd.f32 %v1191, %v1367
        %v1388 = vadd.f32 %v1192, %v1329
        %v1389 = vadd.f32 %v1193, %v1370
        %v1390 = vadd.f32 %v1194, %v1332
        %v1391 = vadd.f32 %v1195, %v1373
        %v1392 = vadd.f32 %v1196, %v1335
        %v1393 = vadd.f32 %v1197, %v1376
        %1394 = vrot.lane.b32.xlu0 %v299, 113
        %v1395 = vpop.permute.xlu0 %1394
        %1396 = vrot.lane.b32.xlu0 %v301, 113
        %v1397 = vpop.permute.xlu0 %1396
        %1398 = vrot.lane.b32.xlu0 %v303, 113
        %v1399 = vpop.permute.xlu0 %1398
        %1400 = vrot.lane.b32.xlu0 %v305, 113
        %v1401 = vpop.permute.xlu0 %1400
        %1402 = vrot.lane.b32.xlu0 %v307, 113
        %v1403 = vpop.permute.xlu0 %1402
        %1404 = vrot.lane.b32.xlu0 %v309, 113
        %v1405 = vpop.permute.xlu0 %1404
        %1406 = vrot.lane.b32.xlu0 %v311, 113
        %v1407 = vpop.permute.xlu0 %1406
        %1408 = vrot.lane.b32.xlu0 %v313, 113
        %v1409 = vpop.permute.xlu0 %1408
        %1410 = vrot.lane.b32.xlu0 %v300, 113
        %v1411 = vpop.permute.xlu0 %1410
        %1412 = vrot.lane.b32.xlu0 %v302, 113
        %v1413 = vpop.permute.xlu0 %1412
        %1414 = vrot.lane.b32.xlu0 %v304, 113
        %v1415 = vpop.permute.xlu0 %1414
        %1416 = vrot.lane.b32.xlu0 %v306, 113
        %v1417 = vpop.permute.xlu0 %1416
        %1418 = vrot.lane.b32.xlu0 %v308, 113
        %v1419 = vpop.permute.xlu0 %1418
        %1420 = vrot.lane.b32.xlu0 %v310, 113
        %v1421 = vpop.permute.xlu0 %1420
        %1422 = vrot.lane.b32.xlu0 %v312, 113
        %v1423 = vpop.permute.xlu0 %1422
        %1424 = vrot.lane.b32.xlu0 %v314, 113
        %v1425 = vpop.permute.xlu0 %1424
        %vm1426 = vcmp.lt.s32.totalorder %v225, 113
        %v1427 = vsel %vm1426, %v1395, %v1411
        %v1428 = vsel %vm1426, %v1397, %v1413
        %v1429 = vsel %vm1426, %v1399, %v1415
        %v1430 = vsel %vm1426, %v1401, %v1417
        %v1431 = vsel %vm1426, %v1403, %v1419
        %v1432 = vsel %vm1426, %v1405, %v1421
        %v1433 = vsel %vm1426, %v1407, %v1423
        %v1434 = vsel %vm1426, %v1409, %v1425
        %v1435 = vsel %vm1426, %v1411, %v1395
        %v1436 = vsel %vm1426, %v1413, %v1397
        %v1437 = vsel %vm1426, %v1415, %v1399
        %v1438 = vsel %vm1426, %v1417, %v1401
        %v1439 = vsel %vm1426, %v1419, %v1403
        %v1440 = vsel %vm1426, %v1421, %v1405
        %v1441 = vsel %vm1426, %v1423, %v1407
        %v1442 = vsel %vm1426, %v1425, %v1409
        %v1443 = vsel %vm263, %v1427, 0.0
        %v1444 = vsel %vm264, %v1435, 0.0
        %v1445 = vsel %vm263, %v1428, 0.0
        %v1446 = vsel %vm264, %v1436, 0.0
        %v1447 = vsel %vm263, %v1429, 0.0
        %v1448 = vsel %vm264, %v1437, 0.0
        %v1449 = vsel %vm263, %v1430, 0.0
        %v1450 = vsel %vm264, %v1438, 0.0
        %v1451 = vsel %vm263, %v1431, 0.0
        %v1452 = vsel %vm264, %v1439, 0.0
        %v1453 = vsel %vm263, %v1432, 0.0
        %v1454 = vsel %vm264, %v1440, 0.0
        %v1455 = vsel %vm263, %v1433, 0.0
        %v1456 = vsel %vm264, %v1441, 0.0
        %v1457 = vsel %vm263, %v1434, 0.0
        %v1458 = vsel %vm264, %v1442, 0.0
        %s1459 = scalar_lea.vmem [#allocation5], 384
        %v1460 = vld [vmem:[%s1459] sm:$0xff]
        %v1461 = vld [vmem:[%s1459 + $0x8] sm:$0xff]
        %v1462 = vld [vmem:[%s1459 + $0x10] sm:$0xff]
        %v1463 = vld [vmem:[%s1459 + $0x18] sm:$0xff]
        %v1464 = vld [vmem:[%s1459 + $0x20] sm:$0xff]
        %v1465 = vld [vmem:[%s1459 + $0x28] sm:$0xff]
        %v1466 = vld [vmem:[%s1459 + $0x30] sm:$0xff]
        %v1467 = vld [vmem:[%s1459 + $0x38] sm:$0xff]
        %v1469 = vsel %vm462, %v1460, 0
        %v1472 = vsel %vm462, %v1461, 0
        %v1475 = vsel %vm462, %v1462, 0
        %v1478 = vsel %vm462, %v1463, 0
        %v1481 = vsel %vm462, %v1464, 0
        %v1484 = vsel %vm462, %v1465, 0
        %v1487 = vsel %vm462, %v1466, 0
        %v1490 = vsel %vm462, %v1467, 0
        %1492 = vmatpush.msra.mxu0 0.0
        %1493 = vmatpush.msra.mxu0 0.0
        %1494 = vmatpush.msra.mxu0 0.0
        %1495 = vmatpush.msra.mxu0 0.0
        %1496 = vmatpush.msra.mxu0 0.0
        %1497 = vmatpush.msra.mxu0 0.0
        %1498 = vmatpush.msra.mxu0 0.0
        %1499 = vmatpush.msra.mxu0 0.0
        %1500 = vmatpush.msra.mxu0 %v1457
        %1501 = vmatpush.msra.mxu0 %v1455
        %1502 = vmatpush.msra.mxu0 %v1453
        %1503 = vmatpush.msra.mxu0 %v1451
        %1504 = vmatpush.msra.mxu0 %v1449
        %1505 = vmatpush.msra.mxu0 %v1447
        %1506 = vmatpush.msra.mxu0 %v1445
        %1507 = vmatpush.msra.mxu0 %v1443
        %1508 = vmatmul.f32.gmra.mxu0 %v1469
        %v1509 = vpop.f32.mrf.mxu0
        %v1510 = vadd.f32 0.0, %v1509
        %1511 = vmatmul.f32.gmra.mxu0 %v1472
        %v1512 = vpop.f32.mrf.mxu0
        %v1513 = vadd.f32 0.0, %v1512
        %1514 = vmatmul.f32.gmra.mxu0 %v1475
        %v1515 = vpop.f32.mrf.mxu0
        %v1516 = vadd.f32 0.0, %v1515
        %1517 = vmatmul.f32.gmra.mxu0 %v1478
        %v1518 = vpop.f32.mrf.mxu0
        %v1519 = vadd.f32 0.0, %v1518
        %1520 = vmatmul.f32.gmra.mxu0 %v1481
        %v1521 = vpop.f32.mrf.mxu0
        %v1522 = vadd.f32 0.0, %v1521
        %1523 = vmatmul.f32.gmra.mxu0 %v1484
        %v1524 = vpop.f32.mrf.mxu0
        %v1525 = vadd.f32 0.0, %v1524
        %1526 = vmatmul.f32.gmra.mxu0 %v1487
        %v1527 = vpop.f32.mrf.mxu0
        %v1528 = vadd.f32 0.0, %v1527
        %1529 = vmatmul.f32.gmra.mxu0 %v1490
        %v1530 = vpop.f32.mrf.mxu0
        %v1531 = vadd.f32 0.0, %v1530
        %1532 = vdwg.mxu0
        %1533 = vmatpush.msra.mxu0 0.0
        %1534 = vmatpush.msra.mxu0 0.0
        %1535 = vmatpush.msra.mxu0 0.0
        %1536 = vmatpush.msra.mxu0 0.0
        %1537 = vmatpush.msra.mxu0 0.0
        %1538 = vmatpush.msra.mxu0 0.0
        %1539 = vmatpush.msra.mxu0 0.0
        %1540 = vmatpush.msra.mxu0 0.0
        %1541 = vmatpush.msra.mxu0 %v1458
        %1542 = vmatpush.msra.mxu0 %v1456
        %1543 = vmatpush.msra.mxu0 %v1454
        %1544 = vmatpush.msra.mxu0 %v1452
        %1545 = vmatpush.msra.mxu0 %v1450
        %1546 = vmatpush.msra.mxu0 %v1448
        %1547 = vmatpush.msra.mxu0 %v1446
        %1548 = vmatpush.msra.mxu0 %v1444
        %1549 = vmatmul.f32.gmra.mxu0 %v1469
        %v1550 = vpop.f32.mrf.mxu0
        %v1551 = vadd.f32 0.0, %v1550
        %1552 = vmatmul.f32.gmra.mxu0 %v1472
        %v1553 = vpop.f32.mrf.mxu0
        %v1554 = vadd.f32 0.0, %v1553
        %1555 = vmatmul.f32.gmra.mxu0 %v1475
        %v1556 = vpop.f32.mrf.mxu0
        %v1557 = vadd.f32 0.0, %v1556
        %1558 = vmatmul.f32.gmra.mxu0 %v1478
        %v1559 = vpop.f32.mrf.mxu0
        %v1560 = vadd.f32 0.0, %v1559
        %1561 = vmatmul.f32.gmra.mxu0 %v1481
        %v1562 = vpop.f32.mrf.mxu0
        %v1563 = vadd.f32 0.0, %v1562
        %1564 = vmatmul.f32.gmra.mxu0 %v1484
        %v1565 = vpop.f32.mrf.mxu0
        %v1566 = vadd.f32 0.0, %v1565
        %1567 = vmatmul.f32.gmra.mxu0 %v1487
        %v1568 = vpop.f32.mrf.mxu0
        %v1569 = vadd.f32 0.0, %v1568
        %1570 = vmatmul.f32.gmra.mxu0 %v1490
        %v1571 = vpop.f32.mrf.mxu0
        %v1572 = vadd.f32 0.0, %v1571
        %1573 = vdwg.mxu0
        %v1574 = vadd.f32 %v1378, %v1510
        %v1575 = vadd.f32 %v1379, %v1551
        %v1576 = vadd.f32 %v1380, %v1513
        %v1577 = vadd.f32 %v1381, %v1554
        %v1578 = vadd.f32 %v1382, %v1516
        %v1579 = vadd.f32 %v1383, %v1557
        %v1580 = vadd.f32 %v1384, %v1519
        %v1581 = vadd.f32 %v1385, %v1560
        %v1582 = vadd.f32 %v1386, %v1522
        %v1583 = vadd.f32 %v1387, %v1563
        %v1584 = vadd.f32 %v1388, %v1525
        %v1585 = vadd.f32 %v1389, %v1566
        %v1586 = vadd.f32 %v1390, %v1528
        %v1587 = vadd.f32 %v1391, %v1569
        %v1588 = vadd.f32 %v1392, %v1531
        %v1589 = vadd.f32 %v1393, %v1572
        %1590 = vrot.lane.b32.xlu0 %v299, 112
        %v1591 = vpop.permute.xlu0 %1590
        %1592 = vrot.lane.b32.xlu0 %v301, 112
        %v1593 = vpop.permute.xlu0 %1592
        %1594 = vrot.lane.b32.xlu0 %v303, 112
        %v1595 = vpop.permute.xlu0 %1594
        %1596 = vrot.lane.b32.xlu0 %v305, 112
        %v1597 = vpop.permute.xlu0 %1596
        %1598 = vrot.lane.b32.xlu0 %v307, 112
        %v1599 = vpop.permute.xlu0 %1598
        %1600 = vrot.lane.b32.xlu0 %v309, 112
        %v1601 = vpop.permute.xlu0 %1600
        %1602 = vrot.lane.b32.xlu0 %v311, 112
        %v1603 = vpop.permute.xlu0 %1602
        %1604 = vrot.lane.b32.xlu0 %v313, 112
        %v1605 = vpop.permute.xlu0 %1604
        %1606 = vrot.lane.b32.xlu0 %v300, 112
        %v1607 = vpop.permute.xlu0 %1606
        %1608 = vrot.lane.b32.xlu0 %v302, 112
        %v1609 = vpop.permute.xlu0 %1608
        %1610 = vrot.lane.b32.xlu0 %v304, 112
        %v1611 = vpop.permute.xlu0 %1610
        %1612 = vrot.lane.b32.xlu0 %v306, 112
        %v1613 = vpop.permute.xlu0 %1612
        %1614 = vrot.lane.b32.xlu0 %v308, 112
        %v1615 = vpop.permute.xlu0 %1614
        %1616 = vrot.lane.b32.xlu0 %v310, 112
        %v1617 = vpop.permute.xlu0 %1616
        %1618 = vrot.lane.b32.xlu0 %v312, 112
        %v1619 = vpop.permute.xlu0 %1618
        %1620 = vrot.lane.b32.xlu0 %v314, 112
        %v1621 = vpop.permute.xlu0 %1620
        %vm1622 = vcmp.lt.s32.totalorder %v225, 112
        %v1623 = vsel %vm1622, %v1591, %v1607
        %v1624 = vsel %vm1622, %v1593, %v1609
        %v1625 = vsel %vm1622, %v1595, %v1611
        %v1626 = vsel %vm1622, %v1597, %v1613
        %v1627 = vsel %vm1622, %v1599, %v1615
        %v1628 = vsel %vm1622, %v1601, %v1617
        %v1629 = vsel %vm1622, %v1603, %v1619
        %v1630 = vsel %vm1622, %v1605, %v1621
        %v1631 = vsel %vm1622, %v1607, %v1591
        %v1632 = vsel %vm1622, %v1609, %v1593
        %v1633 = vsel %vm1622, %v1611, %v1595
        %v1634 = vsel %vm1622, %v1613, %v1597
        %v1635 = vsel %vm1622, %v1615, %v1599
        %v1636 = vsel %vm1622, %v1617, %v1601
        %v1637 = vsel %vm1622, %v1619, %v1603
        %v1638 = vsel %vm1622, %v1621, %v1605
        %v1639 = vsel %vm261, %v1623, 0.0
        %v1640 = vsel %vm262, %v1631, 0.0
        %v1641 = vsel %vm261, %v1624, 0.0
        %v1642 = vsel %vm262, %v1632, 0.0
        %v1643 = vsel %vm261, %v1625, 0.0
        %v1644 = vsel %vm262, %v1633, 0.0
        %v1645 = vsel %vm261, %v1626, 0.0
        %v1646 = vsel %vm262, %v1634, 0.0
        %v1647 = vsel %vm261, %v1627, 0.0
        %v1648 = vsel %vm262, %v1635, 0.0
        %v1649 = vsel %vm261, %v1628, 0.0
        %v1650 = vsel %vm262, %v1636, 0.0
        %v1651 = vsel %vm261, %v1629, 0.0
        %v1652 = vsel %vm262, %v1637, 0.0
        %v1653 = vsel %vm261, %v1630, 0.0
        %v1654 = vsel %vm262, %v1638, 0.0
        %s1655 = scalar_lea.vmem [#allocation5], 448
        %v1656 = vld [vmem:[%s1655] sm:$0xff]
        %v1657 = vld [vmem:[%s1655 + $0x8] sm:$0xff]
        %v1658 = vld [vmem:[%s1655 + $0x10] sm:$0xff]
        %v1659 = vld [vmem:[%s1655 + $0x18] sm:$0xff]
        %v1660 = vld [vmem:[%s1655 + $0x20] sm:$0xff]
        %v1661 = vld [vmem:[%s1655 + $0x28] sm:$0xff]
        %v1662 = vld [vmem:[%s1655 + $0x30] sm:$0xff]
        %v1663 = vld [vmem:[%s1655 + $0x38] sm:$0xff]
        %v1665 = vsel %vm462, %v1656, 0
        %v1668 = vsel %vm462, %v1657, 0
        %v1671 = vsel %vm462, %v1658, 0
        %v1674 = vsel %vm462, %v1659, 0
        %v1677 = vsel %vm462, %v1660, 0
        %v1680 = vsel %vm462, %v1661, 0
        %v1683 = vsel %vm462, %v1662, 0
        %v1686 = vsel %vm462, %v1663, 0
        %1688 = vmatpush.msra.mxu0 0.0
        %1689 = vmatpush.msra.mxu0 0.0
        %1690 = vmatpush.msra.mxu0 0.0
        %1691 = vmatpush.msra.mxu0 0.0
        %1692 = vmatpush.msra.mxu0 0.0
        %1693 = vmatpush.msra.mxu0 0.0
        %1694 = vmatpush.msra.mxu0 0.0
        %1695 = vmatpush.msra.mxu0 0.0
        %1696 = vmatpush.msra.mxu0 %v1653
        %1697 = vmatpush.msra.mxu0 %v1651
        %1698 = vmatpush.msra.mxu0 %v1649
        %1699 = vmatpush.msra.mxu0 %v1647
        %1700 = vmatpush.msra.mxu0 %v1645
        %1701 = vmatpush.msra.mxu0 %v1643
        %1702 = vmatpush.msra.mxu0 %v1641
        %1703 = vmatpush.msra.mxu0 %v1639
        %1704 = vmatmul.f32.gmra.mxu0 %v1665
        %v1705 = vpop.f32.mrf.mxu0
        %v1706 = vadd.f32 0.0, %v1705
        %1707 = vmatmul.f32.gmra.mxu0 %v1668
        %v1708 = vpop.f32.mrf.mxu0
        %v1709 = vadd.f32 0.0, %v1708
        %1710 = vmatmul.f32.gmra.mxu0 %v1671
        %v1711 = vpop.f32.mrf.mxu0
        %v1712 = vadd.f32 0.0, %v1711
        %1713 = vmatmul.f32.gmra.mxu0 %v1674
        %v1714 = vpop.f32.mrf.mxu0
        %v1715 = vadd.f32 0.0, %v1714
        %1716 = vmatmul.f32.gmra.mxu0 %v1677
        %v1717 = vpop.f32.mrf.mxu0
        %v1718 = vadd.f32 0.0, %v1717
        %1719 = vmatmul.f32.gmra.mxu0 %v1680
        %v1720 = vpop.f32.mrf.mxu0
        %v1721 = vadd.f32 0.0, %v1720
        %1722 = vmatmul.f32.gmra.mxu0 %v1683
        %v1723 = vpop.f32.mrf.mxu0
        %v1724 = vadd.f32 0.0, %v1723
        %1725 = vmatmul.f32.gmra.mxu0 %v1686
        %v1726 = vpop.f32.mrf.mxu0
        %v1727 = vadd.f32 0.0, %v1726
        %1728 = vdwg.mxu0
        %1729 = vmatpush.msra.mxu0 0.0
        %1730 = vmatpush.msra.mxu0 0.0
        %1731 = vmatpush.msra.mxu0 0.0
        %1732 = vmatpush.msra.mxu0 0.0
        %1733 = vmatpush.msra.mxu0 0.0
        %1734 = vmatpush.msra.mxu0 0.0
        %1735 = vmatpush.msra.mxu0 0.0
        %1736 = vmatpush.msra.mxu0 0.0
        %1737 = vmatpush.msra.mxu0 %v1654
        %1738 = vmatpush.msra.mxu0 %v1652
        %1739 = vmatpush.msra.mxu0 %v1650
        %1740 = vmatpush.msra.mxu0 %v1648
        %1741 = vmatpush.msra.mxu0 %v1646
        %1742 = vmatpush.msra.mxu0 %v1644
        %1743 = vmatpush.msra.mxu0 %v1642
        %1744 = vmatpush.msra.mxu0 %v1640
        %1745 = vmatmul.f32.gmra.mxu0 %v1665
        %v1746 = vpop.f32.mrf.mxu0
        %v1747 = vadd.f32 0.0, %v1746
        %1748 = vmatmul.f32.gmra.mxu0 %v1668
        %v1749 = vpop.f32.mrf.mxu0
        %v1750 = vadd.f32 0.0, %v1749
        %1751 = vmatmul.f32.gmra.mxu0 %v1671
        %v1752 = vpop.f32.mrf.mxu0
        %v1753 = vadd.f32 0.0, %v1752
        %1754 = vmatmul.f32.gmra.mxu0 %v1674
        %v1755 = vpop.f32.mrf.mxu0
        %v1756 = vadd.f32 0.0, %v1755
        %1757 = vmatmul.f32.gmra.mxu0 %v1677
        %v1758 = vpop.f32.mrf.mxu0
        %v1759 = vadd.f32 0.0, %v1758
        %1760 = vmatmul.f32.gmra.mxu0 %v1680
        %v1761 = vpop.f32.mrf.mxu0
        %v1762 = vadd.f32 0.0, %v1761
        %1763 = vmatmul.f32.gmra.mxu0 %v1683
        %v1764 = vpop.f32.mrf.mxu0
        %v1765 = vadd.f32 0.0, %v1764
        %1766 = vmatmul.f32.gmra.mxu0 %v1686
        %v1767 = vpop.f32.mrf.mxu0
        %v1768 = vadd.f32 0.0, %v1767
        %1769 = vdwg.mxu0
        %v1770 = vadd.f32 %v1574, %v1706
        %v1771 = vadd.f32 %v1575, %v1747
        %v1772 = vadd.f32 %v1576, %v1709
        %v1773 = vadd.f32 %v1577, %v1750
        %v1774 = vadd.f32 %v1578, %v1712
        %v1775 = vadd.f32 %v1579, %v1753
        %v1776 = vadd.f32 %v1580, %v1715
        %v1777 = vadd.f32 %v1581, %v1756
        %v1778 = vadd.f32 %v1582, %v1718
        %v1779 = vadd.f32 %v1583, %v1759
        %v1780 = vadd.f32 %v1584, %v1721
        %v1781 = vadd.f32 %v1585, %v1762
        %v1782 = vadd.f32 %v1586, %v1724
        %v1783 = vadd.f32 %v1587, %v1765
        %v1784 = vadd.f32 %v1588, %v1727
        %v1785 = vadd.f32 %v1589, %v1768
        %1786 = vrot.lane.b32.xlu0 %v299, 111
        %v1787 = vpop.permute.xlu0 %1786
        %1788 = vrot.lane.b32.xlu0 %v301, 111
        %v1789 = vpop.permute.xlu0 %1788
        %1790 = vrot.lane.b32.xlu0 %v303, 111
        %v1791 = vpop.permute.xlu0 %1790
        %1792 = vrot.lane.b32.xlu0 %v305, 111
        %v1793 = vpop.permute.xlu0 %1792
        %1794 = vrot.lane.b32.xlu0 %v307, 111
        %v1795 = vpop.permute.xlu0 %1794
        %1796 = vrot.lane.b32.xlu0 %v309, 111
        %v1797 = vpop.permute.xlu0 %1796
        %1798 = vrot.lane.b32.xlu0 %v311, 111
        %v1799 = vpop.permute.xlu0 %1798
        %1800 = vrot.lane.b32.xlu0 %v313, 111
        %v1801 = vpop.permute.xlu0 %1800
        %1802 = vrot.lane.b32.xlu0 %v300, 111
        %v1803 = vpop.permute.xlu0 %1802
        %1804 = vrot.lane.b32.xlu0 %v302, 111
        %v1805 = vpop.permute.xlu0 %1804
        %1806 = vrot.lane.b32.xlu0 %v304, 111
        %v1807 = vpop.permute.xlu0 %1806
        %1808 = vrot.lane.b32.xlu0 %v306, 111
        %v1809 = vpop.permute.xlu0 %1808
        %1810 = vrot.lane.b32.xlu0 %v308, 111
        %v1811 = vpop.permute.xlu0 %1810
        %1812 = vrot.lane.b32.xlu0 %v310, 111
        %v1813 = vpop.permute.xlu0 %1812
        %1814 = vrot.lane.b32.xlu0 %v312, 111
        %v1815 = vpop.permute.xlu0 %1814
        %1816 = vrot.lane.b32.xlu0 %v314, 111
        %v1817 = vpop.permute.xlu0 %1816
        %vm1818 = vcmp.lt.s32.totalorder %v225, 111
        %v1819 = vsel %vm1818, %v1787, %v1803
        %v1820 = vsel %vm1818, %v1789, %v1805
        %v1821 = vsel %vm1818, %v1791, %v1807
        %v1822 = vsel %vm1818, %v1793, %v1809
        %v1823 = vsel %vm1818, %v1795, %v1811
        %v1824 = vsel %vm1818, %v1797, %v1813
        %v1825 = vsel %vm1818, %v1799, %v1815
        %v1826 = vsel %vm1818, %v1801, %v1817
        %v1827 = vsel %vm1818, %v1803, %v1787
        %v1828 = vsel %vm1818, %v1805, %v1789
        %v1829 = vsel %vm1818, %v1807, %v1791
        %v1830 = vsel %vm1818, %v1809, %v1793
        %v1831 = vsel %vm1818, %v1811, %v1795
        %v1832 = vsel %vm1818, %v1813, %v1797
        %v1833 = vsel %vm1818, %v1815, %v1799
        %v1834 = vsel %vm1818, %v1817, %v1801
        %v1835 = vsel %vm265, %v1819, 0.0
        %v1836 = vsel %vm266, %v1827, 0.0
        %v1837 = vsel %vm265, %v1820, 0.0
        %v1838 = vsel %vm266, %v1828, 0.0
        %v1839 = vsel %vm265, %v1821, 0.0
        %v1840 = vsel %vm266, %v1829, 0.0
        %v1841 = vsel %vm265, %v1822, 0.0
        %v1842 = vsel %vm266, %v1830, 0.0
        %v1843 = vsel %vm265, %v1823, 0.0
        %v1844 = vsel %vm266, %v1831, 0.0
        %v1845 = vsel %vm265, %v1824, 0.0
        %v1846 = vsel %vm266, %v1832, 0.0
        %v1847 = vsel %vm265, %v1825, 0.0
        %v1848 = vsel %vm266, %v1833, 0.0
        %v1849 = vsel %vm265, %v1826, 0.0
        %v1850 = vsel %vm266, %v1834, 0.0
        %s1851 = scalar_lea.vmem [#allocation5], 512
        %v1852 = vld [vmem:[%s1851] sm:$0xff]
        %v1853 = vld [vmem:[%s1851 + $0x8] sm:$0xff]
        %v1854 = vld [vmem:[%s1851 + $0x10] sm:$0xff]
        %v1855 = vld [vmem:[%s1851 + $0x18] sm:$0xff]
        %v1856 = vld [vmem:[%s1851 + $0x20] sm:$0xff]
        %v1857 = vld [vmem:[%s1851 + $0x28] sm:$0xff]
        %v1858 = vld [vmem:[%s1851 + $0x30] sm:$0xff]
        %v1859 = vld [vmem:[%s1851 + $0x38] sm:$0xff]
        %v1861 = vsel %vm462, %v1852, 0
        %v1864 = vsel %vm462, %v1853, 0
        %v1867 = vsel %vm462, %v1854, 0
        %v1870 = vsel %vm462, %v1855, 0
        %v1873 = vsel %vm462, %v1856, 0
        %v1876 = vsel %vm462, %v1857, 0
        %v1879 = vsel %vm462, %v1858, 0
        %v1882 = vsel %vm462, %v1859, 0
        %1884 = vmatpush.msra.mxu0 0.0
        %1885 = vmatpush.msra.mxu0 0.0
        %1886 = vmatpush.msra.mxu0 0.0
        %1887 = vmatpush.msra.mxu0 0.0
        %1888 = vmatpush.msra.mxu0 0.0
        %1889 = vmatpush.msra.mxu0 0.0
        %1890 = vmatpush.msra.mxu0 0.0
        %1891 = vmatpush.msra.mxu0 0.0
        %1892 = vmatpush.msra.mxu0 %v1849
        %1893 = vmatpush.msra.mxu0 %v1847
        %1894 = vmatpush.msra.mxu0 %v1845
        %1895 = vmatpush.msra.mxu0 %v1843
        %1896 = vmatpush.msra.mxu0 %v1841
        %1897 = vmatpush.msra.mxu0 %v1839
        %1898 = vmatpush.msra.mxu0 %v1837
        %1899 = vmatpush.msra.mxu0 %v1835
        %1900 = vmatmul.f32.gmra.mxu0 %v1861
        %v1901 = vpop.f32.mrf.mxu0
        %v1902 = vadd.f32 0.0, %v1901
        %1903 = vmatmul.f32.gmra.mxu0 %v1864
        %v1904 = vpop.f32.mrf.mxu0
        %v1905 = vadd.f32 0.0, %v1904
        %1906 = vmatmul.f32.gmra.mxu0 %v1867
        %v1907 = vpop.f32.mrf.mxu0
        %v1908 = vadd.f32 0.0, %v1907
        %1909 = vmatmul.f32.gmra.mxu0 %v1870
        %v1910 = vpop.f32.mrf.mxu0
        %v1911 = vadd.f32 0.0, %v1910
        %1912 = vmatmul.f32.gmra.mxu0 %v1873
        %v1913 = vpop.f32.mrf.mxu0
        %v1914 = vadd.f32 0.0, %v1913
        %1915 = vmatmul.f32.gmra.mxu0 %v1876
        %v1916 = vpop.f32.mrf.mxu0
        %v1917 = vadd.f32 0.0, %v1916
        %1918 = vmatmul.f32.gmra.mxu0 %v1879
        %v1919 = vpop.f32.mrf.mxu0
        %v1920 = vadd.f32 0.0, %v1919
        %1921 = vmatmul.f32.gmra.mxu0 %v1882
        %v1922 = vpop.f32.mrf.mxu0
        %v1923 = vadd.f32 0.0, %v1922
        %1924 = vdwg.mxu0
        %1925 = vmatpush.msra.mxu0 0.0
        %1926 = vmatpush.msra.mxu0 0.0
        %1927 = vmatpush.msra.mxu0 0.0
        %1928 = vmatpush.msra.mxu0 0.0
        %1929 = vmatpush.msra.mxu0 0.0
        %1930 = vmatpush.msra.mxu0 0.0
        %1931 = vmatpush.msra.mxu0 0.0
        %1932 = vmatpush.msra.mxu0 0.0
        %1933 = vmatpush.msra.mxu0 %v1850
        %1934 = vmatpush.msra.mxu0 %v1848
        %1935 = vmatpush.msra.mxu0 %v1846
        %1936 = vmatpush.msra.mxu0 %v1844
        %1937 = vmatpush.msra.mxu0 %v1842
        %1938 = vmatpush.msra.mxu0 %v1840
        %1939 = vmatpush.msra.mxu0 %v1838
        %1940 = vmatpush.msra.mxu0 %v1836
        %1941 = vmatmul.f32.gmra.mxu0 %v1861
        %v1942 = vpop.f32.mrf.mxu0
        %v1943 = vadd.f32 0.0, %v1942
        %1944 = vmatmul.f32.gmra.mxu0 %v1864
        %v1945 = vpop.f32.mrf.mxu0
        %v1946 = vadd.f32 0.0, %v1945
        %1947 = vmatmul.f32.gmra.mxu0 %v1867
        %v1948 = vpop.f32.mrf.mxu0
        %v1949 = vadd.f32 0.0, %v1948
        %1950 = vmatmul.f32.gmra.mxu0 %v1870
        %v1951 = vpop.f32.mrf.mxu0
        %v1952 = vadd.f32 0.0, %v1951
        %1953 = vmatmul.f32.gmra.mxu0 %v1873
        %v1954 = vpop.f32.mrf.mxu0
        %v1955 = vadd.f32 0.0, %v1954
        %1956 = vmatmul.f32.gmra.mxu0 %v1876
        %v1957 = vpop.f32.mrf.mxu0
        %v1958 = vadd.f32 0.0, %v1957
        %1959 = vmatmul.f32.gmra.mxu0 %v1879
        %v1960 = vpop.f32.mrf.mxu0
        %v1961 = vadd.f32 0.0, %v1960
        %1962 = vmatmul.f32.gmra.mxu0 %v1882
        %v1963 = vpop.f32.mrf.mxu0
        %v1964 = vadd.f32 0.0, %v1963
        %1965 = vdwg.mxu0
        %v1966 = vadd.f32 %v1770, %v1902
        %v1967 = vadd.f32 %v1771, %v1943
        %v1968 = vadd.f32 %v1772, %v1905
        %v1969 = vadd.f32 %v1773, %v1946
        %v1970 = vadd.f32 %v1774, %v1908
        %v1971 = vadd.f32 %v1775, %v1949
        %v1972 = vadd.f32 %v1776, %v1911
        %v1973 = vadd.f32 %v1777, %v1952
        %v1974 = vadd.f32 %v1778, %v1914
        %v1975 = vadd.f32 %v1779, %v1955
        %v1976 = vadd.f32 %v1780, %v1917
        %v1977 = vadd.f32 %v1781, %v1958
        %v1978 = vadd.f32 %v1782, %v1920
        %v1979 = vadd.f32 %v1783, %v1961
        %v1980 = vadd.f32 %v1784, %v1923
        %v1981 = vadd.f32 %v1785, %v1964
        %v1982 = vld [vmem:[%s2] sm:$0xff]
        %v1983 = vld [vmem:[%s2 + $0x8] sm:$0xff]
        %v1984 = vld [vmem:[%s2 + $0x10] sm:$0xff]
        %v1985 = vld [vmem:[%s2 + $0x18] sm:$0xff]
        %v1986 = vld [vmem:[%s2 + $0x20] sm:$0xff]
        %v1987 = vld [vmem:[%s2 + $0x28] sm:$0xff]
        %v1988 = vld [vmem:[%s2 + $0x30] sm:$0xff]
        %v1989 = vld [vmem:[%s2 + $0x38] sm:$0xff]
        %1991 = vset.pattern.permute.xlu0 0
        %1992 = vperm.xlu0 %1991, %v1982
        %v1993 = vpop.permute.xlu0 %1992
        %1996 = vset.pattern.permute.xlu0 0
        %1997 = vperm.xlu0 %1996, %v1983
        %v1998 = vpop.permute.xlu0 %1997
        %2001 = vset.pattern.permute.xlu0 0
        %2002 = vperm.xlu0 %2001, %v1984
        %v2003 = vpop.permute.xlu0 %2002
        %2006 = vset.pattern.permute.xlu0 0
        %2007 = vperm.xlu0 %2006, %v1985
        %v2008 = vpop.permute.xlu0 %2007
        %2011 = vset.pattern.permute.xlu0 0
        %2012 = vperm.xlu0 %2011, %v1986
        %v2013 = vpop.permute.xlu0 %2012
        %2016 = vset.pattern.permute.xlu0 0
        %2017 = vperm.xlu0 %2016, %v1987
        %v2018 = vpop.permute.xlu0 %2017
        %2021 = vset.pattern.permute.xlu0 0
        %2022 = vperm.xlu0 %2021, %v1988
        %v2023 = vpop.permute.xlu0 %2022
        %2026 = vset.pattern.permute.xlu0 0
        %2027 = vperm.xlu0 %2026, %v1989
        %v2028 = vpop.permute.xlu0 %2027
        %v2030 = vadd.f32 %v1966, %v1993
        %v2031 = vadd.f32 %v1967, %v1993
        %v2032 = vadd.f32 %v1968, %v1998
        %v2033 = vadd.f32 %v1969, %v1998
        %v2034 = vadd.f32 %v1970, %v2003
        %v2035 = vadd.f32 %v1971, %v2003
        %v2036 = vadd.f32 %v1972, %v2008
        %v2037 = vadd.f32 %v1973, %v2008
        %v2038 = vadd.f32 %v1974, %v2013
        %v2039 = vadd.f32 %v1975, %v2013
        %v2040 = vadd.f32 %v1976, %v2018
        %v2041 = vadd.f32 %v1977, %v2018
        %v2042 = vadd.f32 %v1978, %v2023
        %v2043 = vadd.f32 %v1979, %v2023
        %v2044 = vadd.f32 %v1980, %v2028
        %v2045 = vadd.f32 %v1981, %v2028
        %vm2046 = vcmp.gt.f32.partialorder %v2030, 0.0
        %vm2047 = vcmp.gt.f32.partialorder %v2031, 0.0
        %vm2048 = vcmp.gt.f32.partialorder %v2032, 0.0
        %vm2049 = vcmp.gt.f32.partialorder %v2033, 0.0
        %vm2050 = vcmp.gt.f32.partialorder %v2034, 0.0
        %vm2051 = vcmp.gt.f32.partialorder %v2035, 0.0
        %vm2052 = vcmp.gt.f32.partialorder %v2036, 0.0
        %vm2053 = vcmp.gt.f32.partialorder %v2037, 0.0
        %vm2054 = vcmp.gt.f32.partialorder %v2038, 0.0
        %vm2055 = vcmp.gt.f32.partialorder %v2039, 0.0
        %vm2056 = vcmp.gt.f32.partialorder %v2040, 0.0
        %vm2057 = vcmp.gt.f32.partialorder %v2041, 0.0
        %vm2058 = vcmp.gt.f32.partialorder %v2042, 0.0
        %vm2059 = vcmp.gt.f32.partialorder %v2043, 0.0
        %vm2060 = vcmp.gt.f32.partialorder %v2044, 0.0
        %vm2061 = vcmp.gt.f32.partialorder %v2045, 0.0
        %v2062 = vmul.f32 %v2030, 0.2
        %v2063 = vmul.f32 %v2031, 0.2
        %v2064 = vmul.f32 %v2032, 0.2
        %v2065 = vmul.f32 %v2033, 0.2
        %v2066 = vmul.f32 %v2034, 0.2
        %v2067 = vmul.f32 %v2035, 0.2
        %v2068 = vmul.f32 %v2036, 0.2
        %v2069 = vmul.f32 %v2037, 0.2
        %v2070 = vmul.f32 %v2038, 0.2
        %v2071 = vmul.f32 %v2039, 0.2
        %v2072 = vmul.f32 %v2040, 0.2
        %v2073 = vmul.f32 %v2041, 0.2
        %v2074 = vmul.f32 %v2042, 0.2
        %v2075 = vmul.f32 %v2043, 0.2
        %v2076 = vmul.f32 %v2044, 0.2
        %v2077 = vmul.f32 %v2045, 0.2
        %v2078 = vsel %vm2046, %v2030, %v2062
        %v2079 = vsel %vm2047, %v2031, %v2063
        %v2080 = vsel %vm2048, %v2032, %v2064
        %v2081 = vsel %vm2049, %v2033, %v2065
        %v2082 = vsel %vm2050, %v2034, %v2066
        %v2083 = vsel %vm2051, %v2035, %v2067
        %v2084 = vsel %vm2052, %v2036, %v2068
        %v2085 = vsel %vm2053, %v2037, %v2069
        %v2086 = vsel %vm2054, %v2038, %v2070
        %v2087 = vsel %vm2055, %v2039, %v2071
        %v2088 = vsel %vm2056, %v2040, %v2072
        %v2089 = vsel %vm2057, %v2041, %v2073
        %v2090 = vsel %vm2058, %v2042, %v2074
        %v2091 = vsel %vm2059, %v2043, %v2075
        %v2092 = vsel %vm2060, %v2044, %v2076
        %v2093 = vsel %vm2061, %v2045, %v2077
        %2094 = vrot.lane.b32.xlu0 %v2078, 17
        %v2095 = vpop.permute.xlu0 %2094
        %2096 = vrot.lane.b32.xlu0 %v2080, 17
        %v2097 = vpop.permute.xlu0 %2096
        %2098 = vrot.lane.b32.xlu0 %v2082, 17
        %v2099 = vpop.permute.xlu0 %2098
        %2100 = vrot.lane.b32.xlu0 %v2084, 17
        %v2101 = vpop.permute.xlu0 %2100
        %2102 = vrot.lane.b32.xlu0 %v2086, 17
        %v2103 = vpop.permute.xlu0 %2102
        %2104 = vrot.lane.b32.xlu0 %v2088, 17
        %v2105 = vpop.permute.xlu0 %2104
        %2106 = vrot.lane.b32.xlu0 %v2090, 17
        %v2107 = vpop.permute.xlu0 %2106
        %2108 = vrot.lane.b32.xlu0 %v2092, 17
        %v2109 = vpop.permute.xlu0 %2108
        %2110 = vrot.lane.b32.xlu0 %v2079, 17
        %v2111 = vpop.permute.xlu0 %2110
        %2112 = vrot.lane.b32.xlu0 %v2081, 17
        %v2113 = vpop.permute.xlu0 %2112
        %2114 = vrot.lane.b32.xlu0 %v2083, 17
        %v2115 = vpop.permute.xlu0 %2114
        %2116 = vrot.lane.b32.xlu0 %v2085, 17
        %v2117 = vpop.permute.xlu0 %2116
        %2118 = vrot.lane.b32.xlu0 %v2087, 17
        %v2119 = vpop.permute.xlu0 %2118
        %2120 = vrot.lane.b32.xlu0 %v2089, 17
        %v2121 = vpop.permute.xlu0 %2120
        %2122 = vrot.lane.b32.xlu0 %v2091, 17
        %v2123 = vpop.permute.xlu0 %2122
        %2124 = vrot.lane.b32.xlu0 %v2093, 17
        %v2125 = vpop.permute.xlu0 %2124
        %v2126 = vsel %vm347, %v2095, %v2111
        %v2127 = vsel %vm347, %v2097, %v2113
        %v2128 = vsel %vm347, %v2099, %v2115
        %v2129 = vsel %vm347, %v2101, %v2117
        %v2130 = vsel %vm347, %v2103, %v2119
        %v2131 = vsel %vm347, %v2105, %v2121
        %v2132 = vsel %vm347, %v2107, %v2123
        %v2133 = vsel %vm347, %v2109, %v2125
        %v2134 = vsel %vm347, %v2111, %v2095
        %v2135 = vsel %vm347, %v2113, %v2097
        %v2136 = vsel %vm347, %v2115, %v2099
        %v2137 = vsel %vm347, %v2117, %v2101
        %v2138 = vsel %vm347, %v2119, %v2103
        %v2139 = vsel %vm347, %v2121, %v2105
        %v2140 = vsel %vm347, %v2123, %v2107
        %v2141 = vsel %vm347, %v2125, %v2109
        %v2142 = vsel %vm255, %v2134, 0.0
        %v2143 = vsel %vm256, %v2126, 0.0
        %v2144 = vsel %vm255, %v2135, 0.0
        %v2145 = vsel %vm256, %v2127, 0.0
        %v2146 = vsel %vm255, %v2136, 0.0
        %v2147 = vsel %vm256, %v2128, 0.0
        %v2148 = vsel %vm255, %v2137, 0.0
        %v2149 = vsel %vm256, %v2129, 0.0
        %v2150 = vsel %vm255, %v2138, 0.0
        %v2151 = vsel %vm256, %v2130, 0.0
        %v2152 = vsel %vm255, %v2139, 0.0
        %v2153 = vsel %vm256, %v2131, 0.0
        %v2154 = vsel %vm255, %v2140, 0.0
        %v2155 = vsel %vm256, %v2132, 0.0
        %v2156 = vsel %vm255, %v2141, 0.0
        %v2157 = vsel %vm256, %v2133, 0.0
        %s2158 = scalar_lea.vmem [#allocation5], 576
        %v2159 = vld [vmem:[%s2158] sm:$0xff]
        %v2160 = vld [vmem:[%s2158 + $0x8] sm:$0xff]
        %v2161 = vld [vmem:[%s2158 + $0x10] sm:$0xff]
        %v2162 = vld [vmem:[%s2158 + $0x18] sm:$0xff]
        %v2163 = vld [vmem:[%s2158 + $0x20] sm:$0xff]
        %v2164 = vld [vmem:[%s2158 + $0x28] sm:$0xff]
        %v2165 = vld [vmem:[%s2158 + $0x30] sm:$0xff]
        %v2166 = vld [vmem:[%s2158 + $0x38] sm:$0xff]
        %2167 = vrot.lane.b32.xlu0 %v2078, 16
        %v2168 = vpop.permute.xlu0 %2167
        %2169 = vrot.lane.b32.xlu0 %v2080, 16
        %v2170 = vpop.permute.xlu0 %2169
        %2171 = vrot.lane.b32.xlu0 %v2082, 16
        %v2172 = vpop.permute.xlu0 %2171
        %2173 = vrot.lane.b32.xlu0 %v2084, 16
        %v2174 = vpop.permute.xlu0 %2173
        %2175 = vrot.lane.b32.xlu0 %v2086, 16
        %v2176 = vpop.permute.xlu0 %2175
        %2177 = vrot.lane.b32.xlu0 %v2088, 16
        %v2178 = vpop.permute.xlu0 %2177
        %2179 = vrot.lane.b32.xlu0 %v2090, 16
        %v2180 = vpop.permute.xlu0 %2179
        %2181 = vrot.lane.b32.xlu0 %v2092, 16
        %v2182 = vpop.permute.xlu0 %2181
        %2183 = vrot.lane.b32.xlu0 %v2079, 16
        %v2184 = vpop.permute.xlu0 %2183
        %2185 = vrot.lane.b32.xlu0 %v2081, 16
        %v2186 = vpop.permute.xlu0 %2185
        %2187 = vrot.lane.b32.xlu0 %v2083, 16
        %v2188 = vpop.permute.xlu0 %2187
        %2189 = vrot.lane.b32.xlu0 %v2085, 16
        %v2190 = vpop.permute.xlu0 %2189
        %2191 = vrot.lane.b32.xlu0 %v2087, 16
        %v2192 = vpop.permute.xlu0 %2191
        %2193 = vrot.lane.b32.xlu0 %v2089, 16
        %v2194 = vpop.permute.xlu0 %2193
        %2195 = vrot.lane.b32.xlu0 %v2091, 16
        %v2196 = vpop.permute.xlu0 %2195
        %2197 = vrot.lane.b32.xlu0 %v2093, 16
        %v2198 = vpop.permute.xlu0 %2197
        %v2199 = vsel %vm420, %v2168, %v2184
        %v2200 = vsel %vm420, %v2170, %v2186
        %v2201 = vsel %vm420, %v2172, %v2188
        %v2202 = vsel %vm420, %v2174, %v2190
        %v2203 = vsel %vm420, %v2176, %v2192
        %v2204 = vsel %vm420, %v2178, %v2194
        %v2205 = vsel %vm420, %v2180, %v2196
        %v2206 = vsel %vm420, %v2182, %v2198
        %v2207 = vsel %vm420, %v2184, %v2168
        %v2208 = vsel %vm420, %v2186, %v2170
        %v2209 = vsel %vm420, %v2188, %v2172
        %v2210 = vsel %vm420, %v2190, %v2174
        %v2211 = vsel %vm420, %v2192, %v2176
        %v2212 = vsel %vm420, %v2194, %v2178
        %v2213 = vsel %vm420, %v2196, %v2180
        %v2214 = vsel %vm420, %v2198, %v2182
        %v2215 = vsel %vm251, %v2207, 0.0
        %v2216 = vsel %vm252, %v2199, 0.0
        %v2217 = vsel %vm251, %v2208, 0.0
        %v2218 = vsel %vm252, %v2200, 0.0
        %v2219 = vsel %vm251, %v2209, 0.0
        %v2220 = vsel %vm252, %v2201, 0.0
        %v2221 = vsel %vm251, %v2210, 0.0
        %v2222 = vsel %vm252, %v2202, 0.0
        %v2223 = vsel %vm251, %v2211, 0.0
        %v2224 = vsel %vm252, %v2203, 0.0
        %v2225 = vsel %vm251, %v2212, 0.0
        %v2226 = vsel %vm252, %v2204, 0.0
        %v2227 = vsel %vm251, %v2213, 0.0
        %v2228 = vsel %vm252, %v2205, 0.0
        %v2229 = vsel %vm251, %v2214, 0.0
        %v2230 = vsel %vm252, %v2206, 0.0
        %s2231 = scalar_lea.vmem [#allocation5], 640
        %v2232 = vld [vmem:[%s2231] sm:$0xff]
        %v2233 = vld [vmem:[%s2231 + $0x8] sm:$0xff]
        %v2234 = vld [vmem:[%s2231 + $0x10] sm:$0xff]
        %v2235 = vld [vmem:[%s2231 + $0x18] sm:$0xff]
        %v2236 = vld [vmem:[%s2231 + $0x20] sm:$0xff]
        %v2237 = vld [vmem:[%s2231 + $0x28] sm:$0xff]
        %v2238 = vld [vmem:[%s2231 + $0x30] sm:$0xff]
        %v2239 = vld [vmem:[%s2231 + $0x38] sm:$0xff]
        %v2241 = vsel %vm462, %v2232, 0
        %v2244 = vsel %vm462, %v2233, 0
        %v2247 = vsel %vm462, %v2234, 0
        %v2250 = vsel %vm462, %v2235, 0
        %v2253 = vsel %vm462, %v2236, 0
        %v2256 = vsel %vm462, %v2237, 0
        %v2259 = vsel %vm462, %v2238, 0
        %v2262 = vsel %vm462, %v2239, 0
        %2264 = vmatpush.msra.mxu0 0.0
        %2265 = vmatpush.msra.mxu0 0.0
        %2266 = vmatpush.msra.mxu0 0.0
        %2267 = vmatpush.msra.mxu0 0.0
        %2268 = vmatpush.msra.mxu0 0.0
        %2269 = vmatpush.msra.mxu0 0.0
        %2270 = vmatpush.msra.mxu0 0.0
        %2271 = vmatpush.msra.mxu0 0.0
        %2272 = vmatpush.msra.mxu0 %v2229
        %2273 = vmatpush.msra.mxu0 %v2227
        %2274 = vmatpush.msra.mxu0 %v2225
        %2275 = vmatpush.msra.mxu0 %v2223
        %2276 = vmatpush.msra.mxu0 %v2221
        %2277 = vmatpush.msra.mxu0 %v2219
        %2278 = vmatpush.msra.mxu0 %v2217
        %2279 = vmatpush.msra.mxu0 %v2215
        %2280 = vmatmul.f32.gmra.mxu0 %v2241
        %v2281 = vpop.f32.mrf.mxu0
        %v2282 = vadd.f32 0.0, %v2281
        %2283 = vmatmul.f32.gmra.mxu0 %v2244
        %v2284 = vpop.f32.mrf.mxu0
        %v2285 = vadd.f32 0.0, %v2284
        %2286 = vmatmul.f32.gmra.mxu0 %v2247
        %v2287 = vpop.f32.mrf.mxu0
        %v2288 = vadd.f32 0.0, %v2287
        %2289 = vmatmul.f32.gmra.mxu0 %v2250
        %v2290 = vpop.f32.mrf.mxu0
        %v2291 = vadd.f32 0.0, %v2290
        %2292 = vmatmul.f32.gmra.mxu0 %v2253
        %v2293 = vpop.f32.mrf.mxu0
        %v2294 = vadd.f32 0.0, %v2293
        %2295 = vmatmul.f32.gmra.mxu0 %v2256
        %v2296 = vpop.f32.mrf.mxu0
        %v2297 = vadd.f32 0.0, %v2296
        %2298 = vmatmul.f32.gmra.mxu0 %v2259
        %v2299 = vpop.f32.mrf.mxu0
        %v2300 = vadd.f32 0.0, %v2299
        %2301 = vmatmul.f32.gmra.mxu0 %v2262
        %v2302 = vpop.f32.mrf.mxu0
        %v2303 = vadd.f32 0.0, %v2302
        %2304 = vdwg.mxu0
        %2305 = vmatpush.msra.mxu0 0.0
        %2306 = vmatpush.msra.mxu0 0.0
        %2307 = vmatpush.msra.mxu0 0.0
        %2308 = vmatpush.msra.mxu0 0.0
        %2309 = vmatpush.msra.mxu0 0.0
        %2310 = vmatpush.msra.mxu0 0.0
        %2311 = vmatpush.msra.mxu0 0.0
        %2312 = vmatpush.msra.mxu0 0.0
        %2313 = vmatpush.msra.mxu0 %v2230
        %2314 = vmatpush.msra.mxu0 %v2228
        %2315 = vmatpush.msra.mxu0 %v2226
        %2316 = vmatpush.msra.mxu0 %v2224
        %2317 = vmatpush.msra.mxu0 %v2222
        %2318 = vmatpush.msra.mxu0 %v2220
        %2319 = vmatpush.msra.mxu0 %v2218
        %2320 = vmatpush.msra.mxu0 %v2216
        %2321 = vmatmul.f32.gmra.mxu0 %v2241
        %v2322 = vpop.f32.mrf.mxu0
        %v2323 = vadd.f32 0.0, %v2322
        %2324 = vmatmul.f32.gmra.mxu0 %v2244
        %v2325 = vpop.f32.mrf.mxu0
        %v2326 = vadd.f32 0.0, %v2325
        %2327 = vmatmul.f32.gmra.mxu0 %v2247
        %v2328 = vpop.f32.mrf.mxu0
        %v2329 = vadd.f32 0.0, %v2328
        %2330 = vmatmul.f32.gmra.mxu0 %v2250
        %v2331 = vpop.f32.mrf.mxu0
        %v2332 = vadd.f32 0.0, %v2331
        %2333 = vmatmul.f32.gmra.mxu0 %v2253
        %v2334 = vpop.f32.mrf.mxu0
        %v2335 = vadd.f32 0.0, %v2334
        %2336 = vmatmul.f32.gmra.mxu0 %v2256
        %v2337 = vpop.f32.mrf.mxu0
        %v2338 = vadd.f32 0.0, %v2337
        %2339 = vmatmul.f32.gmra.mxu0 %v2259
        %v2340 = vpop.f32.mrf.mxu0
        %v2341 = vadd.f32 0.0, %v2340
        %2342 = vmatmul.f32.gmra.mxu0 %v2262
        %v2343 = vpop.f32.mrf.mxu0
        %v2344 = vadd.f32 0.0, %v2343
        %2345 = vdwg.mxu0
        %v2347 = vsel %vm462, %v2159, 0
        %v2350 = vsel %vm462, %v2160, 0
        %v2353 = vsel %vm462, %v2161, 0
        %v2356 = vsel %vm462, %v2162, 0
        %v2359 = vsel %vm462, %v2163, 0
        %v2362 = vsel %vm462, %v2164, 0
        %v2365 = vsel %vm462, %v2165, 0
        %v2368 = vsel %vm462, %v2166, 0
        %2370 = vmatpush.msra.mxu0 0.0
        %2371 = vmatpush.msra.mxu0 0.0
        %2372 = vmatpush.msra.mxu0 0.0
        %2373 = vmatpush.msra.mxu0 0.0
        %2374 = vmatpush.msra.mxu0 0.0
        %2375 = vmatpush.msra.mxu0 0.0
        %2376 = vmatpush.msra.mxu0 0.0
        %2377 = vmatpush.msra.mxu0 0.0
        %2378 = vmatpush.msra.mxu0 %v2156
        %2379 = vmatpush.msra.mxu0 %v2154
        %2380 = vmatpush.msra.mxu0 %v2152
        %2381 = vmatpush.msra.mxu0 %v2150
        %2382 = vmatpush.msra.mxu0 %v2148
        %2383 = vmatpush.msra.mxu0 %v2146
        %2384 = vmatpush.msra.mxu0 %v2144
        %2385 = vmatpush.msra.mxu0 %v2142
        %2386 = vmatmul.f32.gmra.mxu0 %v2347
        %v2387 = vpop.f32.mrf.mxu0
        %v2388 = vadd.f32 %v2282, %v2387
        %2389 = vmatmul.f32.gmra.mxu0 %v2350
        %v2390 = vpop.f32.mrf.mxu0
        %v2391 = vadd.f32 %v2285, %v2390
        %2392 = vmatmul.f32.gmra.mxu0 %v2353
        %v2393 = vpop.f32.mrf.mxu0
        %v2394 = vadd.f32 %v2288, %v2393
        %2395 = vmatmul.f32.gmra.mxu0 %v2356
        %v2396 = vpop.f32.mrf.mxu0
        %v2397 = vadd.f32 %v2291, %v2396
        %2398 = vmatmul.f32.gmra.mxu0 %v2359
        %v2399 = vpop.f32.mrf.mxu0
        %v2400 = vadd.f32 %v2294, %v2399
        %2401 = vmatmul.f32.gmra.mxu0 %v2362
        %v2402 = vpop.f32.mrf.mxu0
        %v2403 = vadd.f32 %v2297, %v2402
        %2404 = vmatmul.f32.gmra.mxu0 %v2365
        %v2405 = vpop.f32.mrf.mxu0
        %v2406 = vadd.f32 %v2300, %v2405
        %2407 = vmatmul.f32.gmra.mxu0 %v2368
        %v2408 = vpop.f32.mrf.mxu0
        %v2409 = vadd.f32 %v2303, %v2408
        %2410 = vdwg.mxu0
        %2411 = vmatpush.msra.mxu0 0.0
        %2412 = vmatpush.msra.mxu0 0.0
        %2413 = vmatpush.msra.mxu0 0.0
        %2414 = vmatpush.msra.mxu0 0.0
        %2415 = vmatpush.msra.mxu0 0.0
        %2416 = vmatpush.msra.mxu0 0.0
        %2417 = vmatpush.msra.mxu0 0.0
        %2418 = vmatpush.msra.mxu0 0.0
        %2419 = vmatpush.msra.mxu0 %v2157
        %2420 = vmatpush.msra.mxu0 %v2155
        %2421 = vmatpush.msra.mxu0 %v2153
        %2422 = vmatpush.msra.mxu0 %v2151
        %2423 = vmatpush.msra.mxu0 %v2149
        %2424 = vmatpush.msra.mxu0 %v2147
        %2425 = vmatpush.msra.mxu0 %v2145
        %2426 = vmatpush.msra.mxu0 %v2143
        %2427 = vmatmul.f32.gmra.mxu0 %v2347
        %v2428 = vpop.f32.mrf.mxu0
        %v2429 = vadd.f32 %v2323, %v2428
        %2430 = vmatmul.f32.gmra.mxu0 %v2350
        %v2431 = vpop.f32.mrf.mxu0
        %v2432 = vadd.f32 %v2326, %v2431
        %2433 = vmatmul.f32.gmra.mxu0 %v2353
        %v2434 = vpop.f32.mrf.mxu0
        %v2435 = vadd.f32 %v2329, %v2434
        %2436 = vmatmul.f32.gmra.mxu0 %v2356
        %v2437 = vpop.f32.mrf.mxu0
        %v2438 = vadd.f32 %v2332, %v2437
        %2439 = vmatmul.f32.gmra.mxu0 %v2359
        %v2440 = vpop.f32.mrf.mxu0
        %v2441 = vadd.f32 %v2335, %v2440
        %2442 = vmatmul.f32.gmra.mxu0 %v2362
        %v2443 = vpop.f32.mrf.mxu0
        %v2444 = vadd.f32 %v2338, %v2443
        %2445 = vmatmul.f32.gmra.mxu0 %v2365
        %v2446 = vpop.f32.mrf.mxu0
        %v2447 = vadd.f32 %v2341, %v2446
        %2448 = vmatmul.f32.gmra.mxu0 %v2368
        %v2449 = vpop.f32.mrf.mxu0
        %v2450 = vadd.f32 %v2344, %v2449
        %2451 = vdwg.mxu0
        %2452 = vrot.lane.b32.xlu0 %v2078, 15
        %v2453 = vpop.permute.xlu0 %2452
        %2454 = vrot.lane.b32.xlu0 %v2080, 15
        %v2455 = vpop.permute.xlu0 %2454
        %2456 = vrot.lane.b32.xlu0 %v2082, 15
        %v2457 = vpop.permute.xlu0 %2456
        %2458 = vrot.lane.b32.xlu0 %v2084, 15
        %v2459 = vpop.permute.xlu0 %2458
        %2460 = vrot.lane.b32.xlu0 %v2086, 15
        %v2461 = vpop.permute.xlu0 %2460
        %2462 = vrot.lane.b32.xlu0 %v2088, 15
        %v2463 = vpop.permute.xlu0 %2462
        %2464 = vrot.lane.b32.xlu0 %v2090, 15
        %v2465 = vpop.permute.xlu0 %2464
        %2466 = vrot.lane.b32.xlu0 %v2092, 15
        %v2467 = vpop.permute.xlu0 %2466
        %2468 = vrot.lane.b32.xlu0 %v2079, 15
        %v2469 = vpop.permute.xlu0 %2468
        %2470 = vrot.lane.b32.xlu0 %v2081, 15
        %v2471 = vpop.permute.xlu0 %2470
        %2472 = vrot.lane.b32.xlu0 %v2083, 15
        %v2473 = vpop.permute.xlu0 %2472
        %2474 = vrot.lane.b32.xlu0 %v2085, 15
        %v2475 = vpop.permute.xlu0 %2474
        %2476 = vrot.lane.b32.xlu0 %v2087, 15
        %v2477 = vpop.permute.xlu0 %2476
        %2478 = vrot.lane.b32.xlu0 %v2089, 15
        %v2479 = vpop.permute.xlu0 %2478
        %2480 = vrot.lane.b32.xlu0 %v2091, 15
        %v2481 = vpop.permute.xlu0 %2480
        %2482 = vrot.lane.b32.xlu0 %v2093, 15
        %v2483 = vpop.permute.xlu0 %2482
        %v2484 = vsel %vm707, %v2453, %v2469
        %v2485 = vsel %vm707, %v2455, %v2471
        %v2486 = vsel %vm707, %v2457, %v2473
        %v2487 = vsel %vm707, %v2459, %v2475
        %v2488 = vsel %vm707, %v2461, %v2477
        %v2489 = vsel %vm707, %v2463, %v2479
        %v2490 = vsel %vm707, %v2465, %v2481
        %v2491 = vsel %vm707, %v2467, %v2483
        %v2492 = vsel %vm707, %v2469, %v2453
        %v2493 = vsel %vm707, %v2471, %v2455
        %v2494 = vsel %vm707, %v2473, %v2457
        %v2495 = vsel %vm707, %v2475, %v2459
        %v2496 = vsel %vm707, %v2477, %v2461
        %v2497 = vsel %vm707, %v2479, %v2463
        %v2498 = vsel %vm707, %v2481, %v2465
        %v2499 = vsel %vm707, %v2483, %v2467
        %v2500 = vsel %vm259, %v2492, 0.0
        %v2501 = vsel %vm260, %v2484, 0.0
        %v2502 = vsel %vm259, %v2493, 0.0
        %v2503 = vsel %vm260, %v2485, 0.0
        %v2504 = vsel %vm259, %v2494, 0.0
        %v2505 = vsel %vm260, %v2486, 0.0
        %v2506 = vsel %vm259, %v2495, 0.0
        %v2507 = vsel %vm260, %v2487, 0.0
        %v2508 = vsel %vm259, %v2496, 0.0
        %v2509 = vsel %vm260, %v2488, 0.0
        %v2510 = vsel %vm259, %v2497, 0.0
        %v2511 = vsel %vm260, %v2489, 0.0
        %v2512 = vsel %vm259, %v2498, 0.0
        %v2513 = vsel %vm260, %v2490, 0.0
        %v2514 = vsel %vm259, %v2499, 0.0
        %v2515 = vsel %vm260, %v2491, 0.0
        %s2516 = scalar_lea.vmem [#allocation5], 704
        %v2517 = vld [vmem:[%s2516] sm:$0xff]
        %v2518 = vld [vmem:[%s2516 + $0x8] sm:$0xff]
        %v2519 = vld [vmem:[%s2516 + $0x10] sm:$0xff]
        %v2520 = vld [vmem:[%s2516 + $0x18] sm:$0xff]
        %v2521 = vld [vmem:[%s2516 + $0x20] sm:$0xff]
        %v2522 = vld [vmem:[%s2516 + $0x28] sm:$0xff]
        %v2523 = vld [vmem:[%s2516 + $0x30] sm:$0xff]
        %v2524 = vld [vmem:[%s2516 + $0x38] sm:$0xff]
        %v2526 = vsel %vm462, %v2517, 0
        %v2529 = vsel %vm462, %v2518, 0
        %v2532 = vsel %vm462, %v2519, 0
        %v2535 = vsel %vm462, %v2520, 0
        %v2538 = vsel %vm462, %v2521, 0
        %v2541 = vsel %vm462, %v2522, 0
        %v2544 = vsel %vm462, %v2523, 0
        %v2547 = vsel %vm462, %v2524, 0
        %2549 = vmatpush.msra.mxu0 0.0
        %2550 = vmatpush.msra.mxu0 0.0
        %2551 = vmatpush.msra.mxu0 0.0
        %2552 = vmatpush.msra.mxu0 0.0
        %2553 = vmatpush.msra.mxu0 0.0
        %2554 = vmatpush.msra.mxu0 0.0
        %2555 = vmatpush.msra.mxu0 0.0
        %2556 = vmatpush.msra.mxu0 0.0
        %2557 = vmatpush.msra.mxu0 %v2514
        %2558 = vmatpush.msra.mxu0 %v2512
        %2559 = vmatpush.msra.mxu0 %v2510
        %2560 = vmatpush.msra.mxu0 %v2508
        %2561 = vmatpush.msra.mxu0 %v2506
        %2562 = vmatpush.msra.mxu0 %v2504
        %2563 = vmatpush.msra.mxu0 %v2502
        %2564 = vmatpush.msra.mxu0 %v2500
        %2565 = vmatmul.f32.gmra.mxu0 %v2526
        %v2566 = vpop.f32.mrf.mxu0
        %v2567 = vadd.f32 0.0, %v2566
        %2568 = vmatmul.f32.gmra.mxu0 %v2529
        %v2569 = vpop.f32.mrf.mxu0
        %v2570 = vadd.f32 0.0, %v2569
        %2571 = vmatmul.f32.gmra.mxu0 %v2532
        %v2572 = vpop.f32.mrf.mxu0
        %v2573 = vadd.f32 0.0, %v2572
        %2574 = vmatmul.f32.gmra.mxu0 %v2535
        %v2575 = vpop.f32.mrf.mxu0
        %v2576 = vadd.f32 0.0, %v2575
        %2577 = vmatmul.f32.gmra.mxu0 %v2538
        %v2578 = vpop.f32.mrf.mxu0
        %v2579 = vadd.f32 0.0, %v2578
        %2580 = vmatmul.f32.gmra.mxu0 %v2541
        %v2581 = vpop.f32.mrf.mxu0
        %v2582 = vadd.f32 0.0, %v2581
        %2583 = vmatmul.f32.gmra.mxu0 %v2544
        %v2584 = vpop.f32.mrf.mxu0
        %v2585 = vadd.f32 0.0, %v2584
        %2586 = vmatmul.f32.gmra.mxu0 %v2547
        %v2587 = vpop.f32.mrf.mxu0
        %v2588 = vadd.f32 0.0, %v2587
        %2589 = vdwg.mxu0
        %2590 = vmatpush.msra.mxu0 0.0
        %2591 = vmatpush.msra.mxu0 0.0
        %2592 = vmatpush.msra.mxu0 0.0
        %2593 = vmatpush.msra.mxu0 0.0
        %2594 = vmatpush.msra.mxu0 0.0
        %2595 = vmatpush.msra.mxu0 0.0
        %2596 = vmatpush.msra.mxu0 0.0
        %2597 = vmatpush.msra.mxu0 0.0
        %2598 = vmatpush.msra.mxu0 %v2515
        %2599 = vmatpush.msra.mxu0 %v2513
        %2600 = vmatpush.msra.mxu0 %v2511
        %2601 = vmatpush.msra.mxu0 %v2509
        %2602 = vmatpush.msra.mxu0 %v2507
        %2603 = vmatpush.msra.mxu0 %v2505
        %2604 = vmatpush.msra.mxu0 %v2503
        %2605 = vmatpush.msra.mxu0 %v2501
        %2606 = vmatmul.f32.gmra.mxu0 %v2526
        %v2607 = vpop.f32.mrf.mxu0
        %v2608 = vadd.f32 0.0, %v2607
        %2609 = vmatmul.f32.gmra.mxu0 %v2529
        %v2610 = vpop.f32.mrf.mxu0
        %v2611 = vadd.f32 0.0, %v2610
        %2612 = vmatmul.f32.gmra.mxu0 %v2532
        %v2613 = vpop.f32.mrf.mxu0
        %v2614 = vadd.f32 0.0, %v2613
        %2615 = vmatmul.f32.gmra.mxu0 %v2535
        %v2616 = vpop.f32.mrf.mxu0
        %v2617 = vadd.f32 0.0, %v2616
        %2618 = vmatmul.f32.gmra.mxu0 %v2538
        %v2619 = vpop.f32.mrf.mxu0
        %v2620 = vadd.f32 0.0, %v2619
        %2621 = vmatmul.f32.gmra.mxu0 %v2541
        %v2622 = vpop.f32.mrf.mxu0
        %v2623 = vadd.f32 0.0, %v2622
        %2624 = vmatmul.f32.gmra.mxu0 %v2544
        %v2625 = vpop.f32.mrf.mxu0
        %v2626 = vadd.f32 0.0, %v2625
        %2627 = vmatmul.f32.gmra.mxu0 %v2547
        %v2628 = vpop.f32.mrf.mxu0
        %v2629 = vadd.f32 0.0, %v2628
        %2630 = vdwg.mxu0
        %v2631 = vadd.f32 %v2388, %v2567
        %v2632 = vadd.f32 %v2429, %v2608
        %v2633 = vadd.f32 %v2391, %v2570
        %v2634 = vadd.f32 %v2432, %v2611
        %v2635 = vadd.f32 %v2394, %v2573
        %v2636 = vadd.f32 %v2435, %v2614
        %v2637 = vadd.f32 %v2397, %v2576
        %v2638 = vadd.f32 %v2438, %v2617
        %v2639 = vadd.f32 %v2400, %v2579
        %v2640 = vadd.f32 %v2441, %v2620
        %v2641 = vadd.f32 %v2403, %v2582
        %v2642 = vadd.f32 %v2444, %v2623
        %v2643 = vadd.f32 %v2406, %v2585
        %v2644 = vadd.f32 %v2447, %v2626
        %v2645 = vadd.f32 %v2409, %v2588
        %v2646 = vadd.f32 %v2450, %v2629
        %2647 = vrot.lane.b32.xlu0 %v2078, 1
        %v2648 = vpop.permute.xlu0 %2647
        %2649 = vrot.lane.b32.xlu0 %v2080, 1
        %v2650 = vpop.permute.xlu0 %2649
        %2651 = vrot.lane.b32.xlu0 %v2082, 1
        %v2652 = vpop.permute.xlu0 %2651
        %2653 = vrot.lane.b32.xlu0 %v2084, 1
        %v2654 = vpop.permute.xlu0 %2653
        %2655 = vrot.lane.b32.xlu0 %v2086, 1
        %v2656 = vpop.permute.xlu0 %2655
        %2657 = vrot.lane.b32.xlu0 %v2088, 1
        %v2658 = vpop.permute.xlu0 %2657
        %2659 = vrot.lane.b32.xlu0 %v2090, 1
        %v2660 = vpop.permute.xlu0 %2659
        %2661 = vrot.lane.b32.xlu0 %v2092, 1
        %v2662 = vpop.permute.xlu0 %2661
        %2663 = vrot.lane.b32.xlu0 %v2079, 1
        %v2664 = vpop.permute.xlu0 %2663
        %2665 = vrot.lane.b32.xlu0 %v2081, 1
        %v2666 = vpop.permute.xlu0 %2665
        %2667 = vrot.lane.b32.xlu0 %v2083, 1
        %v2668 = vpop.permute.xlu0 %2667
        %2669 = vrot.lane.b32.xlu0 %v2085, 1
        %v2670 = vpop.permute.xlu0 %2669
        %2671 = vrot.lane.b32.xlu0 %v2087, 1
        %v2672 = vpop.permute.xlu0 %2671
        %2673 = vrot.lane.b32.xlu0 %v2089, 1
        %v2674 = vpop.permute.xlu0 %2673
        %2675 = vrot.lane.b32.xlu0 %v2091, 1
        %v2676 = vpop.permute.xlu0 %2675
        %2677 = vrot.lane.b32.xlu0 %v2093, 1
        %v2678 = vpop.permute.xlu0 %2677
        %v2679 = vsel %vm903, %v2648, %v2664
        %v2680 = vsel %vm903, %v2650, %v2666
        %v2681 = vsel %vm903, %v2652, %v2668
        %v2682 = vsel %vm903, %v2654, %v2670
        %v2683 = vsel %vm903, %v2656, %v2672
        %v2684 = vsel %vm903, %v2658, %v2674
        %v2685 = vsel %vm903, %v2660, %v2676
        %v2686 = vsel %vm903, %v2662, %v2678
        %v2687 = vsel %vm903, %v2664, %v2648
        %v2688 = vsel %vm903, %v2666, %v2650
        %v2689 = vsel %vm903, %v2668, %v2652
        %v2690 = vsel %vm903, %v2670, %v2654
        %v2691 = vsel %vm903, %v2672, %v2656
        %v2692 = vsel %vm903, %v2674, %v2658
        %v2693 = vsel %vm903, %v2676, %v2660
        %v2694 = vsel %vm903, %v2678, %v2662
        %v2695 = vsel %vm253, %v2687, 0.0
        %v2696 = vsel %vm254, %v2679, 0.0
        %v2697 = vsel %vm253, %v2688, 0.0
        %v2698 = vsel %vm254, %v2680, 0.0
        %v2699 = vsel %vm253, %v2689, 0.0
        %v2700 = vsel %vm254, %v2681, 0.0
        %v2701 = vsel %vm253, %v2690, 0.0
        %v2702 = vsel %vm254, %v2682, 0.0
        %v2703 = vsel %vm253, %v2691, 0.0
        %v2704 = vsel %vm254, %v2683, 0.0
        %v2705 = vsel %vm253, %v2692, 0.0
        %v2706 = vsel %vm254, %v2684, 0.0
        %v2707 = vsel %vm253, %v2693, 0.0
        %v2708 = vsel %vm254, %v2685, 0.0
        %v2709 = vsel %vm253, %v2694, 0.0
        %v2710 = vsel %vm254, %v2686, 0.0
        %s2711 = scalar_lea.vmem [#allocation5], 768
        %v2712 = vld [vmem:[%s2711] sm:$0xff]
        %v2713 = vld [vmem:[%s2711 + $0x8] sm:$0xff]
        %v2714 = vld [vmem:[%s2711 + $0x10] sm:$0xff]
        %v2715 = vld [vmem:[%s2711 + $0x18] sm:$0xff]
        %v2716 = vld [vmem:[%s2711 + $0x20] sm:$0xff]
        %v2717 = vld [vmem:[%s2711 + $0x28] sm:$0xff]
        %v2718 = vld [vmem:[%s2711 + $0x30] sm:$0xff]
        %v2719 = vld [vmem:[%s2711 + $0x38] sm:$0xff]
        %v2721 = vsel %vm462, %v2712, 0
        %v2724 = vsel %vm462, %v2713, 0
        %v2727 = vsel %vm462, %v2714, 0
        %v2730 = vsel %vm462, %v2715, 0
        %v2733 = vsel %vm462, %v2716, 0
        %v2736 = vsel %vm462, %v2717, 0
        %v2739 = vsel %vm462, %v2718, 0
        %v2742 = vsel %vm462, %v2719, 0
        %2744 = vmatpush.msra.mxu0 0.0
        %2745 = vmatpush.msra.mxu0 0.0
        %2746 = vmatpush.msra.mxu0 0.0
        %2747 = vmatpush.msra.mxu0 0.0
        %2748 = vmatpush.msra.mxu0 0.0
        %2749 = vmatpush.msra.mxu0 0.0
        %2750 = vmatpush.msra.mxu0 0.0
        %2751 = vmatpush.msra.mxu0 0.0
        %2752 = vmatpush.msra.mxu0 %v2709
        %2753 = vmatpush.msra.mxu0 %v2707
        %2754 = vmatpush.msra.mxu0 %v2705
        %2755 = vmatpush.msra.mxu0 %v2703
        %2756 = vmatpush.msra.mxu0 %v2701
        %2757 = vmatpush.msra.mxu0 %v2699
        %2758 = vmatpush.msra.mxu0 %v2697
        %2759 = vmatpush.msra.mxu0 %v2695
        %2760 = vmatmul.f32.gmra.mxu0 %v2721
        %v2761 = vpop.f32.mrf.mxu0
        %v2762 = vadd.f32 0.0, %v2761
        %2763 = vmatmul.f32.gmra.mxu0 %v2724
        %v2764 = vpop.f32.mrf.mxu0
        %v2765 = vadd.f32 0.0, %v2764
        %2766 = vmatmul.f32.gmra.mxu0 %v2727
        %v2767 = vpop.f32.mrf.mxu0
        %v2768 = vadd.f32 0.0, %v2767
        %2769 = vmatmul.f32.gmra.mxu0 %v2730
        %v2770 = vpop.f32.mrf.mxu0
        %v2771 = vadd.f32 0.0, %v2770
        %2772 = vmatmul.f32.gmra.mxu0 %v2733
        %v2773 = vpop.f32.mrf.mxu0
        %v2774 = vadd.f32 0.0, %v2773
        %2775 = vmatmul.f32.gmra.mxu0 %v2736
        %v2776 = vpop.f32.mrf.mxu0
        %v2777 = vadd.f32 0.0, %v2776
        %2778 = vmatmul.f32.gmra.mxu0 %v2739
        %v2779 = vpop.f32.mrf.mxu0
        %v2780 = vadd.f32 0.0, %v2779
        %2781 = vmatmul.f32.gmra.mxu0 %v2742
        %v2782 = vpop.f32.mrf.mxu0
        %v2783 = vadd.f32 0.0, %v2782
        %2784 = vdwg.mxu0
        %2785 = vmatpush.msra.mxu0 0.0
        %2786 = vmatpush.msra.mxu0 0.0
        %2787 = vmatpush.msra.mxu0 0.0
        %2788 = vmatpush.msra.mxu0 0.0
        %2789 = vmatpush.msra.mxu0 0.0
        %2790 = vmatpush.msra.mxu0 0.0
        %2791 = vmatpush.msra.mxu0 0.0
        %2792 = vmatpush.msra.mxu0 0.0
        %2793 = vmatpush.msra.mxu0 %v2710
        %2794 = vmatpush.msra.mxu0 %v2708
        %2795 = vmatpush.msra.mxu0 %v2706
        %2796 = vmatpush.msra.mxu0 %v2704
        %2797 = vmatpush.msra.mxu0 %v2702
        %2798 = vmatpush.msra.mxu0 %v2700
        %2799 = vmatpush.msra.mxu0 %v2698
        %2800 = vmatpush.msra.mxu0 %v2696
        %2801 = vmatmul.f32.gmra.mxu0 %v2721
        %v2802 = vpop.f32.mrf.mxu0
        %v2803 = vadd.f32 0.0, %v2802
        %2804 = vmatmul.f32.gmra.mxu0 %v2724
        %v2805 = vpop.f32.mrf.mxu0
        %v2806 = vadd.f32 0.0, %v2805
        %2807 = vmatmul.f32.gmra.mxu0 %v2727
        %v2808 = vpop.f32.mrf.mxu0
        %v2809 = vadd.f32 0.0, %v2808
        %2810 = vmatmul.f32.gmra.mxu0 %v2730
        %v2811 = vpop.f32.mrf.mxu0
        %v2812 = vadd.f32 0.0, %v2811
        %2813 = vmatmul.f32.gmra.mxu0 %v2733
        %v2814 = vpop.f32.mrf.mxu0
        %v2815 = vadd.f32 0.0, %v2814
        %2816 = vmatmul.f32.gmra.mxu0 %v2736
        %v2817 = vpop.f32.mrf.mxu0
        %v2818 = vadd.f32 0.0, %v2817
        %2819 = vmatmul.f32.gmra.mxu0 %v2739
        %v2820 = vpop.f32.mrf.mxu0
        %v2821 = vadd.f32 0.0, %v2820
        %2822 = vmatmul.f32.gmra.mxu0 %v2742
        %v2823 = vpop.f32.mrf.mxu0
        %v2824 = vadd.f32 0.0, %v2823
        %2825 = vdwg.mxu0
        %v2826 = vadd.f32 %v2631, %v2762
        %v2827 = vadd.f32 %v2632, %v2803
        %v2828 = vadd.f32 %v2633, %v2765
        %v2829 = vadd.f32 %v2634, %v2806
        %v2830 = vadd.f32 %v2635, %v2768
        %v2831 = vadd.f32 %v2636, %v2809
        %v2832 = vadd.f32 %v2637, %v2771
        %v2833 = vadd.f32 %v2638, %v2812
        %v2834 = vadd.f32 %v2639, %v2774
        %v2835 = vadd.f32 %v2640, %v2815
        %v2836 = vadd.f32 %v2641, %v2777
        %v2837 = vadd.f32 %v2642, %v2818
        %v2838 = vadd.f32 %v2643, %v2780
        %v2839 = vadd.f32 %v2644, %v2821
        %v2840 = vadd.f32 %v2645, %v2783
        %v2841 = vadd.f32 %v2646, %v2824
        %s2842 = scalar_lea.vmem [#allocation5], 832
        %v2843 = vld [vmem:[%s2842] sm:$0xff]
        %v2844 = vld [vmem:[%s2842 + $0x8] sm:$0xff]
        %v2845 = vld [vmem:[%s2842 + $0x10] sm:$0xff]
        %v2846 = vld [vmem:[%s2842 + $0x18] sm:$0xff]
        %v2847 = vld [vmem:[%s2842 + $0x20] sm:$0xff]
        %v2848 = vld [vmem:[%s2842 + $0x28] sm:$0xff]
        %v2849 = vld [vmem:[%s2842 + $0x30] sm:$0xff]
        %v2850 = vld [vmem:[%s2842 + $0x38] sm:$0xff]
        %v2852 = vsel %vm462, %v2843, 0
        %v2855 = vsel %vm462, %v2844, 0
        %v2858 = vsel %vm462, %v2845, 0
        %v2861 = vsel %vm462, %v2846, 0
        %v2864 = vsel %vm462, %v2847, 0
        %v2867 = vsel %vm462, %v2848, 0
        %v2870 = vsel %vm462, %v2849, 0
        %v2873 = vsel %vm462, %v2850, 0
        %2875 = vmatpush.msra.mxu0 0.0
        %2876 = vmatpush.msra.mxu0 0.0
        %2877 = vmatpush.msra.mxu0 0.0
        %2878 = vmatpush.msra.mxu0 0.0
        %2879 = vmatpush.msra.mxu0 0.0
        %2880 = vmatpush.msra.mxu0 0.0
        %2881 = vmatpush.msra.mxu0 0.0
        %2882 = vmatpush.msra.mxu0 0.0
        %2883 = vmatpush.msra.mxu0 %v2092
        %2884 = vmatpush.msra.mxu0 %v2090
        %2885 = vmatpush.msra.mxu0 %v2088
        %2886 = vmatpush.msra.mxu0 %v2086
        %2887 = vmatpush.msra.mxu0 %v2084
        %2888 = vmatpush.msra.mxu0 %v2082
        %2889 = vmatpush.msra.mxu0 %v2080
        %2890 = vmatpush.msra.mxu0 %v2078
        %2891 = vmatmul.f32.gmra.mxu0 %v2852
        %v2892 = vpop.f32.mrf.mxu0
        %v2893 = vadd.f32 0.0, %v2892
        %2894 = vmatmul.f32.gmra.mxu0 %v2855
        %v2895 = vpop.f32.mrf.mxu0
        %v2896 = vadd.f32 0.0, %v2895
        %2897 = vmatmul.f32.gmra.mxu0 %v2858
        %v2898 = vpop.f32.mrf.mxu0
        %v2899 = vadd.f32 0.0, %v2898
        %2900 = vmatmul.f32.gmra.mxu0 %v2861
        %v2901 = vpop.f32.mrf.mxu0
        %v2902 = vadd.f32 0.0, %v2901
        %2903 = vmatmul.f32.gmra.mxu0 %v2864
        %v2904 = vpop.f32.mrf.mxu0
        %v2905 = vadd.f32 0.0, %v2904
        %2906 = vmatmul.f32.gmra.mxu0 %v2867
        %v2907 = vpop.f32.mrf.mxu0
        %v2908 = vadd.f32 0.0, %v2907
        %2909 = vmatmul.f32.gmra.mxu0 %v2870
        %v2910 = vpop.f32.mrf.mxu0
        %v2911 = vadd.f32 0.0, %v2910
        %2912 = vmatmul.f32.gmra.mxu0 %v2873
        %v2913 = vpop.f32.mrf.mxu0
        %v2914 = vadd.f32 0.0, %v2913
        %2915 = vdwg.mxu0
        %2916 = vmatpush.msra.mxu0 0.0
        %2917 = vmatpush.msra.mxu0 0.0
        %2918 = vmatpush.msra.mxu0 0.0
        %2919 = vmatpush.msra.mxu0 0.0
        %2920 = vmatpush.msra.mxu0 0.0
        %2921 = vmatpush.msra.mxu0 0.0
        %2922 = vmatpush.msra.mxu0 0.0
        %2923 = vmatpush.msra.mxu0 0.0
        %2924 = vmatpush.msra.mxu0 %v2093
        %2925 = vmatpush.msra.mxu0 %v2091
        %2926 = vmatpush.msra.mxu0 %v2089
        %2927 = vmatpush.msra.mxu0 %v2087
        %2928 = vmatpush.msra.mxu0 %v2085
        %2929 = vmatpush.msra.mxu0 %v2083
        %2930 = vmatpush.msra.mxu0 %v2081
        %2931 = vmatpush.msra.mxu0 %v2079
        %2932 = vmatmul.f32.gmra.mxu0 %v2852
        %v2933 = vpop.f32.mrf.mxu0
        %v2934 = vadd.f32 0.0, %v2933
        %2935 = vmatmul.f32.gmra.mxu0 %v2855
        %v2936 = vpop.f32.mrf.mxu0
        %v2937 = vadd.f32 0.0, %v2936
        %2938 = vmatmul.f32.gmra.mxu0 %v2858
        %v2939 = vpop.f32.mrf.mxu0
        %v2940 = vadd.f32 0.0, %v2939
        %2941 = vmatmul.f32.gmra.mxu0 %v2861
        %v2942 = vpop.f32.mrf.mxu0
        %v2943 = vadd.f32 0.0, %v2942
        %2944 = vmatmul.f32.gmra.mxu0 %v2864
        %v2945 = vpop.f32.mrf.mxu0
        %v2946 = vadd.f32 0.0, %v2945
        %2947 = vmatmul.f32.gmra.mxu0 %v2867
        %v2948 = vpop.f32.mrf.mxu0
        %v2949 = vadd.f32 0.0, %v2948
        %2950 = vmatmul.f32.gmra.mxu0 %v2870
        %v2951 = vpop.f32.mrf.mxu0
        %v2952 = vadd.f32 0.0, %v2951
        %2953 = vmatmul.f32.gmra.mxu0 %v2873
        %v2954 = vpop.f32.mrf.mxu0
        %v2955 = vadd.f32 0.0, %v2954
        %2956 = vdwg.mxu0
        %v2957 = vadd.f32 %v2826, %v2893
        %v2958 = vadd.f32 %v2827, %v2934
        %v2959 = vadd.f32 %v2828, %v2896
        %v2960 = vadd.f32 %v2829, %v2937
        %v2961 = vadd.f32 %v2830, %v2899
        %v2962 = vadd.f32 %v2831, %v2940
        %v2963 = vadd.f32 %v2832, %v2902
        %v2964 = vadd.f32 %v2833, %v2943
        %v2965 = vadd.f32 %v2834, %v2905
        %v2966 = vadd.f32 %v2835, %v2946
        %v2967 = vadd.f32 %v2836, %v2908
        %v2968 = vadd.f32 %v2837, %v2949
        %v2969 = vadd.f32 %v2838, %v2911
        %v2970 = vadd.f32 %v2839, %v2952
        %v2971 = vadd.f32 %v2840, %v2914
        %v2972 = vadd.f32 %v2841, %v2955
        %2973 = vrot.lane.b32.xlu0 %v2078, 127
        %v2974 = vpop.permute.xlu0 %2973
        %2975 = vrot.lane.b32.xlu0 %v2080, 127
        %v2976 = vpop.permute.xlu0 %2975
        %2977 = vrot.lane.b32.xlu0 %v2082, 127
        %v2978 = vpop.permute.xlu0 %2977
        %2979 = vrot.lane.b32.xlu0 %v2084, 127
        %v2980 = vpop.permute.xlu0 %2979
        %2981 = vrot.lane.b32.xlu0 %v2086, 127
        %v2982 = vpop.permute.xlu0 %2981
        %2983 = vrot.lane.b32.xlu0 %v2088, 127
        %v2984 = vpop.permute.xlu0 %2983
        %2985 = vrot.lane.b32.xlu0 %v2090, 127
        %v2986 = vpop.permute.xlu0 %2985
        %2987 = vrot.lane.b32.xlu0 %v2092, 127
        %v2988 = vpop.permute.xlu0 %2987
        %2989 = vrot.lane.b32.xlu0 %v2079, 127
        %v2990 = vpop.permute.xlu0 %2989
        %2991 = vrot.lane.b32.xlu0 %v2081, 127
        %v2992 = vpop.permute.xlu0 %2991
        %2993 = vrot.lane.b32.xlu0 %v2083, 127
        %v2994 = vpop.permute.xlu0 %2993
        %2995 = vrot.lane.b32.xlu0 %v2085, 127
        %v2996 = vpop.permute.xlu0 %2995
        %2997 = vrot.lane.b32.xlu0 %v2087, 127
        %v2998 = vpop.permute.xlu0 %2997
        %2999 = vrot.lane.b32.xlu0 %v2089, 127
        %v3000 = vpop.permute.xlu0 %2999
        %3001 = vrot.lane.b32.xlu0 %v2091, 127
        %v3002 = vpop.permute.xlu0 %3001
        %3003 = vrot.lane.b32.xlu0 %v2093, 127
        %v3004 = vpop.permute.xlu0 %3003
        %v3005 = vsel %vm1230, %v2974, %v2990
        %v3006 = vsel %vm1230, %v2976, %v2992
        %v3007 = vsel %vm1230, %v2978, %v2994
        %v3008 = vsel %vm1230, %v2980, %v2996
        %v3009 = vsel %vm1230, %v2982, %v2998
        %v3010 = vsel %vm1230, %v2984, %v3000
        %v3011 = vsel %vm1230, %v2986, %v3002
        %v3012 = vsel %vm1230, %v2988, %v3004
        %v3013 = vsel %vm1230, %v2990, %v2974
        %v3014 = vsel %vm1230, %v2992, %v2976
        %v3015 = vsel %vm1230, %v2994, %v2978
        %v3016 = vsel %vm1230, %v2996, %v2980
        %v3017 = vsel %vm1230, %v2998, %v2982
        %v3018 = vsel %vm1230, %v3000, %v2984
        %v3019 = vsel %vm1230, %v3002, %v2986
        %v3020 = vsel %vm1230, %v3004, %v2988
        %v3021 = vsel %vm257, %v3005, 0.0
        %v3022 = vsel %vm258, %v3013, 0.0
        %v3023 = vsel %vm257, %v3006, 0.0
        %v3024 = vsel %vm258, %v3014, 0.0
        %v3025 = vsel %vm257, %v3007, 0.0
        %v3026 = vsel %vm258, %v3015, 0.0
        %v3027 = vsel %vm257, %v3008, 0.0
        %v3028 = vsel %vm258, %v3016, 0.0
        %v3029 = vsel %vm257, %v3009, 0.0
        %v3030 = vsel %vm258, %v3017, 0.0
        %v3031 = vsel %vm257, %v3010, 0.0
        %v3032 = vsel %vm258, %v3018, 0.0
        %v3033 = vsel %vm257, %v3011, 0.0
        %v3034 = vsel %vm258, %v3019, 0.0
        %v3035 = vsel %vm257, %v3012, 0.0
        %v3036 = vsel %vm258, %v3020, 0.0
        %s3037 = scalar_lea.vmem [#allocation5], 896
        %v3038 = vld [vmem:[%s3037] sm:$0xff]
        %v3039 = vld [vmem:[%s3037 + $0x8] sm:$0xff]
        %v3040 = vld [vmem:[%s3037 + $0x10] sm:$0xff]
        %v3041 = vld [vmem:[%s3037 + $0x18] sm:$0xff]
        %v3042 = vld [vmem:[%s3037 + $0x20] sm:$0xff]
        %v3043 = vld [vmem:[%s3037 + $0x28] sm:$0xff]
        %v3044 = vld [vmem:[%s3037 + $0x30] sm:$0xff]
        %v3045 = vld [vmem:[%s3037 + $0x38] sm:$0xff]
        %v3047 = vsel %vm462, %v3038, 0
        %v3050 = vsel %vm462, %v3039, 0
        %v3053 = vsel %vm462, %v3040, 0
        %v3056 = vsel %vm462, %v3041, 0
        %v3059 = vsel %vm462, %v3042, 0
        %v3062 = vsel %vm462, %v3043, 0
        %v3065 = vsel %vm462, %v3044, 0
        %v3068 = vsel %vm462, %v3045, 0
        %3070 = vmatpush.msra.mxu0 0.0
        %3071 = vmatpush.msra.mxu0 0.0
        %3072 = vmatpush.msra.mxu0 0.0
        %3073 = vmatpush.msra.mxu0 0.0
        %3074 = vmatpush.msra.mxu0 0.0
        %3075 = vmatpush.msra.mxu0 0.0
        %3076 = vmatpush.msra.mxu0 0.0
        %3077 = vmatpush.msra.mxu0 0.0
        %3078 = vmatpush.msra.mxu0 %v3035
        %3079 = vmatpush.msra.mxu0 %v3033
        %3080 = vmatpush.msra.mxu0 %v3031
        %3081 = vmatpush.msra.mxu0 %v3029
        %3082 = vmatpush.msra.mxu0 %v3027
        %3083 = vmatpush.msra.mxu0 %v3025
        %3084 = vmatpush.msra.mxu0 %v3023
        %3085 = vmatpush.msra.mxu0 %v3021
        %3086 = vmatmul.f32.gmra.mxu0 %v3047
        %v3087 = vpop.f32.mrf.mxu0
        %v3088 = vadd.f32 0.0, %v3087
        %3089 = vmatmul.f32.gmra.mxu0 %v3050
        %v3090 = vpop.f32.mrf.mxu0
        %v3091 = vadd.f32 0.0, %v3090
        %3092 = vmatmul.f32.gmra.mxu0 %v3053
        %v3093 = vpop.f32.mrf.mxu0
        %v3094 = vadd.f32 0.0, %v3093
        %3095 = vmatmul.f32.gmra.mxu0 %v3056
        %v3096 = vpop.f32.mrf.mxu0
        %v3097 = vadd.f32 0.0, %v3096
        %3098 = vmatmul.f32.gmra.mxu0 %v3059
        %v3099 = vpop.f32.mrf.mxu0
        %v3100 = vadd.f32 0.0, %v3099
        %3101 = vmatmul.f32.gmra.mxu0 %v3062
        %v3102 = vpop.f32.mrf.mxu0
        %v3103 = vadd.f32 0.0, %v3102
        %3104 = vmatmul.f32.gmra.mxu0 %v3065
        %v3105 = vpop.f32.mrf.mxu0
        %v3106 = vadd.f32 0.0, %v3105
        %3107 = vmatmul.f32.gmra.mxu0 %v3068
        %v3108 = vpop.f32.mrf.mxu0
        %v3109 = vadd.f32 0.0, %v3108
        %3110 = vdwg.mxu0
        %3111 = vmatpush.msra.mxu0 0.0
        %3112 = vmatpush.msra.mxu0 0.0
        %3113 = vmatpush.msra.mxu0 0.0
        %3114 = vmatpush.msra.mxu0 0.0
        %3115 = vmatpush.msra.mxu0 0.0
        %3116 = vmatpush.msra.mxu0 0.0
        %3117 = vmatpush.msra.mxu0 0.0
        %3118 = vmatpush.msra.mxu0 0.0
        %3119 = vmatpush.msra.mxu0 %v3036
        %3120 = vmatpush.msra.mxu0 %v3034
        %3121 = vmatpush.msra.mxu0 %v3032
        %3122 = vmatpush.msra.mxu0 %v3030
        %3123 = vmatpush.msra.mxu0 %v3028
        %3124 = vmatpush.msra.mxu0 %v3026
        %3125 = vmatpush.msra.mxu0 %v3024
        %3126 = vmatpush.msra.mxu0 %v3022
        %3127 = vmatmul.f32.gmra.mxu0 %v3047
        %v3128 = vpop.f32.mrf.mxu0
        %v3129 = vadd.f32 0.0, %v3128
        %3130 = vmatmul.f32.gmra.mxu0 %v3050
        %v3131 = vpop.f32.mrf.mxu0
        %v3132 = vadd.f32 0.0, %v3131
        %3133 = vmatmul.f32.gmra.mxu0 %v3053
        %v3134 = vpop.f32.mrf.mxu0
        %v3135 = vadd.f32 0.0, %v3134
        %3136 = vmatmul.f32.gmra.mxu0 %v3056
        %v3137 = vpop.f32.mrf.mxu0
        %v3138 = vadd.f32 0.0, %v3137
        %3139 = vmatmul.f32.gmra.mxu0 %v3059
        %v3140 = vpop.f32.mrf.mxu0
        %v3141 = vadd.f32 0.0, %v3140
        %3142 = vmatmul.f32.gmra.mxu0 %v3062
        %v3143 = vpop.f32.mrf.mxu0
        %v3144 = vadd.f32 0.0, %v3143
        %3145 = vmatmul.f32.gmra.mxu0 %v3065
        %v3146 = vpop.f32.mrf.mxu0
        %v3147 = vadd.f32 0.0, %v3146
        %3148 = vmatmul.f32.gmra.mxu0 %v3068
        %v3149 = vpop.f32.mrf.mxu0
        %v3150 = vadd.f32 0.0, %v3149
        %3151 = vdwg.mxu0
        %v3152 = vadd.f32 %v2957, %v3088
        %v3153 = vadd.f32 %v2958, %v3129
        %v3154 = vadd.f32 %v2959, %v3091
        %v3155 = vadd.f32 %v2960, %v3132
        %v3156 = vadd.f32 %v2961, %v3094
        %v3157 = vadd.f32 %v2962, %v3135
        %v3158 = vadd.f32 %v2963, %v3097
        %v3159 = vadd.f32 %v2964, %v3138
        %v3160 = vadd.f32 %v2965, %v3100
        %v3161 = vadd.f32 %v2966, %v3141
        %v3162 = vadd.f32 %v2967, %v3103
        %v3163 = vadd.f32 %v2968, %v3144
        %v3164 = vadd.f32 %v2969, %v3106
        %v3165 = vadd.f32 %v2970, %v3147
        %v3166 = vadd.f32 %v2971, %v3109
        %v3167 = vadd.f32 %v2972, %v3150
        %3168 = vrot.lane.b32.xlu0 %v2078, 113
        %v3169 = vpop.permute.xlu0 %3168
        %3170 = vrot.lane.b32.xlu0 %v2080, 113
        %v3171 = vpop.permute.xlu0 %3170
        %3172 = vrot.lane.b32.xlu0 %v2082, 113
        %v3173 = vpop.permute.xlu0 %3172
        %3174 = vrot.lane.b32.xlu0 %v2084, 113
        %v3175 = vpop.permute.xlu0 %3174
        %3176 = vrot.lane.b32.xlu0 %v2086, 113
        %v3177 = vpop.permute.xlu0 %3176
        %3178 = vrot.lane.b32.xlu0 %v2088, 113
        %v3179 = vpop.permute.xlu0 %3178
        %3180 = vrot.lane.b32.xlu0 %v2090, 113
        %v3181 = vpop.permute.xlu0 %3180
        %3182 = vrot.lane.b32.xlu0 %v2092, 113
        %v3183 = vpop.permute.xlu0 %3182
        %3184 = vrot.lane.b32.xlu0 %v2079, 113
        %v3185 = vpop.permute.xlu0 %3184
        %3186 = vrot.lane.b32.xlu0 %v2081, 113
        %v3187 = vpop.permute.xlu0 %3186
        %3188 = vrot.lane.b32.xlu0 %v2083, 113
        %v3189 = vpop.permute.xlu0 %3188
        %3190 = vrot.lane.b32.xlu0 %v2085, 113
        %v3191 = vpop.permute.xlu0 %3190
        %3192 = vrot.lane.b32.xlu0 %v2087, 113
        %v3193 = vpop.permute.xlu0 %3192
        %3194 = vrot.lane.b32.xlu0 %v2089, 113
        %v3195 = vpop.permute.xlu0 %3194
        %3196 = vrot.lane.b32.xlu0 %v2091, 113
        %v3197 = vpop.permute.xlu0 %3196
        %3198 = vrot.lane.b32.xlu0 %v2093, 113
        %v3199 = vpop.permute.xlu0 %3198
        %v3200 = vsel %vm1426, %v3169, %v3185
        %v3201 = vsel %vm1426, %v3171, %v3187
        %v3202 = vsel %vm1426, %v3173, %v3189
        %v3203 = vsel %vm1426, %v3175, %v3191
        %v3204 = vsel %vm1426, %v3177, %v3193
        %v3205 = vsel %vm1426, %v3179, %v3195
        %v3206 = vsel %vm1426, %v3181, %v3197
        %v3207 = vsel %vm1426, %v3183, %v3199
        %v3208 = vsel %vm1426, %v3185, %v3169
        %v3209 = vsel %vm1426, %v3187, %v3171
        %v3210 = vsel %vm1426, %v3189, %v3173
        %v3211 = vsel %vm1426, %v3191, %v3175
        %v3212 = vsel %vm1426, %v3193, %v3177
        %v3213 = vsel %vm1426, %v3195, %v3179
        %v3214 = vsel %vm1426, %v3197, %v3181
        %v3215 = vsel %vm1426, %v3199, %v3183
        %v3216 = vsel %vm263, %v3200, 0.0
        %v3217 = vsel %vm264, %v3208, 0.0
        %v3218 = vsel %vm263, %v3201, 0.0
        %v3219 = vsel %vm264, %v3209, 0.0
        %v3220 = vsel %vm263, %v3202, 0.0
        %v3221 = vsel %vm264, %v3210, 0.0
        %v3222 = vsel %vm263, %v3203, 0.0
        %v3223 = vsel %vm264, %v3211, 0.0
        %v3224 = vsel %vm263, %v3204, 0.0
        %v3225 = vsel %vm264, %v3212, 0.0
        %v3226 = vsel %vm263, %v3205, 0.0
        %v3227 = vsel %vm264, %v3213, 0.0
        %v3228 = vsel %vm263, %v3206, 0.0
        %v3229 = vsel %vm264, %v3214, 0.0
        %v3230 = vsel %vm263, %v3207, 0.0
        %v3231 = vsel %vm264, %v3215, 0.0
        %s3232 = scalar_lea.vmem [#allocation5], 960
        %v3233 = vld [vmem:[%s3232] sm:$0xff]
        %v3234 = vld [vmem:[%s3232 + $0x8] sm:$0xff]
        %v3235 = vld [vmem:[%s3232 + $0x10] sm:$0xff]
        %v3236 = vld [vmem:[%s3232 + $0x18] sm:$0xff]
        %v3237 = vld [vmem:[%s3232 + $0x20] sm:$0xff]
        %v3238 = vld [vmem:[%s3232 + $0x28] sm:$0xff]
        %v3239 = vld [vmem:[%s3232 + $0x30] sm:$0xff]
        %v3240 = vld [vmem:[%s3232 + $0x38] sm:$0xff]
        %v3242 = vsel %vm462, %v3233, 0
        %v3245 = vsel %vm462, %v3234, 0
        %v3248 = vsel %vm462, %v3235, 0
        %v3251 = vsel %vm462, %v3236, 0
        %v3254 = vsel %vm462, %v3237, 0
        %v3257 = vsel %vm462, %v3238, 0
        %v3260 = vsel %vm462, %v3239, 0
        %v3263 = vsel %vm462, %v3240, 0
        %3265 = vmatpush.msra.mxu0 0.0
        %3266 = vmatpush.msra.mxu0 0.0
        %3267 = vmatpush.msra.mxu0 0.0
        %3268 = vmatpush.msra.mxu0 0.0
        %3269 = vmatpush.msra.mxu0 0.0
        %3270 = vmatpush.msra.mxu0 0.0
        %3271 = vmatpush.msra.mxu0 0.0
        %3272 = vmatpush.msra.mxu0 0.0
        %3273 = vmatpush.msra.mxu0 %v3230
        %3274 = vmatpush.msra.mxu0 %v3228
        %3275 = vmatpush.msra.mxu0 %v3226
        %3276 = vmatpush.msra.mxu0 %v3224
        %3277 = vmatpush.msra.mxu0 %v3222
        %3278 = vmatpush.msra.mxu0 %v3220
        %3279 = vmatpush.msra.mxu0 %v3218
        %3280 = vmatpush.msra.mxu0 %v3216
        %3281 = vmatmul.f32.gmra.mxu0 %v3242
        %v3282 = vpop.f32.mrf.mxu0
        %v3283 = vadd.f32 0.0, %v3282
        %3284 = vmatmul.f32.gmra.mxu0 %v3245
        %v3285 = vpop.f32.mrf.mxu0
        %v3286 = vadd.f32 0.0, %v3285
        %3287 = vmatmul.f32.gmra.mxu0 %v3248
        %v3288 = vpop.f32.mrf.mxu0
        %v3289 = vadd.f32 0.0, %v3288
        %3290 = vmatmul.f32.gmra.mxu0 %v3251
        %v3291 = vpop.f32.mrf.mxu0
        %v3292 = vadd.f32 0.0, %v3291
        %3293 = vmatmul.f32.gmra.mxu0 %v3254
        %v3294 = vpop.f32.mrf.mxu0
        %v3295 = vadd.f32 0.0, %v3294
        %3296 = vmatmul.f32.gmra.mxu0 %v3257
        %v3297 = vpop.f32.mrf.mxu0
        %v3298 = vadd.f32 0.0, %v3297
        %3299 = vmatmul.f32.gmra.mxu0 %v3260
        %v3300 = vpop.f32.mrf.mxu0
        %v3301 = vadd.f32 0.0, %v3300
        %3302 = vmatmul.f32.gmra.mxu0 %v3263
        %v3303 = vpop.f32.mrf.mxu0
        %v3304 = vadd.f32 0.0, %v3303
        %3305 = vdwg.mxu0
        %3306 = vmatpush.msra.mxu0 0.0
        %3307 = vmatpush.msra.mxu0 0.0
        %3308 = vmatpush.msra.mxu0 0.0
        %3309 = vmatpush.msra.mxu0 0.0
        %3310 = vmatpush.msra.mxu0 0.0
        %3311 = vmatpush.msra.mxu0 0.0
        %3312 = vmatpush.msra.mxu0 0.0
        %3313 = vmatpush.msra.mxu0 0.0
        %3314 = vmatpush.msra.mxu0 %v3231
        %3315 = vmatpush.msra.mxu0 %v3229
        %3316 = vmatpush.msra.mxu0 %v3227
        %3317 = vmatpush.msra.mxu0 %v3225
        %3318 = vmatpush.msra.mxu0 %v3223
        %3319 = vmatpush.msra.mxu0 %v3221
        %3320 = vmatpush.msra.mxu0 %v3219
        %3321 = vmatpush.msra.mxu0 %v3217
        %3322 = vmatmul.f32.gmra.mxu0 %v3242
        %v3323 = vpop.f32.mrf.mxu0
        %v3324 = vadd.f32 0.0, %v3323
        %3325 = vmatmul.f32.gmra.mxu0 %v3245
        %v3326 = vpop.f32.mrf.mxu0
        %v3327 = vadd.f32 0.0, %v3326
        %3328 = vmatmul.f32.gmra.mxu0 %v3248
        %v3329 = vpop.f32.mrf.mxu0
        %v3330 = vadd.f32 0.0, %v3329
        %3331 = vmatmul.f32.gmra.mxu0 %v3251
        %v3332 = vpop.f32.mrf.mxu0
        %v3333 = vadd.f32 0.0, %v3332
        %3334 = vmatmul.f32.gmra.mxu0 %v3254
        %v3335 = vpop.f32.mrf.mxu0
        %v3336 = vadd.f32 0.0, %v3335
        %3337 = vmatmul.f32.gmra.mxu0 %v3257
        %v3338 = vpop.f32.mrf.mxu0
        %v3339 = vadd.f32 0.0, %v3338
        %3340 = vmatmul.f32.gmra.mxu0 %v3260
        %v3341 = vpop.f32.mrf.mxu0
        %v3342 = vadd.f32 0.0, %v3341
        %3343 = vmatmul.f32.gmra.mxu0 %v3263
        %v3344 = vpop.f32.mrf.mxu0
        %v3345 = vadd.f32 0.0, %v3344
        %3346 = vdwg.mxu0
        %v3347 = vadd.f32 %v3152, %v3283
        %v3348 = vadd.f32 %v3153, %v3324
        %v3349 = vadd.f32 %v3154, %v3286
        %v3350 = vadd.f32 %v3155, %v3327
        %v3351 = vadd.f32 %v3156, %v3289
        %v3352 = vadd.f32 %v3157, %v3330
        %v3353 = vadd.f32 %v3158, %v3292
        %v3354 = vadd.f32 %v3159, %v3333
        %v3355 = vadd.f32 %v3160, %v3295
        %v3356 = vadd.f32 %v3161, %v3336
        %v3357 = vadd.f32 %v3162, %v3298
        %v3358 = vadd.f32 %v3163, %v3339
        %v3359 = vadd.f32 %v3164, %v3301
        %v3360 = vadd.f32 %v3165, %v3342
        %v3361 = vadd.f32 %v3166, %v3304
        %v3362 = vadd.f32 %v3167, %v3345
        %3363 = vrot.lane.b32.xlu0 %v2078, 112
        %v3364 = vpop.permute.xlu0 %3363
        %3365 = vrot.lane.b32.xlu0 %v2080, 112
        %v3366 = vpop.permute.xlu0 %3365
        %3367 = vrot.lane.b32.xlu0 %v2082, 112
        %v3368 = vpop.permute.xlu0 %3367
        %3369 = vrot.lane.b32.xlu0 %v2084, 112
        %v3370 = vpop.permute.xlu0 %3369
        %3371 = vrot.lane.b32.xlu0 %v2086, 112
        %v3372 = vpop.permute.xlu0 %3371
        %3373 = vrot.lane.b32.xlu0 %v2088, 112
        %v3374 = vpop.permute.xlu0 %3373
        %3375 = vrot.lane.b32.xlu0 %v2090, 112
        %v3376 = vpop.permute.xlu0 %3375
        %3377 = vrot.lane.b32.xlu0 %v2092, 112
        %v3378 = vpop.permute.xlu0 %3377
        %3379 = vrot.lane.b32.xlu0 %v2079, 112
        %v3380 = vpop.permute.xlu0 %3379
        %3381 = vrot.lane.b32.xlu0 %v2081, 112
        %v3382 = vpop.permute.xlu0 %3381
        %3383 = vrot.lane.b32.xlu0 %v2083, 112
        %v3384 = vpop.permute.xlu0 %3383
        %3385 = vrot.lane.b32.xlu0 %v2085, 112
        %v3386 = vpop.permute.xlu0 %3385
        %3387 = vrot.lane.b32.xlu0 %v2087, 112
        %v3388 = vpop.permute.xlu0 %3387
        %3389 = vrot.lane.b32.xlu0 %v2089, 112
        %v3390 = vpop.permute.xlu0 %3389
        %3391 = vrot.lane.b32.xlu0 %v2091, 112
        %v3392 = vpop.permute.xlu0 %3391
        %3393 = vrot.lane.b32.xlu0 %v2093, 112
        %v3394 = vpop.permute.xlu0 %3393
        %v3395 = vsel %vm1622, %v3364, %v3380
        %v3396 = vsel %vm1622, %v3366, %v3382
        %v3397 = vsel %vm1622, %v3368, %v3384
        %v3398 = vsel %vm1622, %v3370, %v3386
        %v3399 = vsel %vm1622, %v3372, %v3388
        %v3400 = vsel %vm1622, %v3374, %v3390
        %v3401 = vsel %vm1622, %v3376, %v3392
        %v3402 = vsel %vm1622, %v3378, %v3394
        %v3403 = vsel %vm1622, %v3380, %v3364
        %v3404 = vsel %vm1622, %v3382, %v3366
        %v3405 = vsel %vm1622, %v3384, %v3368
        %v3406 = vsel %vm1622, %v3386, %v3370
        %v3407 = vsel %vm1622, %v3388, %v3372
        %v3408 = vsel %vm1622, %v3390, %v3374
        %v3409 = vsel %vm1622, %v3392, %v3376
        %v3410 = vsel %vm1622, %v3394, %v3378
        %v3411 = vsel %vm261, %v3395, 0.0
        %v3412 = vsel %vm262, %v3403, 0.0
        %v3413 = vsel %vm261, %v3396, 0.0
        %v3414 = vsel %vm262, %v3404, 0.0
        %v3415 = vsel %vm261, %v3397, 0.0
        %v3416 = vsel %vm262, %v3405, 0.0
        %v3417 = vsel %vm261, %v3398, 0.0
        %v3418 = vsel %vm262, %v3406, 0.0
        %v3419 = vsel %vm261, %v3399, 0.0
        %v3420 = vsel %vm262, %v3407, 0.0
        %v3421 = vsel %vm261, %v3400, 0.0
        %v3422 = vsel %vm262, %v3408, 0.0
        %v3423 = vsel %vm261, %v3401, 0.0
        %v3424 = vsel %vm262, %v3409, 0.0
        %v3425 = vsel %vm261, %v3402, 0.0
        %v3426 = vsel %vm262, %v3410, 0.0
        %s3427 = scalar_lea.vmem [#allocation5], 1024
        %v3428 = vld [vmem:[%s3427] sm:$0xff]
        %v3429 = vld [vmem:[%s3427 + $0x8] sm:$0xff]
        %v3430 = vld [vmem:[%s3427 + $0x10] sm:$0xff]
        %v3431 = vld [vmem:[%s3427 + $0x18] sm:$0xff]
        %v3432 = vld [vmem:[%s3427 + $0x20] sm:$0xff]
        %v3433 = vld [vmem:[%s3427 + $0x28] sm:$0xff]
        %v3434 = vld [vmem:[%s3427 + $0x30] sm:$0xff]
        %v3435 = vld [vmem:[%s3427 + $0x38] sm:$0xff]
        %v3437 = vsel %vm462, %v3428, 0
        %v3440 = vsel %vm462, %v3429, 0
        %v3443 = vsel %vm462, %v3430, 0
        %v3446 = vsel %vm462, %v3431, 0
        %v3449 = vsel %vm462, %v3432, 0
        %v3452 = vsel %vm462, %v3433, 0
        %v3455 = vsel %vm462, %v3434, 0
        %v3458 = vsel %vm462, %v3435, 0
        %3460 = vmatpush.msra.mxu0 0.0
        %3461 = vmatpush.msra.mxu0 0.0
        %3462 = vmatpush.msra.mxu0 0.0
        %3463 = vmatpush.msra.mxu0 0.0
        %3464 = vmatpush.msra.mxu0 0.0
        %3465 = vmatpush.msra.mxu0 0.0
        %3466 = vmatpush.msra.mxu0 0.0
        %3467 = vmatpush.msra.mxu0 0.0
        %3468 = vmatpush.msra.mxu0 %v3425
        %3469 = vmatpush.msra.mxu0 %v3423
        %3470 = vmatpush.msra.mxu0 %v3421
        %3471 = vmatpush.msra.mxu0 %v3419
        %3472 = vmatpush.msra.mxu0 %v3417
        %3473 = vmatpush.msra.mxu0 %v3415
        %3474 = vmatpush.msra.mxu0 %v3413
        %3475 = vmatpush.msra.mxu0 %v3411
        %3476 = vmatmul.f32.gmra.mxu0 %v3437
        %v3477 = vpop.f32.mrf.mxu0
        %v3478 = vadd.f32 0.0, %v3477
        %3479 = vmatmul.f32.gmra.mxu0 %v3440
        %v3480 = vpop.f32.mrf.mxu0
        %v3481 = vadd.f32 0.0, %v3480
        %3482 = vmatmul.f32.gmra.mxu0 %v3443
        %v3483 = vpop.f32.mrf.mxu0
        %v3484 = vadd.f32 0.0, %v3483
        %3485 = vmatmul.f32.gmra.mxu0 %v3446
        %v3486 = vpop.f32.mrf.mxu0
        %v3487 = vadd.f32 0.0, %v3486
        %3488 = vmatmul.f32.gmra.mxu0 %v3449
        %v3489 = vpop.f32.mrf.mxu0
        %v3490 = vadd.f32 0.0, %v3489
        %3491 = vmatmul.f32.gmra.mxu0 %v3452
        %v3492 = vpop.f32.mrf.mxu0
        %v3493 = vadd.f32 0.0, %v3492
        %3494 = vmatmul.f32.gmra.mxu0 %v3455
        %v3495 = vpop.f32.mrf.mxu0
        %v3496 = vadd.f32 0.0, %v3495
        %3497 = vmatmul.f32.gmra.mxu0 %v3458
        %v3498 = vpop.f32.mrf.mxu0
        %v3499 = vadd.f32 0.0, %v3498
        %3500 = vdwg.mxu0
        %3501 = vmatpush.msra.mxu0 0.0
        %3502 = vmatpush.msra.mxu0 0.0
        %3503 = vmatpush.msra.mxu0 0.0
        %3504 = vmatpush.msra.mxu0 0.0
        %3505 = vmatpush.msra.mxu0 0.0
        %3506 = vmatpush.msra.mxu0 0.0
        %3507 = vmatpush.msra.mxu0 0.0
        %3508 = vmatpush.msra.mxu0 0.0
        %3509 = vmatpush.msra.mxu0 %v3426
        %3510 = vmatpush.msra.mxu0 %v3424
        %3511 = vmatpush.msra.mxu0 %v3422
        %3512 = vmatpush.msra.mxu0 %v3420
        %3513 = vmatpush.msra.mxu0 %v3418
        %3514 = vmatpush.msra.mxu0 %v3416
        %3515 = vmatpush.msra.mxu0 %v3414
        %3516 = vmatpush.msra.mxu0 %v3412
        %3517 = vmatmul.f32.gmra.mxu0 %v3437
        %v3518 = vpop.f32.mrf.mxu0
        %v3519 = vadd.f32 0.0, %v3518
        %3520 = vmatmul.f32.gmra.mxu0 %v3440
        %v3521 = vpop.f32.mrf.mxu0
        %v3522 = vadd.f32 0.0, %v3521
        %3523 = vmatmul.f32.gmra.mxu0 %v3443
        %v3524 = vpop.f32.mrf.mxu0
        %v3525 = vadd.f32 0.0, %v3524
        %3526 = vmatmul.f32.gmra.mxu0 %v3446
        %v3527 = vpop.f32.mrf.mxu0
        %v3528 = vadd.f32 0.0, %v3527
        %3529 = vmatmul.f32.gmra.mxu0 %v3449
        %v3530 = vpop.f32.mrf.mxu0
        %v3531 = vadd.f32 0.0, %v3530
        %3532 = vmatmul.f32.gmra.mxu0 %v3452
        %v3533 = vpop.f32.mrf.mxu0
        %v3534 = vadd.f32 0.0, %v3533
        %3535 = vmatmul.f32.gmra.mxu0 %v3455
        %v3536 = vpop.f32.mrf.mxu0
        %v3537 = vadd.f32 0.0, %v3536
        %3538 = vmatmul.f32.gmra.mxu0 %v3458
        %v3539 = vpop.f32.mrf.mxu0
        %v3540 = vadd.f32 0.0, %v3539
        %3541 = vdwg.mxu0
        %v3542 = vadd.f32 %v3347, %v3478
        %v3543 = vadd.f32 %v3348, %v3519
        %v3544 = vadd.f32 %v3349, %v3481
        %v3545 = vadd.f32 %v3350, %v3522
        %v3546 = vadd.f32 %v3351, %v3484
        %v3547 = vadd.f32 %v3352, %v3525
        %v3548 = vadd.f32 %v3353, %v3487
        %v3549 = vadd.f32 %v3354, %v3528
        %v3550 = vadd.f32 %v3355, %v3490
        %v3551 = vadd.f32 %v3356, %v3531
        %v3552 = vadd.f32 %v3357, %v3493
        %v3553 = vadd.f32 %v3358, %v3534
        %v3554 = vadd.f32 %v3359, %v3496
        %v3555 = vadd.f32 %v3360, %v3537
        %v3556 = vadd.f32 %v3361, %v3499
        %v3557 = vadd.f32 %v3362, %v3540
        %3558 = vrot.lane.b32.xlu0 %v2078, 111
        %v3559 = vpop.permute.xlu0 %3558
        %3560 = vrot.lane.b32.xlu0 %v2080, 111
        %v3561 = vpop.permute.xlu0 %3560
        %3562 = vrot.lane.b32.xlu0 %v2082, 111
        %v3563 = vpop.permute.xlu0 %3562
        %3564 = vrot.lane.b32.xlu0 %v2084, 111
        %v3565 = vpop.permute.xlu0 %3564
        %3566 = vrot.lane.b32.xlu0 %v2086, 111
        %v3567 = vpop.permute.xlu0 %3566
        %3568 = vrot.lane.b32.xlu0 %v2088, 111
        %v3569 = vpop.permute.xlu0 %3568
        %3570 = vrot.lane.b32.xlu0 %v2090, 111
        %v3571 = vpop.permute.xlu0 %3570
        %3572 = vrot.lane.b32.xlu0 %v2092, 111
        %v3573 = vpop.permute.xlu0 %3572
        %3574 = vrot.lane.b32.xlu0 %v2079, 111
        %v3575 = vpop.permute.xlu0 %3574
        %3576 = vrot.lane.b32.xlu0 %v2081, 111
        %v3577 = vpop.permute.xlu0 %3576
        %3578 = vrot.lane.b32.xlu0 %v2083, 111
        %v3579 = vpop.permute.xlu0 %3578
        %3580 = vrot.lane.b32.xlu0 %v2085, 111
        %v3581 = vpop.permute.xlu0 %3580
        %3582 = vrot.lane.b32.xlu0 %v2087, 111
        %v3583 = vpop.permute.xlu0 %3582
        %3584 = vrot.lane.b32.xlu0 %v2089, 111
        %v3585 = vpop.permute.xlu0 %3584
        %3586 = vrot.lane.b32.xlu0 %v2091, 111
        %v3587 = vpop.permute.xlu0 %3586
        %3588 = vrot.lane.b32.xlu0 %v2093, 111
        %v3589 = vpop.permute.xlu0 %3588
        %v3590 = vsel %vm1818, %v3559, %v3575
        %v3591 = vsel %vm1818, %v3561, %v3577
        %v3592 = vsel %vm1818, %v3563, %v3579
        %v3593 = vsel %vm1818, %v3565, %v3581
        %v3594 = vsel %vm1818, %v3567, %v3583
        %v3595 = vsel %vm1818, %v3569, %v3585
        %v3596 = vsel %vm1818, %v3571, %v3587
        %v3597 = vsel %vm1818, %v3573, %v3589
        %v3598 = vsel %vm1818, %v3575, %v3559
        %v3599 = vsel %vm1818, %v3577, %v3561
        %v3600 = vsel %vm1818, %v3579, %v3563
        %v3601 = vsel %vm1818, %v3581, %v3565
        %v3602 = vsel %vm1818, %v3583, %v3567
        %v3603 = vsel %vm1818, %v3585, %v3569
        %v3604 = vsel %vm1818, %v3587, %v3571
        %v3605 = vsel %vm1818, %v3589, %v3573
        %v3606 = vsel %vm265, %v3590, 0.0
        %v3607 = vsel %vm266, %v3598, 0.0
        %v3608 = vsel %vm265, %v3591, 0.0
        %v3609 = vsel %vm266, %v3599, 0.0
        %v3610 = vsel %vm265, %v3592, 0.0
        %v3611 = vsel %vm266, %v3600, 0.0
        %v3612 = vsel %vm265, %v3593, 0.0
        %v3613 = vsel %vm266, %v3601, 0.0
        %v3614 = vsel %vm265, %v3594, 0.0
        %v3615 = vsel %vm266, %v3602, 0.0
        %v3616 = vsel %vm265, %v3595, 0.0
        %v3617 = vsel %vm266, %v3603, 0.0
        %v3618 = vsel %vm265, %v3596, 0.0
        %v3619 = vsel %vm266, %v3604, 0.0
        %v3620 = vsel %vm265, %v3597, 0.0
        %v3621 = vsel %vm266, %v3605, 0.0
        %s3622 = scalar_lea.vmem [#allocation5], 1088
        %v3623 = vld [vmem:[%s3622] sm:$0xff]
        %v3624 = vld [vmem:[%s3622 + $0x8] sm:$0xff]
        %v3625 = vld [vmem:[%s3622 + $0x10] sm:$0xff]
        %v3626 = vld [vmem:[%s3622 + $0x18] sm:$0xff]
        %v3627 = vld [vmem:[%s3622 + $0x20] sm:$0xff]
        %v3628 = vld [vmem:[%s3622 + $0x28] sm:$0xff]
        %v3629 = vld [vmem:[%s3622 + $0x30] sm:$0xff]
        %v3630 = vld [vmem:[%s3622 + $0x38] sm:$0xff]
        %v3632 = vsel %vm462, %v3623, 0
        %v3635 = vsel %vm462, %v3624, 0
        %v3638 = vsel %vm462, %v3625, 0
        %v3641 = vsel %vm462, %v3626, 0
        %v3644 = vsel %vm462, %v3627, 0
        %v3647 = vsel %vm462, %v3628, 0
        %v3650 = vsel %vm462, %v3629, 0
        %v3653 = vsel %vm462, %v3630, 0
        %3655 = vmatpush.msra.mxu0 0.0
        %3656 = vmatpush.msra.mxu0 0.0
        %3657 = vmatpush.msra.mxu0 0.0
        %3658 = vmatpush.msra.mxu0 0.0
        %3659 = vmatpush.msra.mxu0 0.0
        %3660 = vmatpush.msra.mxu0 0.0
        %3661 = vmatpush.msra.mxu0 0.0
        %3662 = vmatpush.msra.mxu0 0.0
        %3663 = vmatpush.msra.mxu0 %v3620
        %3664 = vmatpush.msra.mxu0 %v3618
        %3665 = vmatpush.msra.mxu0 %v3616
        %3666 = vmatpush.msra.mxu0 %v3614
        %3667 = vmatpush.msra.mxu0 %v3612
        %3668 = vmatpush.msra.mxu0 %v3610
        %3669 = vmatpush.msra.mxu0 %v3608
        %3670 = vmatpush.msra.mxu0 %v3606
        %3671 = vmatmul.f32.gmra.mxu0 %v3632
        %v3672 = vpop.f32.mrf.mxu0
        %v3673 = vadd.f32 0.0, %v3672
        %3674 = vmatmul.f32.gmra.mxu0 %v3635
        %v3675 = vpop.f32.mrf.mxu0
        %v3676 = vadd.f32 0.0, %v3675
        %3677 = vmatmul.f32.gmra.mxu0 %v3638
        %v3678 = vpop.f32.mrf.mxu0
        %v3679 = vadd.f32 0.0, %v3678
        %3680 = vmatmul.f32.gmra.mxu0 %v3641
        %v3681 = vpop.f32.mrf.mxu0
        %v3682 = vadd.f32 0.0, %v3681
        %3683 = vmatmul.f32.gmra.mxu0 %v3644
        %v3684 = vpop.f32.mrf.mxu0
        %v3685 = vadd.f32 0.0, %v3684
        %3686 = vmatmul.f32.gmra.mxu0 %v3647
        %v3687 = vpop.f32.mrf.mxu0
        %v3688 = vadd.f32 0.0, %v3687
        %3689 = vmatmul.f32.gmra.mxu0 %v3650
        %v3690 = vpop.f32.mrf.mxu0
        %v3691 = vadd.f32 0.0, %v3690
        %3692 = vmatmul.f32.gmra.mxu0 %v3653
        %v3693 = vpop.f32.mrf.mxu0
        %v3694 = vadd.f32 0.0, %v3693
        %3695 = vdwg.mxu0
        %3696 = vmatpush.msra.mxu0 0.0
        %3697 = vmatpush.msra.mxu0 0.0
        %3698 = vmatpush.msra.mxu0 0.0
        %3699 = vmatpush.msra.mxu0 0.0
        %3700 = vmatpush.msra.mxu0 0.0
        %3701 = vmatpush.msra.mxu0 0.0
        %3702 = vmatpush.msra.mxu0 0.0
        %3703 = vmatpush.msra.mxu0 0.0
        %3704 = vmatpush.msra.mxu0 %v3621
        %3705 = vmatpush.msra.mxu0 %v3619
        %3706 = vmatpush.msra.mxu0 %v3617
        %3707 = vmatpush.msra.mxu0 %v3615
        %3708 = vmatpush.msra.mxu0 %v3613
        %3709 = vmatpush.msra.mxu0 %v3611
        %3710 = vmatpush.msra.mxu0 %v3609
        %3711 = vmatpush.msra.mxu0 %v3607
        %3712 = vmatmul.f32.gmra.mxu0 %v3632
        %v3713 = vpop.f32.mrf.mxu0
        %v3714 = vadd.f32 0.0, %v3713
        %3715 = vmatmul.f32.gmra.mxu0 %v3635
        %v3716 = vpop.f32.mrf.mxu0
        %v3717 = vadd.f32 0.0, %v3716
        %3718 = vmatmul.f32.gmra.mxu0 %v3638
        %v3719 = vpop.f32.mrf.mxu0
        %v3720 = vadd.f32 0.0, %v3719
        %3721 = vmatmul.f32.gmra.mxu0 %v3641
        %v3722 = vpop.f32.mrf.mxu0
        %v3723 = vadd.f32 0.0, %v3722
        %3724 = vmatmul.f32.gmra.mxu0 %v3644
        %v3725 = vpop.f32.mrf.mxu0
        %v3726 = vadd.f32 0.0, %v3725
        %3727 = vmatmul.f32.gmra.mxu0 %v3647
        %v3728 = vpop.f32.mrf.mxu0
        %v3729 = vadd.f32 0.0, %v3728
        %3730 = vmatmul.f32.gmra.mxu0 %v3650
        %v3731 = vpop.f32.mrf.mxu0
        %v3732 = vadd.f32 0.0, %v3731
        %3733 = vmatmul.f32.gmra.mxu0 %v3653
        %v3734 = vpop.f32.mrf.mxu0
        %v3735 = vadd.f32 0.0, %v3734
        %3736 = vdwg.mxu0
        %v3737 = vadd.f32 %v3542, %v3673
        %v3738 = vadd.f32 %v3543, %v3714
        %v3739 = vadd.f32 %v3544, %v3676
        %v3740 = vadd.f32 %v3545, %v3717
        %v3741 = vadd.f32 %v3546, %v3679
        %v3742 = vadd.f32 %v3547, %v3720
        %v3743 = vadd.f32 %v3548, %v3682
        %v3744 = vadd.f32 %v3549, %v3723
        %v3745 = vadd.f32 %v3550, %v3685
        %v3746 = vadd.f32 %v3551, %v3726
        %v3747 = vadd.f32 %v3552, %v3688
        %v3748 = vadd.f32 %v3553, %v3729
        %v3749 = vadd.f32 %v3554, %v3691
        %v3750 = vadd.f32 %v3555, %v3732
        %v3751 = vadd.f32 %v3556, %v3694
        %v3752 = vadd.f32 %v3557, %v3735
        %s3753 = scalar_lea.vmem %s2, 64
        %v3754 = vld [vmem:[%s3753] sm:$0xff]
        %v3755 = vld [vmem:[%s3753 + $0x8] sm:$0xff]
        %v3756 = vld [vmem:[%s3753 + $0x10] sm:$0xff]
        %v3757 = vld [vmem:[%s3753 + $0x18] sm:$0xff]
        %v3758 = vld [vmem:[%s3753 + $0x20] sm:$0xff]
        %v3759 = vld [vmem:[%s3753 + $0x28] sm:$0xff]
        %v3760 = vld [vmem:[%s3753 + $0x30] sm:$0xff]
        %v3761 = vld [vmem:[%s3753 + $0x38] sm:$0xff]
        %3763 = vset.pattern.permute.xlu0 0
        %3764 = vperm.xlu0 %3763, %v3754
        %v3765 = vpop.permute.xlu0 %3764
        %3768 = vset.pattern.permute.xlu0 0
        %3769 = vperm.xlu0 %3768, %v3755
        %v3770 = vpop.permute.xlu0 %3769
        %3773 = vset.pattern.permute.xlu0 0
        %3774 = vperm.xlu0 %3773, %v3756
        %v3775 = vpop.permute.xlu0 %3774
        %3778 = vset.pattern.permute.xlu0 0
        %3779 = vperm.xlu0 %3778, %v3757
        %v3780 = vpop.permute.xlu0 %3779
        %3783 = vset.pattern.permute.xlu0 0
        %3784 = vperm.xlu0 %3783, %v3758
        %v3785 = vpop.permute.xlu0 %3784
        %3788 = vset.pattern.permute.xlu0 0
        %3789 = vperm.xlu0 %3788, %v3759
        %v3790 = vpop.permute.xlu0 %3789
        %3793 = vset.pattern.permute.xlu0 0
        %3794 = vperm.xlu0 %3793, %v3760
        %v3795 = vpop.permute.xlu0 %3794
        %3798 = vset.pattern.permute.xlu0 0
        %3799 = vperm.xlu0 %3798, %v3761
        %v3800 = vpop.permute.xlu0 %3799
        %v3802 = vadd.f32 %v3737, %v3765
        %v3803 = vadd.f32 %v3738, %v3765
        %v3804 = vadd.f32 %v3739, %v3770
        %v3805 = vadd.f32 %v3740, %v3770
        %v3806 = vadd.f32 %v3741, %v3775
        %v3807 = vadd.f32 %v3742, %v3775
        %v3808 = vadd.f32 %v3743, %v3780
        %v3809 = vadd.f32 %v3744, %v3780
        %v3810 = vadd.f32 %v3745, %v3785
        %v3811 = vadd.f32 %v3746, %v3785
        %v3812 = vadd.f32 %v3747, %v3790
        %v3813 = vadd.f32 %v3748, %v3790
        %v3814 = vadd.f32 %v3749, %v3795
        %v3815 = vadd.f32 %v3750, %v3795
        %v3816 = vadd.f32 %v3751, %v3800
        %v3817 = vadd.f32 %v3752, %v3800
        %3818 = vst [vmem:[%s207] sm:$0xff] %v3802
        %3819 = vst [vmem:[%s207 + $0x8] sm:$0xff] %v3803
        %3820 = vst [vmem:[%s207 + $0x10] sm:$0xff] %v3804
        %3821 = vst [vmem:[%s207 + $0x18] sm:$0xff] %v3805
        %3822 = vst [vmem:[%s207 + $0x20] sm:$0xff] %v3806
        %3823 = vst [vmem:[%s207 + $0x28] sm:$0xff] %v3807
        %3824 = vst [vmem:[%s207 + $0x30] sm:$0xff] %v3808
        %3825 = vst [vmem:[%s207 + $0x38] sm:$0xff] %v3809
        %3826 = vst [vmem:[%s207 + $0x40] sm:$0xff] %v3810
        %3827 = vst [vmem:[%s207 + $0x48] sm:$0xff] %v3811
        %3828 = vst [vmem:[%s207 + $0x50] sm:$0xff] %v3812
        %3829 = vst [vmem:[%s207 + $0x58] sm:$0xff] %v3813
        %3830 = vst [vmem:[%s207 + $0x60] sm:$0xff] %v3814
        %3831 = vst [vmem:[%s207 + $0x68] sm:$0xff] %v3815
        %3832 = vst [vmem:[%s207 + $0x70] sm:$0xff] %v3816
        %3833 = vst [vmem:[%s207 + $0x78] sm:$0xff] %v3817
        %s3834 = sand.u32 %s97, 1
        %s3835 = scalar_lea.sflag [#allocation4], %s3834
        %s3836 = sand.u32 %s97, 1
        %s3837 = smul.addr %s3836, 128
        %s3838 = scalar_lea.vmem [#allocation7], %s3837
        // Predicated region
        $region41: #{tpu_custom_call.1} parent=31 // pred_check
          %p3839 = pneg %p107
        $region42: #{tpu_custom_call.1} parent=31 // pred_check_branch
          %3841 = sbr.rel (%p3839) target = $region44
        $region43: #{tpu_custom_call.1} parent=31 // pred_region
          %3843 = vsyncadd %s3835, 0
          %s3844 = smul.addr %s21, 16
          %s3845 = smul.addr %s3844, 8
          %s3846 = scalar_lea.hbm %s3, %s3845
          %s3847 = sshll.u32 %s3838, 4
          %s3848 = int_to_ptr.vmem [resolvable:$true] %s3847
          %s3849 = sshll.u32 %s3846, 4
          %s3850 = int_to_ptr.hbm [resolvable:$true] %s3849
          %3855 = dma.vmem_to_hbm [thread:$0]  %s3848, 2048, %s3850, %s3835, 256, 256, 16
        $region44: #{tpu_custom_call.1} parent=31 // pred_fallthru
          _
      $region32: #{tpu_custom_call.1} parent=5 // pred_fallthru
        _
      %p3856 = scmp.le.s32.totalorder 2, %s16
      // Predicated region
      $region45: #{tpu_custom_call.1} parent=5 // pred_check
        %p3857 = pneg %p3856
      $region46: #{tpu_custom_call.1} parent=5 // pred_check_branch
        %3859 = sbr.rel (%p3857) target = $region48
      $region47: #{tpu_custom_call.1} parent=5 // pred_region
        %s3860 = ssub.s32 %s16, 2
        // Predicated region
        $region49: #{tpu_custom_call.1} parent=47 // pred_check
          %p3861 = pneg %p113
        $region50: #{tpu_custom_call.1} parent=47 // pred_check_branch
          %3863 = sbr.rel (%p3861) target = $region52
        $region51: #{tpu_custom_call.1} parent=47 // pred_region
          %s3864 = sand.u32 %s98, 1
          %s3865 = scalar_lea.sflag [#allocation4], %s3864
          %s3866 = sand.u32 %s98, 1
          %s3867 = smul.addr %s3866, 128
          %s3868 = scalar_lea.vmem [#allocation7], %s3867
          %3870 = dma.done %s3865, 2048
        $region52: #{tpu_custom_call.1} parent=47 // pred_fallthru
          _
      $region48: #{tpu_custom_call.1} parent=5 // pred_fallthru
        _
    $region6: #{tpu_custom_call.1} parent=1 // loop_footer
      %s20 = sadd.s32 1, %s16
    $region7: #{tpu_custom_call.1} parent=1 // loop_footer_branch
      %15 = sbr.rel target = $region3
    $region8: #{tpu_custom_call.1} parent=1 // loop_exit
      _
    %3871 = vsyncpa [#allocation3], 1
    %s3872 = scalar_lea.sflag [#allocation3], 1
    %3873 = vsyncpa %s3872, 1
    %3874 = vsyncpa [#allocation6], 1
    %3875 = vsyncpa [#allocation4], 1
    %s3876 = scalar_lea.sflag [#allocation4], 1
    %3877 = vsyncpa %s3876, 1

</llo_original>
